<compile_context>
chip_gen: v7x
topology: tpu7x:2x2x1
jax: 0.10.0
libtpu: 0.0.40
codegen_flags: <defaults>
</compile_context>

<pallas_src>
import jax
import jax.numpy as jnp
from jax.experimental import pallas as pl
from jax.experimental.pallas import tpu as pltpu

_INV_SQRT2 = 0.7071067811865476


# ---- single-qubit gate helpers (state = re/im parts of |0>, |1> amplitudes) ----
def _ry_cs(ar, ai, br, bi, c, s):      # c = cos(th/2), s = sin(th/2)
    return (c * ar - s * br, c * ai - s * bi, s * ar + c * br, s * ai + c * bi)


def _rz_cs(ar, ai, br, bi, c, s):
    return (c * ar + s * ai, c * ai - s * ar, c * br - s * bi, c * bi + s * br)


def _rx(ar, ai, br, bi, th):
    c = jnp.cos(0.5 * th)
    s = jnp.sin(0.5 * th)
    return (c * ar + s * bi, c * ai - s * br, c * br + s * ai, c * bi - s * ar)


def _ry(ar, ai, br, bi, th):
    return _ry_cs(ar, ai, br, bi, jnp.cos(0.5 * th), jnp.sin(0.5 * th))


def _rz(ar, ai, br, bi, th):
    return _rz_cs(ar, ai, br, bi, jnp.cos(0.5 * th), jnp.sin(0.5 * th))


def _hadamard(ar, ai, br, bi):
    return ((ar + br) * _INV_SQRT2, (ai + bi) * _INV_SQRT2,
            (ar - br) * _INV_SQRT2, (ai - bi) * _INV_SQRT2)


# ------------------------- reference VQC (pure JAX) ---------------------------
def _vqc_expval_z(y, w, n_qlayers):
    """y: (B, nq) features; w: (n_qlayers, 3, nq). Returns <Z> per qubit."""
    ar = jnp.ones_like(y)
    ai = jnp.zeros_like(y)
    br = jnp.zeros_like(y)
    bi = jnp.zeros_like(y)
    st = (ar, ai, br, bi)
    st = _rx(*st, y)                      # AngleEmbedding (default rotation = X)
    st = _hadamard(*st)
    a = jnp.arctan(y[0:1, :])             # sample-0 params (pennylane quirk)
    st = _ry(*st, a)
    st = _rz(*st, a)                      # reference reuses ry_params for RZ too
    for l in range(n_qlayers):
        for _ in range(2):                # ansatz applies RX/RY/RZ twice
            st = _rx(*st, w[l, 0:1, :])
            st = _ry(*st, w[l, 1:2, :])
            st = _rz(*st, w[l, 2:3, :])
    ar, ai, br, bi = st
    return ar * ar + ai * ai - (br * br + bi * bi)


# ------------- wrapper-side precomposition of the data-independent ansatz -----
def _precompose_gate_readout(vqc_w, w_out_t, b_out):
    """Fold the (data-independent) ansatz unitary U and clayer_out into a single
    fused readout matrix.

    For each gate g and qubit q the ansatz is a fixed 2x2 unitary U.  With the
    pre-ansatz state s = (a, b), <Z> = <s| U^dag Z U |s>
      = m00*(|a|^2-|b|^2) + 2*(Re(m01)*Re(conj(a)b) - Im(m01)*Im(conj(a)b)).
    We compute (m00, m01) by evolving the two basis states with plain JAX, fold
    the diag factors into clayer_out, and stack the three blocks so the kernel
    needs ONE (B, 3*nq) x (3*nq, 4H) matmul per step.
    """
    G, L, _, nq = vqc_w.shape

    def evolve(ar, ai, br, bi):
        st = (ar, ai, br, bi)
        for l in range(L):
            for _ in range(2):
                st = _rx(*st, vqc_w[:, l, 0, :])
                st = _ry(*st, vqc_w[:, l, 1, :])
                st = _rz(*st, vqc_w[:, l, 2, :])
        return st

    ones = jnp.ones((G, nq), jnp.float32)
    zeros = jnp.zeros((G, nq), jnp.float32)
    u00r, u00i, u10r, u10i = evolve(ones, zeros, zeros, zeros)   # U|0>
    u01r, u01i, u11r, u11i = evolve(zeros, zeros, ones, zeros)   # U|1>

    m00 = u00r * u00r + u00i * u00i - (u10r * u10r + u10i * u10i)        # (G, nq)
    # m01 = conj(U00)*U01 - conj(U10)*U11
    m01r = u00r * u01r + u00i * u01i - (u10r * u11r + u10i * u11i)
    m01i = u00r * u01i - u00i * u01r - (u10r * u11i - u10i * u11r)

    w_dz = jnp.concatenate([m00[g][:, None] * w_out_t for g in range(G)], axis=1)
    w_cr = jnp.concatenate([(2.0 * m01r[g])[:, None] * w_out_t for g in range(G)],
                           axis=1)
    w_ci = jnp.concatenate([(-2.0 * m01i[g])[:, None] * w_out_t for g in range(G)],
                           axis=1)
    w_ro = jnp.concatenate([w_dz, w_cr, w_ci], axis=0)                   # (3nq, G*H)
    b4 = jnp.concatenate([b_out] * G, axis=1)                            # (1, G*H)
    return w_ro, b4


# ----------------------------------- kernel -----------------------------------
def qlstm_kernel(xp_ref, w_in_h_ref, w_ro_ref, b4_ref,
                 seq_ref, h_out_ref, c_out_ref, h_sc, c_sc):
    blk = pl.program_id(0)
    Tc, B, _ = xp_ref.shape                     # chunk length, padded batch, nq
    H = h_out_ref.shape[1]

    @pl.when(blk == 0)
    def _():
        h_sc[...] = jnp.zeros_like(h_sc)
        c_sc[...] = jnp.zeros_like(c_sc)

    h_t = h_sc[...]
    c_t = c_sc[...]
    w_in_h = w_in_h_ref[...]                    # (H, nq)
    w_ro = w_ro_ref[...]                        # (3*nq, 4H)
    b4 = b4_ref[...]                            # (1, 4H)

    # Tc is static & small (<=16) -> unrolled recurrence inside one grid step.
    for t in range(Tc):
        # x-projection was hoisted to the wrapper; only the h-projection stays
        # on the serial path.
        y_t = (jnp.dot(h_t, w_in_h, preferred_element_type=jnp.float32)
               + xp_ref[t])                                        # (B, nq)

        # --- single-qubit state before the (precomposed) ansatz ---------------
        cy = jnp.cos(0.5 * y_t)
        sy = jnp.sin(0.5 * y_t)
        zero = jnp.zeros_like(y_t)
        # RX(y)|0> = (cy, -i*sy), then Hadamard
        ar, ai, br, bi = _hadamard(cy, zero, zero, -sy)
        # RY/RZ angle = arctan(y[sample 0]) (pennylane TorchLayer quirk).
        # Half-angle cos/sin without arctan, cancellation-free:
        #   cos(arctan u)   = rinv = rsqrt(1+u^2)
        #   cos(arctan(u)/2)= sqrt(0.5*(1+rinv))
        #   sin(arctan(u)/2)= sin(arctan u)/(2*cos(arctan(u)/2)) = 0.5*u*rinv/ca
        u = y_t[0:1, :]
        rinv = jax.lax.rsqrt(1.0 + u * u)
        ca = jnp.sqrt(0.5 * (1.0 + rinv))
        sa = 0.5 * u * rinv * pl.reciprocal(ca, approx=True)
        ar, ai, br, bi = _ry_cs(ar, ai, br, bi, ca, sa)
        ar, ai, br, bi = _rz_cs(ar, ai, br, bi, ca, sa)

        dz = ar * ar + ai * ai - br * br - bi * bi    # |a|^2 - |b|^2
        cr = ar * br + ai * bi                        # Re(conj(a) b)
        ci = ar * bi - ai * br                        # Im(conj(a) b)

        # all 4 gate VQC readouts + clayer_out fused into ONE lane-dense matmul
        lhs = jnp.concatenate([dz, cr, ci], axis=-1)                  # (B, 3*nq)
        z = (jnp.dot(lhs, w_ro, preferred_element_type=jnp.float32)
             + b4)                                                    # (B, 4H)

        sg = jax.nn.sigmoid(z)                        # one EUP pass, full slab
        f_t = sg[:, 0 * H:1 * H]
        i_t = sg[:, 1 * H:2 * H]
        g_t = jnp.tanh(z[:, 2 * H:3 * H])
        o_t = sg[:, 3 * H:4 * H]

        c_t = f_t * c_t + i_t * g_t
        h_t = o_t * jnp.tanh(c_t)
        seq_ref[t] = h_t

    h_sc[...] = h_t
    c_sc[...] = c_t

    @pl.when(blk == pl.num_programs(0) - 1)
    def _():
        h_out_ref[...] = h_t
        c_out_ref[...] = c_t


# ---------------------------------- wrapper ------------------------------------
def qlstm_forward(x, params, n_qlayers=1, t_chunk=None):
    del n_qlayers  # layer count is carried by vqc_w's shape
    w_in_t, b_in, w_out_t, b_out, vqc_w = params
    B, T, F = x.shape
    nq, H = w_out_t.shape
    G = vqc_w.shape[0]

    # split clayer_in (torch concat order is (h, x)) -> no in-kernel concatenate
    w_in_h = w_in_t[:H, :]
    w_in_x = w_in_t[H:, :]
    w_ro, b4 = _precompose_gate_readout(vqc_w, w_out_t, b_out)

    # Opt 1: hoist the input projection out of the recurrence (one XLA matmul).
    x32 = x.astype(jnp.float32)
    x_proj = jnp.einsum("btf,fq->tbq", x32, w_in_x) + b_in          # (T, B, nq)

    # Opt 7: pad batch to a full sublane (8 rows); padded rows are inert.
    Bp = ((B + 7) // 8) * 8
    if Bp != B:
        x_proj = jnp.pad(x_proj, ((0, 0), (0, Bp - B), (0, 0)))

    # Opt 5/9/10: T is a grid axis, chunked so per-step VMEM stays tiny and the
    # seq writeback DMA pipelines behind the next chunk's compute.  At small T
    # this collapses to a single fully-unrolled grid step.
    if t_chunk is None:
        t_chunk = next(d for d in range(min(T, 16), 0, -1) if T % d == 0)
    assert T % t_chunk == 0
    n_blocks = T // t_chunk

    out_shapes = (
        jax.ShapeDtypeStruct((T, Bp, H), jnp.float32),
        jax.ShapeDtypeStruct((Bp, H), jnp.float32),
        jax.ShapeDtypeStruct((Bp, H), jnp.float32),
    )

    grid_spec = pltpu.PrefetchScalarGridSpec(
        num_scalar_prefetch=0,
        grid=(n_blocks,),
        in_specs=[
            pl.BlockSpec((t_chunk, Bp, nq), lambda i: (i, 0, 0)),   # streamed
            pl.BlockSpec((H, nq), lambda i: (0, 0)),                # resident
            pl.BlockSpec((3 * nq, G * H), lambda i: (0, 0)),        # resident
            pl.BlockSpec((1, G * H), lambda i: (0, 0)),             # resident
        ],
        out_specs=[
            pl.BlockSpec((t_chunk, Bp, H), lambda i: (i, 0, 0)),    # streamed
            pl.BlockSpec((Bp, H), lambda i: (0, 0)),
            pl.BlockSpec((Bp, H), lambda i: (0, 0)),
        ],
        scratch_shapes=[
            pltpu.VMEM((Bp, H), jnp.float32),    # h carry across grid steps
            pltpu.VMEM((Bp, H), jnp.float32),    # c carry across grid steps
        ],
    )

    hidden_tbh, h_t, c_t = pl.pallas_call(
        qlstm_kernel,
        out_shape=out_shapes,
        grid_spec=grid_spec,
        compiler_params=pltpu.CompilerParams(
            dimension_semantics=("arbitrary",)),   # serial recurrence axis
    )(x_proj, w_in_h, w_ro, b4)

    hidden_seq = jnp.transpose(hidden_tbh[:, :B, :], (1, 0, 2))     # (B, T, H)
    return hidden_seq, (h_t[:B], c_t[:B])


# --------------------------- deterministic params ------------------------------
def init_params(key, input_size, hidden_size, n_qubits=4, n_qlayers=1,
                n_vrotations=3):
    concat = input_size + hidden_size
    k1, k2, k3, k4, k5 = jax.random.split(key, 5)
    lim_in = 1.0 / (concat ** 0.5)
    w_in = jax.random.uniform(k1, (n_qubits, concat), jnp.float32,
                              minval=-lim_in, maxval=lim_in)
    b_in = jax.random.uniform(k2, (1, n_qubits), jnp.float32,
                              minval=-lim_in, maxval=lim_in)
    lim_out = 1.0 / (n_qubits ** 0.5)
    w_out = jax.random.uniform(k3, (hidden_size, n_qubits), jnp.float32,
                               minval=-lim_out, maxval=lim_out)
    b_out = jax.random.uniform(k4, (1, hidden_size), jnp.float32,
                               minval=-lim_out, maxval=lim_out)
    # one (n_qlayers, n_vrotations, n_qubits) weight tensor per gate (f, i, g, o)
    vqc_w = jax.random.uniform(k5, (4, n_qlayers, n_vrotations, n_qubits),
                               jnp.float32, minval=0.0, maxval=2.0 * jnp.pi)
    # pre-transpose the Linear weights (PyTorch stores (out, in))
    return (w_in.T, b_in, w_out.T, b_out, vqc_w)


# ------------------------------ pure-JAX reference ------------------------------
def qlstm_reference(x, params, n_qlayers=1):
    w_in_t, b_in, w_out_t, b_out, vqc_w = params
    B, T, F = x.shape
    H = w_out_t.shape[1]
    h = jnp.zeros((B, H), jnp.float32)
    c = jnp.zeros((B, H), jnp.float32)
    outs = []
    for t in range(T):
        x_t = x[:, t, :]
        v = jnp.concatenate([h, x_t], axis=1)
        y = v @ w_in_t + b_in

        def gate(g):
            return _vqc_expval_z(y, vqc_w[g], n_qlayers) @ w_out_t + b_out

        f = jax.nn.sigmoid(gate(0))
        i = jax.nn.sigmoid(gate(1))
        g_ = jnp.tanh(gate(2))
        o = jax.nn.sigmoid(gate(3))
        c = f * c + i * g_
        h = o * jnp.tanh(c)
        outs.append(h)
    return jnp.stack(outs, axis=1), (h, c)


if __name__ == "__main__":
    B, T, F, H = 2, 8, 8, 32   # batch, seq, input_size, hidden_size
    key = jax.random.PRNGKey(0)
    kx, kp = jax.random.split(key)
    x = jax.random.normal(kx, (B, T, F), dtype=jnp.float32)
    params = init_params(kp, F, H)

    hidden_seq, (h_t, c_t) = qlstm_forward(x, params)
    jax.block_until_ready((hidden_seq, h_t, c_t))

    ref_seq, (ref_h, ref_c) = qlstm_reference(x, params)
    assert hidden_seq.shape == (B, T, H) and h_t.shape == (B, H) and c_t.shape == (B, H)
    assert float(jnp.max(jnp.abs(hidden_seq - ref_seq))) < 2e-3
    assert float(jnp.max(jnp.abs(h_t - ref_h))) < 2e-3
    assert float(jnp.max(jnp.abs(c_t - ref_c))) < 2e-3

    print("KERNEL_OK")
</pallas_src>

<mosaic_0001>
module attributes {stable_mosaic.version = 11 : i64} {
  func.func @qlstm_kernel(%arg0: i32, %arg1: memref<8x8x4xf32, #tpu.memory_space<vmem>>, %arg2: memref<32x4xf32, #tpu.memory_space<vmem>>, %arg3: memref<12x128xf32, #tpu.memory_space<vmem>>, %arg4: memref<1x128xf32, #tpu.memory_space<vmem>>, %arg5: memref<8x8x32xf32, #tpu.memory_space<vmem>>, %arg6: memref<8x32xf32, #tpu.memory_space<vmem>>, %arg7: memref<8x32xf32, #tpu.memory_space<vmem>>, %arg8: memref<8x32xf32, #tpu.memory_space<vmem>>, %arg9: memref<8x32xf32, #tpu.memory_space<vmem>>) attributes {dimension_semantics = [#tpu.dimension_semantics<arbitrary>], iteration_bounds = array<i64: 1>, scalar_prefetch = 0 : i64, scratch_operands = 2 : i64, tpu.core_type = #tpu.core_type<tc>, window_params = [{transform_indices = @transform_0, window_bounds = array<i64: 8, 8, 4>}, {pipeline_mode = #tpu.pipeline_mode<synchronous>, transform_indices = @transform_1, window_bounds = array<i64: 32, 4>}, {pipeline_mode = #tpu.pipeline_mode<synchronous>, transform_indices = @transform_2, window_bounds = array<i64: 12, 128>}, {pipeline_mode = #tpu.pipeline_mode<synchronous>, transform_indices = @transform_3, window_bounds = array<i64: 1, 128>}, {transform_indices = @transform_4, window_bounds = array<i64: 8, 8, 32>}, {pipeline_mode = #tpu.pipeline_mode<synchronous>, transform_indices = @transform_5, window_bounds = array<i64: 8, 32>}, {pipeline_mode = #tpu.pipeline_mode<synchronous>, transform_indices = @transform_6, window_bounds = array<i64: 8, 32>}]} {
    %c0_i32 = arith.constant 0 : i32
    %0 = arith.cmpi eq, %arg0, %c0_i32 : i32
    %1 = arith.extui %0 : i1 to i32
    %c0_i32_0 = arith.constant 0 : i32
    %2 = arith.cmpi ne, %1, %c0_i32_0 : i32
    scf.if %2 {
      %cst_176 = arith.constant 0.000000e+00 : f32
      %933 = vector.broadcast %cst_176 : f32 to vector<8x32xf32>
      %c0_177 = arith.constant 0 : index
      %c0_178 = arith.constant 0 : index
      %934 = vector.load %arg8[%c0_177, %c0_178] : memref<8x32xf32, #tpu.memory_space<vmem>>, vector<8x32xf32>
      tpu.vector_store %arg8[%c0_177, %c0_178], %933 {strides = array<i32>} : memref<8x32xf32, #tpu.memory_space<vmem>>, vector<8x32xf32>,
      %cst_179 = arith.constant 0.000000e+00 : f32
      %935 = vector.broadcast %cst_179 : f32 to vector<8x32xf32>
      %c0_180 = arith.constant 0 : index
      %c0_181 = arith.constant 0 : index
      %936 = vector.load %arg9[%c0_180, %c0_181] : memref<8x32xf32, #tpu.memory_space<vmem>>, vector<8x32xf32>
      tpu.vector_store %arg9[%c0_180, %c0_181], %935 {strides = array<i32>} : memref<8x32xf32, #tpu.memory_space<vmem>>, vector<8x32xf32>,
    } else {
    }
    %c0 = arith.constant 0 : index
    %c0_1 = arith.constant 0 : index
    %3 = vector.load %arg8[%c0, %c0_1] : memref<8x32xf32, #tpu.memory_space<vmem>>, vector<8x32xf32>
    %c0_2 = arith.constant 0 : index
    %c0_3 = arith.constant 0 : index
    %4 = vector.load %arg9[%c0_2, %c0_3] : memref<8x32xf32, #tpu.memory_space<vmem>>, vector<8x32xf32>
    %c0_4 = arith.constant 0 : index
    %c0_5 = arith.constant 0 : index
    %5 = vector.load %arg2[%c0_4, %c0_5] : memref<32x4xf32, #tpu.memory_space<vmem>>, vector<32x4xf32>
    %c0_6 = arith.constant 0 : index
    %c0_7 = arith.constant 0 : index
    %6 = vector.load %arg3[%c0_6, %c0_7] : memref<12x128xf32, #tpu.memory_space<vmem>>, vector<12x128xf32>
    %c0_8 = arith.constant 0 : index
    %c0_9 = arith.constant 0 : index
    %7 = vector.load %arg4[%c0_8, %c0_9] : memref<1x128xf32, #tpu.memory_space<vmem>>, vector<1x128xf32>
    %cst = arith.constant dense<0.000000e+00> : vector<8x4xf32>
    %8 = tpu.matmul %3, %5, %cst {dimension_numbers = #tpu.dot_dimension_numbers<[1], [0], [0], [1], [0, 0, 1, 1], [], []>} : vector<8x32xf32>, vector<32x4xf32>, vector<8x4xf32> -> vector<8x4xf32>
    %c0_10 = arith.constant 0 : index
    %c0_11 = arith.constant 0 : index
    %c0_12 = arith.constant 0 : index
    %9 = vector.load %arg1[%c0_10, %c0_11, %c0_12] : memref<8x8x4xf32, #tpu.memory_space<vmem>>, vector<1x8x4xf32>
    %10 = vector.shape_cast %9 : vector<1x8x4xf32> to vector<8x4xf32>
    %11 = arith.addf %8, %10 : vector<8x4xf32>
    %cst_13 = arith.constant 5.000000e-01 : f32
    %12 = vector.broadcast %cst_13 : f32 to vector<8x4xf32>
    %13 = arith.mulf %12, %11 : vector<8x4xf32>
    %14 = math.cos %13 : vector<8x4xf32>
    %cst_14 = arith.constant 5.000000e-01 : f32
    %15 = vector.broadcast %cst_14 : f32 to vector<8x4xf32>
    %16 = arith.mulf %15, %11 : vector<8x4xf32>
    %17 = math.sin %16 : vector<8x4xf32>
    %cst_15 = arith.constant 0.000000e+00 : f32
    %18 = vector.broadcast %cst_15 : f32 to vector<8x4xf32>
    %cst_16 = arith.constant 0.000000e+00 : f32
    %19 = vector.broadcast %cst_16 : f32 to vector<8x4xf32>
    %20 = arith.subf %19, %17 : vector<8x4xf32>
    %21 = arith.addf %14, %18 : vector<8x4xf32>
    %cst_17 = arith.constant 0.707106769 : f32
    %22 = vector.broadcast %cst_17 : f32 to vector<8x4xf32>
    %23 = arith.mulf %21, %22 : vector<8x4xf32>
    %24 = arith.addf %18, %20 : vector<8x4xf32>
    %cst_18 = arith.constant 0.707106769 : f32
    %25 = vector.broadcast %cst_18 : f32 to vector<8x4xf32>
    %26 = arith.mulf %24, %25 : vector<8x4xf32>
    %27 = arith.subf %14, %18 : vector<8x4xf32>
    %cst_19 = arith.constant 0.707106769 : f32
    %28 = vector.broadcast %cst_19 : f32 to vector<8x4xf32>
    %29 = arith.mulf %27, %28 : vector<8x4xf32>
    %30 = arith.subf %18, %20 : vector<8x4xf32>
    %cst_20 = arith.constant 0.707106769 : f32
    %31 = vector.broadcast %cst_20 : f32 to vector<8x4xf32>
    %32 = arith.mulf %30, %31 : vector<8x4xf32>
    %33 = vector.extract_strided_slice %11 {offsets = [0, 0], sizes = [1, 4], strides = [1, 1]} : vector<8x4xf32> to vector<1x4xf32>
    %34 = arith.mulf %33, %33 : vector<1x4xf32>
    %cst_21 = arith.constant 1.000000e+00 : f32
    %35 = vector.broadcast %cst_21 : f32 to vector<1x4xf32>
    %36 = arith.addf %35, %34 : vector<1x4xf32>
    %37 = math.rsqrt %36 : vector<1x4xf32>
    %cst_22 = arith.constant 1.000000e+00 : f32
    %38 = vector.broadcast %cst_22 : f32 to vector<1x4xf32>
    %39 = arith.addf %38, %37 : vector<1x4xf32>
    %cst_23 = arith.constant 5.000000e-01 : f32
    %40 = vector.broadcast %cst_23 : f32 to vector<1x4xf32>
    %41 = arith.mulf %40, %39 : vector<1x4xf32>
    %42 = math.sqrt %41 : vector<1x4xf32>
    %cst_24 = arith.constant 5.000000e-01 : f32
    %43 = vector.broadcast %cst_24 : f32 to vector<1x4xf32>
    %44 = arith.mulf %43, %33 : vector<1x4xf32>
    %45 = arith.mulf %44, %37 : vector<1x4xf32>
    %46 = tpu.reciprocal %42 {approx = true} : vector<1x4xf32> -> vector<1x4xf32>
    %47 = arith.mulf %45, %46 : vector<1x4xf32>
    %48 = vector.broadcast %42 : vector<1x4xf32> to vector<8x4xf32>
    %49 = arith.mulf %48, %23 : vector<8x4xf32>
    %50 = vector.broadcast %47 : vector<1x4xf32> to vector<8x4xf32>
    %51 = arith.mulf %50, %29 : vector<8x4xf32>
    %52 = arith.subf %49, %51 : vector<8x4xf32>
    %53 = vector.broadcast %42 : vector<1x4xf32> to vector<8x4xf32>
    %54 = arith.mulf %53, %26 : vector<8x4xf32>
    %55 = vector.broadcast %47 : vector<1x4xf32> to vector<8x4xf32>
    %56 = arith.mulf %55, %32 : vector<8x4xf32>
    %57 = arith.subf %54, %56 : vector<8x4xf32>
    %58 = vector.broadcast %47 : vector<1x4xf32> to vector<8x4xf32>
    %59 = arith.mulf %58, %23 : vector<8x4xf32>
    %60 = vector.broadcast %42 : vector<1x4xf32> to vector<8x4xf32>
    %61 = arith.mulf %60, %29 : vector<8x4xf32>
    %62 = arith.addf %59, %61 : vector<8x4xf32>
    %63 = vector.broadcast %47 : vector<1x4xf32> to vector<8x4xf32>
    %64 = arith.mulf %63, %26 : vector<8x4xf32>
    %65 = vector.broadcast %42 : vector<1x4xf32> to vector<8x4xf32>
    %66 = arith.mulf %65, %32 : vector<8x4xf32>
    %67 = arith.addf %64, %66 : vector<8x4xf32>
    %68 = vector.broadcast %42 : vector<1x4xf32> to vector<8x4xf32>
    %69 = arith.mulf %68, %52 : vector<8x4xf32>
    %70 = vector.broadcast %47 : vector<1x4xf32> to vector<8x4xf32>
    %71 = arith.mulf %70, %57 : vector<8x4xf32>
    %72 = arith.addf %69, %71 : vector<8x4xf32>
    %73 = vector.broadcast %42 : vector<1x4xf32> to vector<8x4xf32>
    %74 = arith.mulf %73, %57 : vector<8x4xf32>
    %75 = vector.broadcast %47 : vector<1x4xf32> to vector<8x4xf32>
    %76 = arith.mulf %75, %52 : vector<8x4xf32>
    %77 = arith.subf %74, %76 : vector<8x4xf32>
    %78 = vector.broadcast %42 : vector<1x4xf32> to vector<8x4xf32>
    %79 = arith.mulf %78, %62 : vector<8x4xf32>
    %80 = vector.broadcast %47 : vector<1x4xf32> to vector<8x4xf32>
    %81 = arith.mulf %80, %67 : vector<8x4xf32>
    %82 = arith.subf %79, %81 : vector<8x4xf32>
    %83 = vector.broadcast %42 : vector<1x4xf32> to vector<8x4xf32>
    %84 = arith.mulf %83, %67 : vector<8x4xf32>
    %85 = vector.broadcast %47 : vector<1x4xf32> to vector<8x4xf32>
    %86 = arith.mulf %85, %62 : vector<8x4xf32>
    %87 = arith.addf %84, %86 : vector<8x4xf32>
    %88 = arith.mulf %72, %72 : vector<8x4xf32>
    %89 = arith.mulf %77, %77 : vector<8x4xf32>
    %90 = arith.addf %88, %89 : vector<8x4xf32>
    %91 = arith.mulf %82, %82 : vector<8x4xf32>
    %92 = arith.subf %90, %91 : vector<8x4xf32>
    %93 = arith.mulf %87, %87 : vector<8x4xf32>
    %94 = arith.subf %92, %93 : vector<8x4xf32>
    %95 = arith.mulf %72, %82 : vector<8x4xf32>
    %96 = arith.mulf %77, %87 : vector<8x4xf32>
    %97 = arith.addf %95, %96 : vector<8x4xf32>
    %98 = arith.mulf %72, %87 : vector<8x4xf32>
    %99 = arith.mulf %77, %82 : vector<8x4xf32>
    %100 = arith.subf %98, %99 : vector<8x4xf32>
    %101 = tpu.concatenate %94, %97, %100 in 1 : vector<8x4xf32>, vector<8x4xf32>, vector<8x4xf32> -> vector<8x12xf32>
    %cst_25 = arith.constant dense<0.000000e+00> : vector<8x128xf32>
    %102 = tpu.matmul %101, %6, %cst_25 {dimension_numbers = #tpu.dot_dimension_numbers<[1], [0], [0], [1], [0, 0, 1, 1], [], []>} : vector<8x12xf32>, vector<12x128xf32>, vector<8x128xf32> -> vector<8x128xf32>
    %103 = vector.broadcast %7 : vector<1x128xf32> to vector<8x128xf32>
    %104 = arith.addf %102, %103 : vector<8x128xf32>
    %105 = arith.negf %104 : vector<8x128xf32>
    %106 = math.exp %105 : vector<8x128xf32>
    %cst_26 = arith.constant 1.000000e+00 : f32
    %107 = vector.broadcast %cst_26 : f32 to vector<8x128xf32>
    %108 = arith.addf %107, %106 : vector<8x128xf32>
    %109 = arith.divf %107, %108 : vector<8x128xf32>
    %110 = vector.extract_strided_slice %109 {offsets = [0, 0], sizes = [8, 32], strides = [1, 1]} : vector<8x128xf32> to vector<8x32xf32>
    %111 = vector.extract_strided_slice %109 {offsets = [0, 32], sizes = [8, 32], strides = [1, 1]} : vector<8x128xf32> to vector<8x32xf32>
    %112 = vector.extract_strided_slice %104 {offsets = [0, 64], sizes = [8, 32], strides = [1, 1]} : vector<8x128xf32> to vector<8x32xf32>
    %113 = math.tanh %112 : vector<8x32xf32>
    %114 = vector.extract_strided_slice %109 {offsets = [0, 96], sizes = [8, 32], strides = [1, 1]} : vector<8x128xf32> to vector<8x32xf32>
    %115 = arith.mulf %110, %4 : vector<8x32xf32>
    %116 = arith.mulf %111, %113 : vector<8x32xf32>
    %117 = arith.addf %115, %116 : vector<8x32xf32>
    %118 = math.tanh %117 : vector<8x32xf32>
    %119 = arith.mulf %114, %118 : vector<8x32xf32>
    %c0_27 = arith.constant 0 : index
    %c0_28 = arith.constant 0 : index
    %c0_29 = arith.constant 0 : index
    %120 = vector.load %arg5[%c0_27, %c0_28, %c0_29] : memref<8x8x32xf32, #tpu.memory_space<vmem>>, vector<1x8x32xf32>
    %121 = vector.shape_cast %120 : vector<1x8x32xf32> to vector<8x32xf32>
    %122 = vector.shape_cast %119 : vector<8x32xf32> to vector<1x8x32xf32>
    tpu.vector_store %arg5[%c0_27, %c0_28, %c0_29], %122 {strides = array<i32>} : memref<8x8x32xf32, #tpu.memory_space<vmem>>, vector<1x8x32xf32>,
    %cst_30 = arith.constant dense<0.000000e+00> : vector<8x4xf32>
    %123 = tpu.matmul %119, %5, %cst_30 {dimension_numbers = #tpu.dot_dimension_numbers<[1], [0], [0], [1], [0, 0, 1, 1], [], []>} : vector<8x32xf32>, vector<32x4xf32>, vector<8x4xf32> -> vector<8x4xf32>
    %c1 = arith.constant 1 : index
    %c0_31 = arith.constant 0 : index
    %c0_32 = arith.constant 0 : index
    %124 = vector.load %arg1[%c1, %c0_31, %c0_32] : memref<8x8x4xf32, #tpu.memory_space<vmem>>, vector<1x8x4xf32>
    %125 = vector.shape_cast %124 : vector<1x8x4xf32> to vector<8x4xf32>
    %126 = arith.addf %123, %125 : vector<8x4xf32>
    %cst_33 = arith.constant 5.000000e-01 : f32
    %127 = vector.broadcast %cst_33 : f32 to vector<8x4xf32>
    %128 = arith.mulf %127, %126 : vector<8x4xf32>
    %129 = math.cos %128 : vector<8x4xf32>
    %cst_34 = arith.constant 5.000000e-01 : f32
    %130 = vector.broadcast %cst_34 : f32 to vector<8x4xf32>
    %131 = arith.mulf %130, %126 : vector<8x4xf32>
    %132 = math.sin %131 : vector<8x4xf32>
    %cst_35 = arith.constant 0.000000e+00 : f32
    %133 = vector.broadcast %cst_35 : f32 to vector<8x4xf32>
    %cst_36 = arith.constant 0.000000e+00 : f32
    %134 = vector.broadcast %cst_36 : f32 to vector<8x4xf32>
    %135 = arith.subf %134, %132 : vector<8x4xf32>
    %136 = arith.addf %129, %133 : vector<8x4xf32>
    %cst_37 = arith.constant 0.707106769 : f32
    %137 = vector.broadcast %cst_37 : f32 to vector<8x4xf32>
    %138 = arith.mulf %136, %137 : vector<8x4xf32>
    %139 = arith.addf %133, %135 : vector<8x4xf32>
    %cst_38 = arith.constant 0.707106769 : f32
    %140 = vector.broadcast %cst_38 : f32 to vector<8x4xf32>
    %141 = arith.mulf %139, %140 : vector<8x4xf32>
    %142 = arith.subf %129, %133 : vector<8x4xf32>
    %cst_39 = arith.constant 0.707106769 : f32
    %143 = vector.broadcast %cst_39 : f32 to vector<8x4xf32>
    %144 = arith.mulf %142, %143 : vector<8x4xf32>
    %145 = arith.subf %133, %135 : vector<8x4xf32>
    %cst_40 = arith.constant 0.707106769 : f32
    %146 = vector.broadcast %cst_40 : f32 to vector<8x4xf32>
    %147 = arith.mulf %145, %146 : vector<8x4xf32>
    %148 = vector.extract_strided_slice %126 {offsets = [0, 0], sizes = [1, 4], strides = [1, 1]} : vector<8x4xf32> to vector<1x4xf32>
    %149 = arith.mulf %148, %148 : vector<1x4xf32>
    %cst_41 = arith.constant 1.000000e+00 : f32
    %150 = vector.broadcast %cst_41 : f32 to vector<1x4xf32>
    %151 = arith.addf %150, %149 : vector<1x4xf32>
    %152 = math.rsqrt %151 : vector<1x4xf32>
    %cst_42 = arith.constant 1.000000e+00 : f32
    %153 = vector.broadcast %cst_42 : f32 to vector<1x4xf32>
    %154 = arith.addf %153, %152 : vector<1x4xf32>
    %cst_43 = arith.constant 5.000000e-01 : f32
    %155 = vector.broadcast %cst_43 : f32 to vector<1x4xf32>
    %156 = arith.mulf %155, %154 : vector<1x4xf32>
    %157 = math.sqrt %156 : vector<1x4xf32>
    %cst_44 = arith.constant 5.000000e-01 : f32
    %158 = vector.broadcast %cst_44 : f32 to vector<1x4xf32>
    %159 = arith.mulf %158, %148 : vector<1x4xf32>
    %160 = arith.mulf %159, %152 : vector<1x4xf32>
    %161 = tpu.reciprocal %157 {approx = true} : vector<1x4xf32> -> vector<1x4xf32>
    %162 = arith.mulf %160, %161 : vector<1x4xf32>
    %163 = vector.broadcast %157 : vector<1x4xf32> to vector<8x4xf32>
    %164 = arith.mulf %163, %138 : vector<8x4xf32>
    %165 = vector.broadcast %162 : vector<1x4xf32> to vector<8x4xf32>
    %166 = arith.mulf %165, %144 : vector<8x4xf32>
    %167 = arith.subf %164, %166 : vector<8x4xf32>
    %168 = vector.broadcast %157 : vector<1x4xf32> to vector<8x4xf32>
    %169 = arith.mulf %168, %141 : vector<8x4xf32>
    %170 = vector.broadcast %162 : vector<1x4xf32> to vector<8x4xf32>
    %171 = arith.mulf %170, %147 : vector<8x4xf32>
    %172 = arith.subf %169, %171 : vector<8x4xf32>
    %173 = vector.broadcast %162 : vector<1x4xf32> to vector<8x4xf32>
    %174 = arith.mulf %173, %138 : vector<8x4xf32>
    %175 = vector.broadcast %157 : vector<1x4xf32> to vector<8x4xf32>
    %176 = arith.mulf %175, %144 : vector<8x4xf32>
    %177 = arith.addf %174, %176 : vector<8x4xf32>
    %178 = vector.broadcast %162 : vector<1x4xf32> to vector<8x4xf32>
    %179 = arith.mulf %178, %141 : vector<8x4xf32>
    %180 = vector.broadcast %157 : vector<1x4xf32> to vector<8x4xf32>
    %181 = arith.mulf %180, %147 : vector<8x4xf32>
    %182 = arith.addf %179, %181 : vector<8x4xf32>
    %183 = vector.broadcast %157 : vector<1x4xf32> to vector<8x4xf32>
    %184 = arith.mulf %183, %167 : vector<8x4xf32>
    %185 = vector.broadcast %162 : vector<1x4xf32> to vector<8x4xf32>
    %186 = arith.mulf %185, %172 : vector<8x4xf32>
    %187 = arith.addf %184, %186 : vector<8x4xf32>
    %188 = vector.broadcast %157 : vector<1x4xf32> to vector<8x4xf32>
    %189 = arith.mulf %188, %172 : vector<8x4xf32>
    %190 = vector.broadcast %162 : vector<1x4xf32> to vector<8x4xf32>
    %191 = arith.mulf %190, %167 : vector<8x4xf32>
    %192 = arith.subf %189, %191 : vector<8x4xf32>
    %193 = vector.broadcast %157 : vector<1x4xf32> to vector<8x4xf32>
    %194 = arith.mulf %193, %177 : vector<8x4xf32>
    %195 = vector.broadcast %162 : vector<1x4xf32> to vector<8x4xf32>
    %196 = arith.mulf %195, %182 : vector<8x4xf32>
    %197 = arith.subf %194, %196 : vector<8x4xf32>
    %198 = vector.broadcast %157 : vector<1x4xf32> to vector<8x4xf32>
    %199 = arith.mulf %198, %182 : vector<8x4xf32>
    %200 = vector.broadcast %162 : vector<1x4xf32> to vector<8x4xf32>
    %201 = arith.mulf %200, %177 : vector<8x4xf32>
    %202 = arith.addf %199, %201 : vector<8x4xf32>
    %203 = arith.mulf %187, %187 : vector<8x4xf32>
    %204 = arith.mulf %192, %192 : vector<8x4xf32>
    %205 = arith.addf %203, %204 : vector<8x4xf32>
    %206 = arith.mulf %197, %197 : vector<8x4xf32>
    %207 = arith.subf %205, %206 : vector<8x4xf32>
    %208 = arith.mulf %202, %202 : vector<8x4xf32>
    %209 = arith.subf %207, %208 : vector<8x4xf32>
    %210 = arith.mulf %187, %197 : vector<8x4xf32>
    %211 = arith.mulf %192, %202 : vector<8x4xf32>
    %212 = arith.addf %210, %211 : vector<8x4xf32>
    %213 = arith.mulf %187, %202 : vector<8x4xf32>
    %214 = arith.mulf %192, %197 : vector<8x4xf32>
    %215 = arith.subf %213, %214 : vector<8x4xf32>
    %216 = tpu.concatenate %209, %212, %215 in 1 : vector<8x4xf32>, vector<8x4xf32>, vector<8x4xf32> -> vector<8x12xf32>
    %cst_45 = arith.constant dense<0.000000e+00> : vector<8x128xf32>
    %217 = tpu.matmul %216, %6, %cst_45 {dimension_numbers = #tpu.dot_dimension_numbers<[1], [0], [0], [1], [0, 0, 1, 1], [], []>} : vector<8x12xf32>, vector<12x128xf32>, vector<8x128xf32> -> vector<8x128xf32>
    %218 = vector.broadcast %7 : vector<1x128xf32> to vector<8x128xf32>
    %219 = arith.addf %217, %218 : vector<8x128xf32>
    %220 = arith.negf %219 : vector<8x128xf32>
    %221 = math.exp %220 : vector<8x128xf32>
    %cst_46 = arith.constant 1.000000e+00 : f32
    %222 = vector.broadcast %cst_46 : f32 to vector<8x128xf32>
    %223 = arith.addf %222, %221 : vector<8x128xf32>
    %224 = arith.divf %222, %223 : vector<8x128xf32>
    %225 = vector.extract_strided_slice %224 {offsets = [0, 0], sizes = [8, 32], strides = [1, 1]} : vector<8x128xf32> to vector<8x32xf32>
    %226 = vector.extract_strided_slice %224 {offsets = [0, 32], sizes = [8, 32], strides = [1, 1]} : vector<8x128xf32> to vector<8x32xf32>
    %227 = vector.extract_strided_slice %219 {offsets = [0, 64], sizes = [8, 32], strides = [1, 1]} : vector<8x128xf32> to vector<8x32xf32>
    %228 = math.tanh %227 : vector<8x32xf32>
    %229 = vector.extract_strided_slice %224 {offsets = [0, 96], sizes = [8, 32], strides = [1, 1]} : vector<8x128xf32> to vector<8x32xf32>
    %230 = arith.mulf %225, %117 : vector<8x32xf32>
    %231 = arith.mulf %226, %228 : vector<8x32xf32>
    %232 = arith.addf %230, %231 : vector<8x32xf32>
    %233 = math.tanh %232 : vector<8x32xf32>
    %234 = arith.mulf %229, %233 : vector<8x32xf32>
    %c1_47 = arith.constant 1 : index
    %c0_48 = arith.constant 0 : index
    %c0_49 = arith.constant 0 : index
    %235 = vector.load %arg5[%c1_47, %c0_48, %c0_49] : memref<8x8x32xf32, #tpu.memory_space<vmem>>, vector<1x8x32xf32>
    %236 = vector.shape_cast %235 : vector<1x8x32xf32> to vector<8x32xf32>
    %237 = vector.shape_cast %234 : vector<8x32xf32> to vector<1x8x32xf32>
    tpu.vector_store %arg5[%c1_47, %c0_48, %c0_49], %237 {strides = array<i32>} : memref<8x8x32xf32, #tpu.memory_space<vmem>>, vector<1x8x32xf32>,
    %cst_50 = arith.constant dense<0.000000e+00> : vector<8x4xf32>
    %238 = tpu.matmul %234, %5, %cst_50 {dimension_numbers = #tpu.dot_dimension_numbers<[1], [0], [0], [1], [0, 0, 1, 1], [], []>} : vector<8x32xf32>, vector<32x4xf32>, vector<8x4xf32> -> vector<8x4xf32>
    %c2 = arith.constant 2 : index
    %c0_51 = arith.constant 0 : index
    %c0_52 = arith.constant 0 : index
    %239 = vector.load %arg1[%c2, %c0_51, %c0_52] : memref<8x8x4xf32, #tpu.memory_space<vmem>>, vector<1x8x4xf32>
    %240 = vector.shape_cast %239 : vector<1x8x4xf32> to vector<8x4xf32>
    %241 = arith.addf %238, %240 : vector<8x4xf32>
    %cst_53 = arith.constant 5.000000e-01 : f32
    %242 = vector.broadcast %cst_53 : f32 to vector<8x4xf32>
    %243 = arith.mulf %242, %241 : vector<8x4xf32>
    %244 = math.cos %243 : vector<8x4xf32>
    %cst_54 = arith.constant 5.000000e-01 : f32
    %245 = vector.broadcast %cst_54 : f32 to vector<8x4xf32>
    %246 = arith.mulf %245, %241 : vector<8x4xf32>
    %247 = math.sin %246 : vector<8x4xf32>
    %cst_55 = arith.constant 0.000000e+00 : f32
    %248 = vector.broadcast %cst_55 : f32 to vector<8x4xf32>
    %cst_56 = arith.constant 0.000000e+00 : f32
    %249 = vector.broadcast %cst_56 : f32 to vector<8x4xf32>
    %250 = arith.subf %249, %247 : vector<8x4xf32>
    %251 = arith.addf %244, %248 : vector<8x4xf32>
    %cst_57 = arith.constant 0.707106769 : f32
    %252 = vector.broadcast %cst_57 : f32 to vector<8x4xf32>
    %253 = arith.mulf %251, %252 : vector<8x4xf32>
    %254 = arith.addf %248, %250 : vector<8x4xf32>
    %cst_58 = arith.constant 0.707106769 : f32
    %255 = vector.broadcast %cst_58 : f32 to vector<8x4xf32>
    %256 = arith.mulf %254, %255 : vector<8x4xf32>
    %257 = arith.subf %244, %248 : vector<8x4xf32>
    %cst_59 = arith.constant 0.707106769 : f32
    %258 = vector.broadcast %cst_59 : f32 to vector<8x4xf32>
    %259 = arith.mulf %257, %258 : vector<8x4xf32>
    %260 = arith.subf %248, %250 : vector<8x4xf32>
    %cst_60 = arith.constant 0.707106769 : f32
    %261 = vector.broadcast %cst_60 : f32 to vector<8x4xf32>
    %262 = arith.mulf %260, %261 : vector<8x4xf32>
    %263 = vector.extract_strided_slice %241 {offsets = [0, 0], sizes = [1, 4], strides = [1, 1]} : vector<8x4xf32> to vector<1x4xf32>
    %264 = arith.mulf %263, %263 : vector<1x4xf32>
    %cst_61 = arith.constant 1.000000e+00 : f32
    %265 = vector.broadcast %cst_61 : f32 to vector<1x4xf32>
    %266 = arith.addf %265, %264 : vector<1x4xf32>
    %267 = math.rsqrt %266 : vector<1x4xf32>
    %cst_62 = arith.constant 1.000000e+00 : f32
    %268 = vector.broadcast %cst_62 : f32 to vector<1x4xf32>
    %269 = arith.addf %268, %267 : vector<1x4xf32>
    %cst_63 = arith.constant 5.000000e-01 : f32
    %270 = vector.broadcast %cst_63 : f32 to vector<1x4xf32>
    %271 = arith.mulf %270, %269 : vector<1x4xf32>
    %272 = math.sqrt %271 : vector<1x4xf32>
    %cst_64 = arith.constant 5.000000e-01 : f32
    %273 = vector.broadcast %cst_64 : f32 to vector<1x4xf32>
    %274 = arith.mulf %273, %263 : vector<1x4xf32>
    %275 = arith.mulf %274, %267 : vector<1x4xf32>
    %276 = tpu.reciprocal %272 {approx = true} : vector<1x4xf32> -> vector<1x4xf32>
    %277 = arith.mulf %275, %276 : vector<1x4xf32>
    %278 = vector.broadcast %272 : vector<1x4xf32> to vector<8x4xf32>
    %279 = arith.mulf %278, %253 : vector<8x4xf32>
    %280 = vector.broadcast %277 : vector<1x4xf32> to vector<8x4xf32>
    %281 = arith.mulf %280, %259 : vector<8x4xf32>
    %282 = arith.subf %279, %281 : vector<8x4xf32>
    %283 = vector.broadcast %272 : vector<1x4xf32> to vector<8x4xf32>
    %284 = arith.mulf %283, %256 : vector<8x4xf32>
    %285 = vector.broadcast %277 : vector<1x4xf32> to vector<8x4xf32>
    %286 = arith.mulf %285, %262 : vector<8x4xf32>
    %287 = arith.subf %284, %286 : vector<8x4xf32>
    %288 = vector.broadcast %277 : vector<1x4xf32> to vector<8x4xf32>
    %289 = arith.mulf %288, %253 : vector<8x4xf32>
    %290 = vector.broadcast %272 : vector<1x4xf32> to vector<8x4xf32>
    %291 = arith.mulf %290, %259 : vector<8x4xf32>
    %292 = arith.addf %289, %291 : vector<8x4xf32>
    %293 = vector.broadcast %277 : vector<1x4xf32> to vector<8x4xf32>
    %294 = arith.mulf %293, %256 : vector<8x4xf32>
    %295 = vector.broadcast %272 : vector<1x4xf32> to vector<8x4xf32>
    %296 = arith.mulf %295, %262 : vector<8x4xf32>
    %297 = arith.addf %294, %296 : vector<8x4xf32>
    %298 = vector.broadcast %272 : vector<1x4xf32> to vector<8x4xf32>
    %299 = arith.mulf %298, %282 : vector<8x4xf32>
    %300 = vector.broadcast %277 : vector<1x4xf32> to vector<8x4xf32>
    %301 = arith.mulf %300, %287 : vector<8x4xf32>
    %302 = arith.addf %299, %301 : vector<8x4xf32>
    %303 = vector.broadcast %272 : vector<1x4xf32> to vector<8x4xf32>
    %304 = arith.mulf %303, %287 : vector<8x4xf32>
    %305 = vector.broadcast %277 : vector<1x4xf32> to vector<8x4xf32>
    %306 = arith.mulf %305, %282 : vector<8x4xf32>
    %307 = arith.subf %304, %306 : vector<8x4xf32>
    %308 = vector.broadcast %272 : vector<1x4xf32> to vector<8x4xf32>
    %309 = arith.mulf %308, %292 : vector<8x4xf32>
    %310 = vector.broadcast %277 : vector<1x4xf32> to vector<8x4xf32>
    %311 = arith.mulf %310, %297 : vector<8x4xf32>
    %312 = arith.subf %309, %311 : vector<8x4xf32>
    %313 = vector.broadcast %272 : vector<1x4xf32> to vector<8x4xf32>
    %314 = arith.mulf %313, %297 : vector<8x4xf32>
    %315 = vector.broadcast %277 : vector<1x4xf32> to vector<8x4xf32>
    %316 = arith.mulf %315, %292 : vector<8x4xf32>
    %317 = arith.addf %314, %316 : vector<8x4xf32>
    %318 = arith.mulf %302, %302 : vector<8x4xf32>
    %319 = arith.mulf %307, %307 : vector<8x4xf32>
    %320 = arith.addf %318, %319 : vector<8x4xf32>
    %321 = arith.mulf %312, %312 : vector<8x4xf32>
    %322 = arith.subf %320, %321 : vector<8x4xf32>
    %323 = arith.mulf %317, %317 : vector<8x4xf32>
    %324 = arith.subf %322, %323 : vector<8x4xf32>
    %325 = arith.mulf %302, %312 : vector<8x4xf32>
    %326 = arith.mulf %307, %317 : vector<8x4xf32>
    %327 = arith.addf %325, %326 : vector<8x4xf32>
    %328 = arith.mulf %302, %317 : vector<8x4xf32>
    %329 = arith.mulf %307, %312 : vector<8x4xf32>
    %330 = arith.subf %328, %329 : vector<8x4xf32>
    %331 = tpu.concatenate %324, %327, %330 in 1 : vector<8x4xf32>, vector<8x4xf32>, vector<8x4xf32> -> vector<8x12xf32>
    %cst_65 = arith.constant dense<0.000000e+00> : vector<8x128xf32>
    %332 = tpu.matmul %331, %6, %cst_65 {dimension_numbers = #tpu.dot_dimension_numbers<[1], [0], [0], [1], [0, 0, 1, 1], [], []>} : vector<8x12xf32>, vector<12x128xf32>, vector<8x128xf32> -> vector<8x128xf32>
    %333 = vector.broadcast %7 : vector<1x128xf32> to vector<8x128xf32>
    %334 = arith.addf %332, %333 : vector<8x128xf32>
    %335 = arith.negf %334 : vector<8x128xf32>
    %336 = math.exp %335 : vector<8x128xf32>
    %cst_66 = arith.constant 1.000000e+00 : f32
    %337 = vector.broadcast %cst_66 : f32 to vector<8x128xf32>
    %338 = arith.addf %337, %336 : vector<8x128xf32>
    %339 = arith.divf %337, %338 : vector<8x128xf32>
    %340 = vector.extract_strided_slice %339 {offsets = [0, 0], sizes = [8, 32], strides = [1, 1]} : vector<8x128xf32> to vector<8x32xf32>
    %341 = vector.extract_strided_slice %339 {offsets = [0, 32], sizes = [8, 32], strides = [1, 1]} : vector<8x128xf32> to vector<8x32xf32>
    %342 = vector.extract_strided_slice %334 {offsets = [0, 64], sizes = [8, 32], strides = [1, 1]} : vector<8x128xf32> to vector<8x32xf32>
    %343 = math.tanh %342 : vector<8x32xf32>
    %344 = vector.extract_strided_slice %339 {offsets = [0, 96], sizes = [8, 32], strides = [1, 1]} : vector<8x128xf32> to vector<8x32xf32>
    %345 = arith.mulf %340, %232 : vector<8x32xf32>
    %346 = arith.mulf %341, %343 : vector<8x32xf32>
    %347 = arith.addf %345, %346 : vector<8x32xf32>
    %348 = math.tanh %347 : vector<8x32xf32>
    %349 = arith.mulf %344, %348 : vector<8x32xf32>
    %c2_67 = arith.constant 2 : index
    %c0_68 = arith.constant 0 : index
    %c0_69 = arith.constant 0 : index
    %350 = vector.load %arg5[%c2_67, %c0_68, %c0_69] : memref<8x8x32xf32, #tpu.memory_space<vmem>>, vector<1x8x32xf32>
    %351 = vector.shape_cast %350 : vector<1x8x32xf32> to vector<8x32xf32>
    %352 = vector.shape_cast %349 : vector<8x32xf32> to vector<1x8x32xf32>
    tpu.vector_store %arg5[%c2_67, %c0_68, %c0_69], %352 {strides = array<i32>} : memref<8x8x32xf32, #tpu.memory_space<vmem>>, vector<1x8x32xf32>,
    %cst_70 = arith.constant dense<0.000000e+00> : vector<8x4xf32>
    %353 = tpu.matmul %349, %5, %cst_70 {dimension_numbers = #tpu.dot_dimension_numbers<[1], [0], [0], [1], [0, 0, 1, 1], [], []>} : vector<8x32xf32>, vector<32x4xf32>, vector<8x4xf32> -> vector<8x4xf32>
    %c3 = arith.constant 3 : index
    %c0_71 = arith.constant 0 : index
    %c0_72 = arith.constant 0 : index
    %354 = vector.load %arg1[%c3, %c0_71, %c0_72] : memref<8x8x4xf32, #tpu.memory_space<vmem>>, vector<1x8x4xf32>
    %355 = vector.shape_cast %354 : vector<1x8x4xf32> to vector<8x4xf32>
    %356 = arith.addf %353, %355 : vector<8x4xf32>
    %cst_73 = arith.constant 5.000000e-01 : f32
    %357 = vector.broadcast %cst_73 : f32 to vector<8x4xf32>
    %358 = arith.mulf %357, %356 : vector<8x4xf32>
    %359 = math.cos %358 : vector<8x4xf32>
    %cst_74 = arith.constant 5.000000e-01 : f32
    %360 = vector.broadcast %cst_74 : f32 to vector<8x4xf32>
    %361 = arith.mulf %360, %356 : vector<8x4xf32>
    %362 = math.sin %361 : vector<8x4xf32>
    %cst_75 = arith.constant 0.000000e+00 : f32
    %363 = vector.broadcast %cst_75 : f32 to vector<8x4xf32>
    %cst_76 = arith.constant 0.000000e+00 : f32
    %364 = vector.broadcast %cst_76 : f32 to vector<8x4xf32>
    %365 = arith.subf %364, %362 : vector<8x4xf32>
    %366 = arith.addf %359, %363 : vector<8x4xf32>
    %cst_77 = arith.constant 0.707106769 : f32
    %367 = vector.broadcast %cst_77 : f32 to vector<8x4xf32>
    %368 = arith.mulf %366, %367 : vector<8x4xf32>
    %369 = arith.addf %363, %365 : vector<8x4xf32>
    %cst_78 = arith.constant 0.707106769 : f32
    %370 = vector.broadcast %cst_78 : f32 to vector<8x4xf32>
    %371 = arith.mulf %369, %370 : vector<8x4xf32>
    %372 = arith.subf %359, %363 : vector<8x4xf32>
    %cst_79 = arith.constant 0.707106769 : f32
    %373 = vector.broadcast %cst_79 : f32 to vector<8x4xf32>
    %374 = arith.mulf %372, %373 : vector<8x4xf32>
    %375 = arith.subf %363, %365 : vector<8x4xf32>
    %cst_80 = arith.constant 0.707106769 : f32
    %376 = vector.broadcast %cst_80 : f32 to vector<8x4xf32>
    %377 = arith.mulf %375, %376 : vector<8x4xf32>
    %378 = vector.extract_strided_slice %356 {offsets = [0, 0], sizes = [1, 4], strides = [1, 1]} : vector<8x4xf32> to vector<1x4xf32>
    %379 = arith.mulf %378, %378 : vector<1x4xf32>
    %cst_81 = arith.constant 1.000000e+00 : f32
    %380 = vector.broadcast %cst_81 : f32 to vector<1x4xf32>
    %381 = arith.addf %380, %379 : vector<1x4xf32>
    %382 = math.rsqrt %381 : vector<1x4xf32>
    %cst_82 = arith.constant 1.000000e+00 : f32
    %383 = vector.broadcast %cst_82 : f32 to vector<1x4xf32>
    %384 = arith.addf %383, %382 : vector<1x4xf32>
    %cst_83 = arith.constant 5.000000e-01 : f32
    %385 = vector.broadcast %cst_83 : f32 to vector<1x4xf32>
    %386 = arith.mulf %385, %384 : vector<1x4xf32>
    %387 = math.sqrt %386 : vector<1x4xf32>
    %cst_84 = arith.constant 5.000000e-01 : f32
    %388 = vector.broadcast %cst_84 : f32 to vector<1x4xf32>
    %389 = arith.mulf %388, %378 : vector<1x4xf32>
    %390 = arith.mulf %389, %382 : vector<1x4xf32>
    %391 = tpu.reciprocal %387 {approx = true} : vector<1x4xf32> -> vector<1x4xf32>
    %392 = arith.mulf %390, %391 : vector<1x4xf32>
    %393 = vector.broadcast %387 : vector<1x4xf32> to vector<8x4xf32>
    %394 = arith.mulf %393, %368 : vector<8x4xf32>
    %395 = vector.broadcast %392 : vector<1x4xf32> to vector<8x4xf32>
    %396 = arith.mulf %395, %374 : vector<8x4xf32>
    %397 = arith.subf %394, %396 : vector<8x4xf32>
    %398 = vector.broadcast %387 : vector<1x4xf32> to vector<8x4xf32>
    %399 = arith.mulf %398, %371 : vector<8x4xf32>
    %400 = vector.broadcast %392 : vector<1x4xf32> to vector<8x4xf32>
    %401 = arith.mulf %400, %377 : vector<8x4xf32>
    %402 = arith.subf %399, %401 : vector<8x4xf32>
    %403 = vector.broadcast %392 : vector<1x4xf32> to vector<8x4xf32>
    %404 = arith.mulf %403, %368 : vector<8x4xf32>
    %405 = vector.broadcast %387 : vector<1x4xf32> to vector<8x4xf32>
    %406 = arith.mulf %405, %374 : vector<8x4xf32>
    %407 = arith.addf %404, %406 : vector<8x4xf32>
    %408 = vector.broadcast %392 : vector<1x4xf32> to vector<8x4xf32>
    %409 = arith.mulf %408, %371 : vector<8x4xf32>
    %410 = vector.broadcast %387 : vector<1x4xf32> to vector<8x4xf32>
    %411 = arith.mulf %410, %377 : vector<8x4xf32>
    %412 = arith.addf %409, %411 : vector<8x4xf32>
    %413 = vector.broadcast %387 : vector<1x4xf32> to vector<8x4xf32>
    %414 = arith.mulf %413, %397 : vector<8x4xf32>
    %415 = vector.broadcast %392 : vector<1x4xf32> to vector<8x4xf32>
    %416 = arith.mulf %415, %402 : vector<8x4xf32>
    %417 = arith.addf %414, %416 : vector<8x4xf32>
    %418 = vector.broadcast %387 : vector<1x4xf32> to vector<8x4xf32>
    %419 = arith.mulf %418, %402 : vector<8x4xf32>
    %420 = vector.broadcast %392 : vector<1x4xf32> to vector<8x4xf32>
    %421 = arith.mulf %420, %397 : vector<8x4xf32>
    %422 = arith.subf %419, %421 : vector<8x4xf32>
    %423 = vector.broadcast %387 : vector<1x4xf32> to vector<8x4xf32>
    %424 = arith.mulf %423, %407 : vector<8x4xf32>
    %425 = vector.broadcast %392 : vector<1x4xf32> to vector<8x4xf32>
    %426 = arith.mulf %425, %412 : vector<8x4xf32>
    %427 = arith.subf %424, %426 : vector<8x4xf32>
    %428 = vector.broadcast %387 : vector<1x4xf32> to vector<8x4xf32>
    %429 = arith.mulf %428, %412 : vector<8x4xf32>
    %430 = vector.broadcast %392 : vector<1x4xf32> to vector<8x4xf32>
    %431 = arith.mulf %430, %407 : vector<8x4xf32>
    %432 = arith.addf %429, %431 : vector<8x4xf32>
    %433 = arith.mulf %417, %417 : vector<8x4xf32>
    %434 = arith.mulf %422, %422 : vector<8x4xf32>
    %435 = arith.addf %433, %434 : vector<8x4xf32>
    %436 = arith.mulf %427, %427 : vector<8x4xf32>
    %437 = arith.subf %435, %436 : vector<8x4xf32>
    %438 = arith.mulf %432, %432 : vector<8x4xf32>
    %439 = arith.subf %437, %438 : vector<8x4xf32>
    %440 = arith.mulf %417, %427 : vector<8x4xf32>
    %441 = arith.mulf %422, %432 : vector<8x4xf32>
    %442 = arith.addf %440, %441 : vector<8x4xf32>
    %443 = arith.mulf %417, %432 : vector<8x4xf32>
    %444 = arith.mulf %422, %427 : vector<8x4xf32>
    %445 = arith.subf %443, %444 : vector<8x4xf32>
    %446 = tpu.concatenate %439, %442, %445 in 1 : vector<8x4xf32>, vector<8x4xf32>, vector<8x4xf32> -> vector<8x12xf32>
    %cst_85 = arith.constant dense<0.000000e+00> : vector<8x128xf32>
    %447 = tpu.matmul %446, %6, %cst_85 {dimension_numbers = #tpu.dot_dimension_numbers<[1], [0], [0], [1], [0, 0, 1, 1], [], []>} : vector<8x12xf32>, vector<12x128xf32>, vector<8x128xf32> -> vector<8x128xf32>
    %448 = vector.broadcast %7 : vector<1x128xf32> to vector<8x128xf32>
    %449 = arith.addf %447, %448 : vector<8x128xf32>
    %450 = arith.negf %449 : vector<8x128xf32>
    %451 = math.exp %450 : vector<8x128xf32>
    %cst_86 = arith.constant 1.000000e+00 : f32
    %452 = vector.broadcast %cst_86 : f32 to vector<8x128xf32>
    %453 = arith.addf %452, %451 : vector<8x128xf32>
    %454 = arith.divf %452, %453 : vector<8x128xf32>
    %455 = vector.extract_strided_slice %454 {offsets = [0, 0], sizes = [8, 32], strides = [1, 1]} : vector<8x128xf32> to vector<8x32xf32>
    %456 = vector.extract_strided_slice %454 {offsets = [0, 32], sizes = [8, 32], strides = [1, 1]} : vector<8x128xf32> to vector<8x32xf32>
    %457 = vector.extract_strided_slice %449 {offsets = [0, 64], sizes = [8, 32], strides = [1, 1]} : vector<8x128xf32> to vector<8x32xf32>
    %458 = math.tanh %457 : vector<8x32xf32>
    %459 = vector.extract_strided_slice %454 {offsets = [0, 96], sizes = [8, 32], strides = [1, 1]} : vector<8x128xf32> to vector<8x32xf32>
    %460 = arith.mulf %455, %347 : vector<8x32xf32>
    %461 = arith.mulf %456, %458 : vector<8x32xf32>
    %462 = arith.addf %460, %461 : vector<8x32xf32>
    %463 = math.tanh %462 : vector<8x32xf32>
    %464 = arith.mulf %459, %463 : vector<8x32xf32>
    %c3_87 = arith.constant 3 : index
    %c0_88 = arith.constant 0 : index
    %c0_89 = arith.constant 0 : index
    %465 = vector.load %arg5[%c3_87, %c0_88, %c0_89] : memref<8x8x32xf32, #tpu.memory_space<vmem>>, vector<1x8x32xf32>
    %466 = vector.shape_cast %465 : vector<1x8x32xf32> to vector<8x32xf32>
    %467 = vector.shape_cast %464 : vector<8x32xf32> to vector<1x8x32xf32>
    tpu.vector_store %arg5[%c3_87, %c0_88, %c0_89], %467 {strides = array<i32>} : memref<8x8x32xf32, #tpu.memory_space<vmem>>, vector<1x8x32xf32>,
    %cst_90 = arith.constant dense<0.000000e+00> : vector<8x4xf32>
    %468 = tpu.matmul %464, %5, %cst_90 {dimension_numbers = #tpu.dot_dimension_numbers<[1], [0], [0], [1], [0, 0, 1, 1], [], []>} : vector<8x32xf32>, vector<32x4xf32>, vector<8x4xf32> -> vector<8x4xf32>
    %c4 = arith.constant 4 : index
    %c0_91 = arith.constant 0 : index
    %c0_92 = arith.constant 0 : index
    %469 = vector.load %arg1[%c4, %c0_91, %c0_92] : memref<8x8x4xf32, #tpu.memory_space<vmem>>, vector<1x8x4xf32>
    %470 = vector.shape_cast %469 : vector<1x8x4xf32> to vector<8x4xf32>
    %471 = arith.addf %468, %470 : vector<8x4xf32>
    %cst_93 = arith.constant 5.000000e-01 : f32
    %472 = vector.broadcast %cst_93 : f32 to vector<8x4xf32>
    %473 = arith.mulf %472, %471 : vector<8x4xf32>
    %474 = math.cos %473 : vector<8x4xf32>
    %cst_94 = arith.constant 5.000000e-01 : f32
    %475 = vector.broadcast %cst_94 : f32 to vector<8x4xf32>
    %476 = arith.mulf %475, %471 : vector<8x4xf32>
    %477 = math.sin %476 : vector<8x4xf32>
    %cst_95 = arith.constant 0.000000e+00 : f32
    %478 = vector.broadcast %cst_95 : f32 to vector<8x4xf32>
    %cst_96 = arith.constant 0.000000e+00 : f32
    %479 = vector.broadcast %cst_96 : f32 to vector<8x4xf32>
    %480 = arith.subf %479, %477 : vector<8x4xf32>
    %481 = arith.addf %474, %478 : vector<8x4xf32>
    %cst_97 = arith.constant 0.707106769 : f32
    %482 = vector.broadcast %cst_97 : f32 to vector<8x4xf32>
    %483 = arith.mulf %481, %482 : vector<8x4xf32>
    %484 = arith.addf %478, %480 : vector<8x4xf32>
    %cst_98 = arith.constant 0.707106769 : f32
    %485 = vector.broadcast %cst_98 : f32 to vector<8x4xf32>
    %486 = arith.mulf %484, %485 : vector<8x4xf32>
    %487 = arith.subf %474, %478 : vector<8x4xf32>
    %cst_99 = arith.constant 0.707106769 : f32
    %488 = vector.broadcast %cst_99 : f32 to vector<8x4xf32>
    %489 = arith.mulf %487, %488 : vector<8x4xf32>
    %490 = arith.subf %478, %480 : vector<8x4xf32>
    %cst_100 = arith.constant 0.707106769 : f32
    %491 = vector.broadcast %cst_100 : f32 to vector<8x4xf32>
    %492 = arith.mulf %490, %491 : vector<8x4xf32>
    %493 = vector.extract_strided_slice %471 {offsets = [0, 0], sizes = [1, 4], strides = [1, 1]} : vector<8x4xf32> to vector<1x4xf32>
    %494 = arith.mulf %493, %493 : vector<1x4xf32>
    %cst_101 = arith.constant 1.000000e+00 : f32
    %495 = vector.broadcast %cst_101 : f32 to vector<1x4xf32>
    %496 = arith.addf %495, %494 : vector<1x4xf32>
    %497 = math.rsqrt %496 : vector<1x4xf32>
    %cst_102 = arith.constant 1.000000e+00 : f32
    %498 = vector.broadcast %cst_102 : f32 to vector<1x4xf32>
    %499 = arith.addf %498, %497 : vector<1x4xf32>
    %cst_103 = arith.constant 5.000000e-01 : f32
    %500 = vector.broadcast %cst_103 : f32 to vector<1x4xf32>
    %501 = arith.mulf %500, %499 : vector<1x4xf32>
    %502 = math.sqrt %501 : vector<1x4xf32>
    %cst_104 = arith.constant 5.000000e-01 : f32
    %503 = vector.broadcast %cst_104 : f32 to vector<1x4xf32>
    %504 = arith.mulf %503, %493 : vector<1x4xf32>
    %505 = arith.mulf %504, %497 : vector<1x4xf32>
    %506 = tpu.reciprocal %502 {approx = true} : vector<1x4xf32> -> vector<1x4xf32>
    %507 = arith.mulf %505, %506 : vector<1x4xf32>
    %508 = vector.broadcast %502 : vector<1x4xf32> to vector<8x4xf32>
    %509 = arith.mulf %508, %483 : vector<8x4xf32>
    %510 = vector.broadcast %507 : vector<1x4xf32> to vector<8x4xf32>
    %511 = arith.mulf %510, %489 : vector<8x4xf32>
    %512 = arith.subf %509, %511 : vector<8x4xf32>
    %513 = vector.broadcast %502 : vector<1x4xf32> to vector<8x4xf32>
    %514 = arith.mulf %513, %486 : vector<8x4xf32>
    %515 = vector.broadcast %507 : vector<1x4xf32> to vector<8x4xf32>
    %516 = arith.mulf %515, %492 : vector<8x4xf32>
    %517 = arith.subf %514, %516 : vector<8x4xf32>
    %518 = vector.broadcast %507 : vector<1x4xf32> to vector<8x4xf32>
    %519 = arith.mulf %518, %483 : vector<8x4xf32>
    %520 = vector.broadcast %502 : vector<1x4xf32> to vector<8x4xf32>
    %521 = arith.mulf %520, %489 : vector<8x4xf32>
    %522 = arith.addf %519, %521 : vector<8x4xf32>
    %523 = vector.broadcast %507 : vector<1x4xf32> to vector<8x4xf32>
    %524 = arith.mulf %523, %486 : vector<8x4xf32>
    %525 = vector.broadcast %502 : vector<1x4xf32> to vector<8x4xf32>
    %526 = arith.mulf %525, %492 : vector<8x4xf32>
    %527 = arith.addf %524, %526 : vector<8x4xf32>
    %528 = vector.broadcast %502 : vector<1x4xf32> to vector<8x4xf32>
    %529 = arith.mulf %528, %512 : vector<8x4xf32>
    %530 = vector.broadcast %507 : vector<1x4xf32> to vector<8x4xf32>
    %531 = arith.mulf %530, %517 : vector<8x4xf32>
    %532 = arith.addf %529, %531 : vector<8x4xf32>
    %533 = vector.broadcast %502 : vector<1x4xf32> to vector<8x4xf32>
    %534 = arith.mulf %533, %517 : vector<8x4xf32>
    %535 = vector.broadcast %507 : vector<1x4xf32> to vector<8x4xf32>
    %536 = arith.mulf %535, %512 : vector<8x4xf32>
    %537 = arith.subf %534, %536 : vector<8x4xf32>
    %538 = vector.broadcast %502 : vector<1x4xf32> to vector<8x4xf32>
    %539 = arith.mulf %538, %522 : vector<8x4xf32>
    %540 = vector.broadcast %507 : vector<1x4xf32> to vector<8x4xf32>
    %541 = arith.mulf %540, %527 : vector<8x4xf32>
    %542 = arith.subf %539, %541 : vector<8x4xf32>
    %543 = vector.broadcast %502 : vector<1x4xf32> to vector<8x4xf32>
    %544 = arith.mulf %543, %527 : vector<8x4xf32>
    %545 = vector.broadcast %507 : vector<1x4xf32> to vector<8x4xf32>
    %546 = arith.mulf %545, %522 : vector<8x4xf32>
    %547 = arith.addf %544, %546 : vector<8x4xf32>
    %548 = arith.mulf %532, %532 : vector<8x4xf32>
    %549 = arith.mulf %537, %537 : vector<8x4xf32>
    %550 = arith.addf %548, %549 : vector<8x4xf32>
    %551 = arith.mulf %542, %542 : vector<8x4xf32>
    %552 = arith.subf %550, %551 : vector<8x4xf32>
    %553 = arith.mulf %547, %547 : vector<8x4xf32>
    %554 = arith.subf %552, %553 : vector<8x4xf32>
    %555 = arith.mulf %532, %542 : vector<8x4xf32>
    %556 = arith.mulf %537, %547 : vector<8x4xf32>
    %557 = arith.addf %555, %556 : vector<8x4xf32>
    %558 = arith.mulf %532, %547 : vector<8x4xf32>
    %559 = arith.mulf %537, %542 : vector<8x4xf32>
    %560 = arith.subf %558, %559 : vector<8x4xf32>
    %561 = tpu.concatenate %554, %557, %560 in 1 : vector<8x4xf32>, vector<8x4xf32>, vector<8x4xf32> -> vector<8x12xf32>
    %cst_105 = arith.constant dense<0.000000e+00> : vector<8x128xf32>
    %562 = tpu.matmul %561, %6, %cst_105 {dimension_numbers = #tpu.dot_dimension_numbers<[1], [0], [0], [1], [0, 0, 1, 1], [], []>} : vector<8x12xf32>, vector<12x128xf32>, vector<8x128xf32> -> vector<8x128xf32>
    %563 = vector.broadcast %7 : vector<1x128xf32> to vector<8x128xf32>
    %564 = arith.addf %562, %563 : vector<8x128xf32>
    %565 = arith.negf %564 : vector<8x128xf32>
    %566 = math.exp %565 : vector<8x128xf32>
    %cst_106 = arith.constant 1.000000e+00 : f32
    %567 = vector.broadcast %cst_106 : f32 to vector<8x128xf32>
    %568 = arith.addf %567, %566 : vector<8x128xf32>
    %569 = arith.divf %567, %568 : vector<8x128xf32>
    %570 = vector.extract_strided_slice %569 {offsets = [0, 0], sizes = [8, 32], strides = [1, 1]} : vector<8x128xf32> to vector<8x32xf32>
    %571 = vector.extract_strided_slice %569 {offsets = [0, 32], sizes = [8, 32], strides = [1, 1]} : vector<8x128xf32> to vector<8x32xf32>
    %572 = vector.extract_strided_slice %564 {offsets = [0, 64], sizes = [8, 32], strides = [1, 1]} : vector<8x128xf32> to vector<8x32xf32>
    %573 = math.tanh %572 : vector<8x32xf32>
    %574 = vector.extract_strided_slice %569 {offsets = [0, 96], sizes = [8, 32], strides = [1, 1]} : vector<8x128xf32> to vector<8x32xf32>
    %575 = arith.mulf %570, %462 : vector<8x32xf32>
    %576 = arith.mulf %571, %573 : vector<8x32xf32>
    %577 = arith.addf %575, %576 : vector<8x32xf32>
    %578 = math.tanh %577 : vector<8x32xf32>
    %579 = arith.mulf %574, %578 : vector<8x32xf32>
    %c4_107 = arith.constant 4 : index
    %c0_108 = arith.constant 0 : index
    %c0_109 = arith.constant 0 : index
    %580 = vector.load %arg5[%c4_107, %c0_108, %c0_109] : memref<8x8x32xf32, #tpu.memory_space<vmem>>, vector<1x8x32xf32>
    %581 = vector.shape_cast %580 : vector<1x8x32xf32> to vector<8x32xf32>
    %582 = vector.shape_cast %579 : vector<8x32xf32> to vector<1x8x32xf32>
    tpu.vector_store %arg5[%c4_107, %c0_108, %c0_109], %582 {strides = array<i32>} : memref<8x8x32xf32, #tpu.memory_space<vmem>>, vector<1x8x32xf32>,
    %cst_110 = arith.constant dense<0.000000e+00> : vector<8x4xf32>
    %583 = tpu.matmul %579, %5, %cst_110 {dimension_numbers = #tpu.dot_dimension_numbers<[1], [0], [0], [1], [0, 0, 1, 1], [], []>} : vector<8x32xf32>, vector<32x4xf32>, vector<8x4xf32> -> vector<8x4xf32>
    %c5 = arith.constant 5 : index
    %c0_111 = arith.constant 0 : index
    %c0_112 = arith.constant 0 : index
    %584 = vector.load %arg1[%c5, %c0_111, %c0_112] : memref<8x8x4xf32, #tpu.memory_space<vmem>>, vector<1x8x4xf32>
    %585 = vector.shape_cast %584 : vector<1x8x4xf32> to vector<8x4xf32>
    %586 = arith.addf %583, %585 : vector<8x4xf32>
    %cst_113 = arith.constant 5.000000e-01 : f32
    %587 = vector.broadcast %cst_113 : f32 to vector<8x4xf32>
    %588 = arith.mulf %587, %586 : vector<8x4xf32>
    %589 = math.cos %588 : vector<8x4xf32>
    %cst_114 = arith.constant 5.000000e-01 : f32
    %590 = vector.broadcast %cst_114 : f32 to vector<8x4xf32>
    %591 = arith.mulf %590, %586 : vector<8x4xf32>
    %592 = math.sin %591 : vector<8x4xf32>
    %cst_115 = arith.constant 0.000000e+00 : f32
    %593 = vector.broadcast %cst_115 : f32 to vector<8x4xf32>
    %cst_116 = arith.constant 0.000000e+00 : f32
    %594 = vector.broadcast %cst_116 : f32 to vector<8x4xf32>
    %595 = arith.subf %594, %592 : vector<8x4xf32>
    %596 = arith.addf %589, %593 : vector<8x4xf32>
    %cst_117 = arith.constant 0.707106769 : f32
    %597 = vector.broadcast %cst_117 : f32 to vector<8x4xf32>
    %598 = arith.mulf %596, %597 : vector<8x4xf32>
    %599 = arith.addf %593, %595 : vector<8x4xf32>
    %cst_118 = arith.constant 0.707106769 : f32
    %600 = vector.broadcast %cst_118 : f32 to vector<8x4xf32>
    %601 = arith.mulf %599, %600 : vector<8x4xf32>
    %602 = arith.subf %589, %593 : vector<8x4xf32>
    %cst_119 = arith.constant 0.707106769 : f32
    %603 = vector.broadcast %cst_119 : f32 to vector<8x4xf32>
    %604 = arith.mulf %602, %603 : vector<8x4xf32>
    %605 = arith.subf %593, %595 : vector<8x4xf32>
    %cst_120 = arith.constant 0.707106769 : f32
    %606 = vector.broadcast %cst_120 : f32 to vector<8x4xf32>
    %607 = arith.mulf %605, %606 : vector<8x4xf32>
    %608 = vector.extract_strided_slice %586 {offsets = [0, 0], sizes = [1, 4], strides = [1, 1]} : vector<8x4xf32> to vector<1x4xf32>
    %609 = arith.mulf %608, %608 : vector<1x4xf32>
    %cst_121 = arith.constant 1.000000e+00 : f32
    %610 = vector.broadcast %cst_121 : f32 to vector<1x4xf32>
    %611 = arith.addf %610, %609 : vector<1x4xf32>
    %612 = math.rsqrt %611 : vector<1x4xf32>
    %cst_122 = arith.constant 1.000000e+00 : f32
    %613 = vector.broadcast %cst_122 : f32 to vector<1x4xf32>
    %614 = arith.addf %613, %612 : vector<1x4xf32>
    %cst_123 = arith.constant 5.000000e-01 : f32
    %615 = vector.broadcast %cst_123 : f32 to vector<1x4xf32>
    %616 = arith.mulf %615, %614 : vector<1x4xf32>
    %617 = math.sqrt %616 : vector<1x4xf32>
    %cst_124 = arith.constant 5.000000e-01 : f32
    %618 = vector.broadcast %cst_124 : f32 to vector<1x4xf32>
    %619 = arith.mulf %618, %608 : vector<1x4xf32>
    %620 = arith.mulf %619, %612 : vector<1x4xf32>
    %621 = tpu.reciprocal %617 {approx = true} : vector<1x4xf32> -> vector<1x4xf32>
    %622 = arith.mulf %620, %621 : vector<1x4xf32>
    %623 = vector.broadcast %617 : vector<1x4xf32> to vector<8x4xf32>
    %624 = arith.mulf %623, %598 : vector<8x4xf32>
    %625 = vector.broadcast %622 : vector<1x4xf32> to vector<8x4xf32>
    %626 = arith.mulf %625, %604 : vector<8x4xf32>
    %627 = arith.subf %624, %626 : vector<8x4xf32>
    %628 = vector.broadcast %617 : vector<1x4xf32> to vector<8x4xf32>
    %629 = arith.mulf %628, %601 : vector<8x4xf32>
    %630 = vector.broadcast %622 : vector<1x4xf32> to vector<8x4xf32>
    %631 = arith.mulf %630, %607 : vector<8x4xf32>
    %632 = arith.subf %629, %631 : vector<8x4xf32>
    %633 = vector.broadcast %622 : vector<1x4xf32> to vector<8x4xf32>
    %634 = arith.mulf %633, %598 : vector<8x4xf32>
    %635 = vector.broadcast %617 : vector<1x4xf32> to vector<8x4xf32>
    %636 = arith.mulf %635, %604 : vector<8x4xf32>
    %637 = arith.addf %634, %636 : vector<8x4xf32>
    %638 = vector.broadcast %622 : vector<1x4xf32> to vector<8x4xf32>
    %639 = arith.mulf %638, %601 : vector<8x4xf32>
    %640 = vector.broadcast %617 : vector<1x4xf32> to vector<8x4xf32>
    %641 = arith.mulf %640, %607 : vector<8x4xf32>
    %642 = arith.addf %639, %641 : vector<8x4xf32>
    %643 = vector.broadcast %617 : vector<1x4xf32> to vector<8x4xf32>
    %644 = arith.mulf %643, %627 : vector<8x4xf32>
    %645 = vector.broadcast %622 : vector<1x4xf32> to vector<8x4xf32>
    %646 = arith.mulf %645, %632 : vector<8x4xf32>
    %647 = arith.addf %644, %646 : vector<8x4xf32>
    %648 = vector.broadcast %617 : vector<1x4xf32> to vector<8x4xf32>
    %649 = arith.mulf %648, %632 : vector<8x4xf32>
    %650 = vector.broadcast %622 : vector<1x4xf32> to vector<8x4xf32>
    %651 = arith.mulf %650, %627 : vector<8x4xf32>
    %652 = arith.subf %649, %651 : vector<8x4xf32>
    %653 = vector.broadcast %617 : vector<1x4xf32> to vector<8x4xf32>
    %654 = arith.mulf %653, %637 : vector<8x4xf32>
    %655 = vector.broadcast %622 : vector<1x4xf32> to vector<8x4xf32>
    %656 = arith.mulf %655, %642 : vector<8x4xf32>
    %657 = arith.subf %654, %656 : vector<8x4xf32>
    %658 = vector.broadcast %617 : vector<1x4xf32> to vector<8x4xf32>
    %659 = arith.mulf %658, %642 : vector<8x4xf32>
    %660 = vector.broadcast %622 : vector<1x4xf32> to vector<8x4xf32>
    %661 = arith.mulf %660, %637 : vector<8x4xf32>
    %662 = arith.addf %659, %661 : vector<8x4xf32>
    %663 = arith.mulf %647, %647 : vector<8x4xf32>
    %664 = arith.mulf %652, %652 : vector<8x4xf32>
    %665 = arith.addf %663, %664 : vector<8x4xf32>
    %666 = arith.mulf %657, %657 : vector<8x4xf32>
    %667 = arith.subf %665, %666 : vector<8x4xf32>
    %668 = arith.mulf %662, %662 : vector<8x4xf32>
    %669 = arith.subf %667, %668 : vector<8x4xf32>
    %670 = arith.mulf %647, %657 : vector<8x4xf32>
    %671 = arith.mulf %652, %662 : vector<8x4xf32>
    %672 = arith.addf %670, %671 : vector<8x4xf32>
    %673 = arith.mulf %647, %662 : vector<8x4xf32>
    %674 = arith.mulf %652, %657 : vector<8x4xf32>
    %675 = arith.subf %673, %674 : vector<8x4xf32>
    %676 = tpu.concatenate %669, %672, %675 in 1 : vector<8x4xf32>, vector<8x4xf32>, vector<8x4xf32> -> vector<8x12xf32>
    %cst_125 = arith.constant dense<0.000000e+00> : vector<8x128xf32>
    %677 = tpu.matmul %676, %6, %cst_125 {dimension_numbers = #tpu.dot_dimension_numbers<[1], [0], [0], [1], [0, 0, 1, 1], [], []>} : vector<8x12xf32>, vector<12x128xf32>, vector<8x128xf32> -> vector<8x128xf32>
    %678 = vector.broadcast %7 : vector<1x128xf32> to vector<8x128xf32>
    %679 = arith.addf %677, %678 : vector<8x128xf32>
    %680 = arith.negf %679 : vector<8x128xf32>
    %681 = math.exp %680 : vector<8x128xf32>
    %cst_126 = arith.constant 1.000000e+00 : f32
    %682 = vector.broadcast %cst_126 : f32 to vector<8x128xf32>
    %683 = arith.addf %682, %681 : vector<8x128xf32>
    %684 = arith.divf %682, %683 : vector<8x128xf32>
    %685 = vector.extract_strided_slice %684 {offsets = [0, 0], sizes = [8, 32], strides = [1, 1]} : vector<8x128xf32> to vector<8x32xf32>
    %686 = vector.extract_strided_slice %684 {offsets = [0, 32], sizes = [8, 32], strides = [1, 1]} : vector<8x128xf32> to vector<8x32xf32>
    %687 = vector.extract_strided_slice %679 {offsets = [0, 64], sizes = [8, 32], strides = [1, 1]} : vector<8x128xf32> to vector<8x32xf32>
    %688 = math.tanh %687 : vector<8x32xf32>
    %689 = vector.extract_strided_slice %684 {offsets = [0, 96], sizes = [8, 32], strides = [1, 1]} : vector<8x128xf32> to vector<8x32xf32>
    %690 = arith.mulf %685, %577 : vector<8x32xf32>
    %691 = arith.mulf %686, %688 : vector<8x32xf32>
    %692 = arith.addf %690, %691 : vector<8x32xf32>
    %693 = math.tanh %692 : vector<8x32xf32>
    %694 = arith.mulf %689, %693 : vector<8x32xf32>
    %c5_127 = arith.constant 5 : index
    %c0_128 = arith.constant 0 : index
    %c0_129 = arith.constant 0 : index
    %695 = vector.load %arg5[%c5_127, %c0_128, %c0_129] : memref<8x8x32xf32, #tpu.memory_space<vmem>>, vector<1x8x32xf32>
    %696 = vector.shape_cast %695 : vector<1x8x32xf32> to vector<8x32xf32>
    %697 = vector.shape_cast %694 : vector<8x32xf32> to vector<1x8x32xf32>
    tpu.vector_store %arg5[%c5_127, %c0_128, %c0_129], %697 {strides = array<i32>} : memref<8x8x32xf32, #tpu.memory_space<vmem>>, vector<1x8x32xf32>,
    %cst_130 = arith.constant dense<0.000000e+00> : vector<8x4xf32>
    %698 = tpu.matmul %694, %5, %cst_130 {dimension_numbers = #tpu.dot_dimension_numbers<[1], [0], [0], [1], [0, 0, 1, 1], [], []>} : vector<8x32xf32>, vector<32x4xf32>, vector<8x4xf32> -> vector<8x4xf32>
    %c6 = arith.constant 6 : index
    %c0_131 = arith.constant 0 : index
    %c0_132 = arith.constant 0 : index
    %699 = vector.load %arg1[%c6, %c0_131, %c0_132] : memref<8x8x4xf32, #tpu.memory_space<vmem>>, vector<1x8x4xf32>
    %700 = vector.shape_cast %699 : vector<1x8x4xf32> to vector<8x4xf32>
    %701 = arith.addf %698, %700 : vector<8x4xf32>
    %cst_133 = arith.constant 5.000000e-01 : f32
    %702 = vector.broadcast %cst_133 : f32 to vector<8x4xf32>
    %703 = arith.mulf %702, %701 : vector<8x4xf32>
    %704 = math.cos %703 : vector<8x4xf32>
    %cst_134 = arith.constant 5.000000e-01 : f32
    %705 = vector.broadcast %cst_134 : f32 to vector<8x4xf32>
    %706 = arith.mulf %705, %701 : vector<8x4xf32>
    %707 = math.sin %706 : vector<8x4xf32>
    %cst_135 = arith.constant 0.000000e+00 : f32
    %708 = vector.broadcast %cst_135 : f32 to vector<8x4xf32>
    %cst_136 = arith.constant 0.000000e+00 : f32
    %709 = vector.broadcast %cst_136 : f32 to vector<8x4xf32>
    %710 = arith.subf %709, %707 : vector<8x4xf32>
    %711 = arith.addf %704, %708 : vector<8x4xf32>
    %cst_137 = arith.constant 0.707106769 : f32
    %712 = vector.broadcast %cst_137 : f32 to vector<8x4xf32>
    %713 = arith.mulf %711, %712 : vector<8x4xf32>
    %714 = arith.addf %708, %710 : vector<8x4xf32>
    %cst_138 = arith.constant 0.707106769 : f32
    %715 = vector.broadcast %cst_138 : f32 to vector<8x4xf32>
    %716 = arith.mulf %714, %715 : vector<8x4xf32>
    %717 = arith.subf %704, %708 : vector<8x4xf32>
    %cst_139 = arith.constant 0.707106769 : f32
    %718 = vector.broadcast %cst_139 : f32 to vector<8x4xf32>
    %719 = arith.mulf %717, %718 : vector<8x4xf32>
    %720 = arith.subf %708, %710 : vector<8x4xf32>
    %cst_140 = arith.constant 0.707106769 : f32
    %721 = vector.broadcast %cst_140 : f32 to vector<8x4xf32>
    %722 = arith.mulf %720, %721 : vector<8x4xf32>
    %723 = vector.extract_strided_slice %701 {offsets = [0, 0], sizes = [1, 4], strides = [1, 1]} : vector<8x4xf32> to vector<1x4xf32>
    %724 = arith.mulf %723, %723 : vector<1x4xf32>
    %cst_141 = arith.constant 1.000000e+00 : f32
    %725 = vector.broadcast %cst_141 : f32 to vector<1x4xf32>
    %726 = arith.addf %725, %724 : vector<1x4xf32>
    %727 = math.rsqrt %726 : vector<1x4xf32>
    %cst_142 = arith.constant 1.000000e+00 : f32
    %728 = vector.broadcast %cst_142 : f32 to vector<1x4xf32>
    %729 = arith.addf %728, %727 : vector<1x4xf32>
    %cst_143 = arith.constant 5.000000e-01 : f32
    %730 = vector.broadcast %cst_143 : f32 to vector<1x4xf32>
    %731 = arith.mulf %730, %729 : vector<1x4xf32>
    %732 = math.sqrt %731 : vector<1x4xf32>
    %cst_144 = arith.constant 5.000000e-01 : f32
    %733 = vector.broadcast %cst_144 : f32 to vector<1x4xf32>
    %734 = arith.mulf %733, %723 : vector<1x4xf32>
    %735 = arith.mulf %734, %727 : vector<1x4xf32>
    %736 = tpu.reciprocal %732 {approx = true} : vector<1x4xf32> -> vector<1x4xf32>
    %737 = arith.mulf %735, %736 : vector<1x4xf32>
    %738 = vector.broadcast %732 : vector<1x4xf32> to vector<8x4xf32>
    %739 = arith.mulf %738, %713 : vector<8x4xf32>
    %740 = vector.broadcast %737 : vector<1x4xf32> to vector<8x4xf32>
    %741 = arith.mulf %740, %719 : vector<8x4xf32>
    %742 = arith.subf %739, %741 : vector<8x4xf32>
    %743 = vector.broadcast %732 : vector<1x4xf32> to vector<8x4xf32>
    %744 = arith.mulf %743, %716 : vector<8x4xf32>
    %745 = vector.broadcast %737 : vector<1x4xf32> to vector<8x4xf32>
    %746 = arith.mulf %745, %722 : vector<8x4xf32>
    %747 = arith.subf %744, %746 : vector<8x4xf32>
    %748 = vector.broadcast %737 : vector<1x4xf32> to vector<8x4xf32>
    %749 = arith.mulf %748, %713 : vector<8x4xf32>
    %750 = vector.broadcast %732 : vector<1x4xf32> to vector<8x4xf32>
    %751 = arith.mulf %750, %719 : vector<8x4xf32>
    %752 = arith.addf %749, %751 : vector<8x4xf32>
    %753 = vector.broadcast %737 : vector<1x4xf32> to vector<8x4xf32>
    %754 = arith.mulf %753, %716 : vector<8x4xf32>
    %755 = vector.broadcast %732 : vector<1x4xf32> to vector<8x4xf32>
    %756 = arith.mulf %755, %722 : vector<8x4xf32>
    %757 = arith.addf %754, %756 : vector<8x4xf32>
    %758 = vector.broadcast %732 : vector<1x4xf32> to vector<8x4xf32>
    %759 = arith.mulf %758, %742 : vector<8x4xf32>
    %760 = vector.broadcast %737 : vector<1x4xf32> to vector<8x4xf32>
    %761 = arith.mulf %760, %747 : vector<8x4xf32>
    %762 = arith.addf %759, %761 : vector<8x4xf32>
    %763 = vector.broadcast %732 : vector<1x4xf32> to vector<8x4xf32>
    %764 = arith.mulf %763, %747 : vector<8x4xf32>
    %765 = vector.broadcast %737 : vector<1x4xf32> to vector<8x4xf32>
    %766 = arith.mulf %765, %742 : vector<8x4xf32>
    %767 = arith.subf %764, %766 : vector<8x4xf32>
    %768 = vector.broadcast %732 : vector<1x4xf32> to vector<8x4xf32>
    %769 = arith.mulf %768, %752 : vector<8x4xf32>
    %770 = vector.broadcast %737 : vector<1x4xf32> to vector<8x4xf32>
    %771 = arith.mulf %770, %757 : vector<8x4xf32>
    %772 = arith.subf %769, %771 : vector<8x4xf32>
    %773 = vector.broadcast %732 : vector<1x4xf32> to vector<8x4xf32>
    %774 = arith.mulf %773, %757 : vector<8x4xf32>
    %775 = vector.broadcast %737 : vector<1x4xf32> to vector<8x4xf32>
    %776 = arith.mulf %775, %752 : vector<8x4xf32>
    %777 = arith.addf %774, %776 : vector<8x4xf32>
    %778 = arith.mulf %762, %762 : vector<8x4xf32>
    %779 = arith.mulf %767, %767 : vector<8x4xf32>
    %780 = arith.addf %778, %779 : vector<8x4xf32>
    %781 = arith.mulf %772, %772 : vector<8x4xf32>
    %782 = arith.subf %780, %781 : vector<8x4xf32>
    %783 = arith.mulf %777, %777 : vector<8x4xf32>
    %784 = arith.subf %782, %783 : vector<8x4xf32>
    %785 = arith.mulf %762, %772 : vector<8x4xf32>
    %786 = arith.mulf %767, %777 : vector<8x4xf32>
    %787 = arith.addf %785, %786 : vector<8x4xf32>
    %788 = arith.mulf %762, %777 : vector<8x4xf32>
    %789 = arith.mulf %767, %772 : vector<8x4xf32>
    %790 = arith.subf %788, %789 : vector<8x4xf32>
    %791 = tpu.concatenate %784, %787, %790 in 1 : vector<8x4xf32>, vector<8x4xf32>, vector<8x4xf32> -> vector<8x12xf32>
    %cst_145 = arith.constant dense<0.000000e+00> : vector<8x128xf32>
    %792 = tpu.matmul %791, %6, %cst_145 {dimension_numbers = #tpu.dot_dimension_numbers<[1], [0], [0], [1], [0, 0, 1, 1], [], []>} : vector<8x12xf32>, vector<12x128xf32>, vector<8x128xf32> -> vector<8x128xf32>
    %793 = vector.broadcast %7 : vector<1x128xf32> to vector<8x128xf32>
    %794 = arith.addf %792, %793 : vector<8x128xf32>
    %795 = arith.negf %794 : vector<8x128xf32>
    %796 = math.exp %795 : vector<8x128xf32>
    %cst_146 = arith.constant 1.000000e+00 : f32
    %797 = vector.broadcast %cst_146 : f32 to vector<8x128xf32>
    %798 = arith.addf %797, %796 : vector<8x128xf32>
    %799 = arith.divf %797, %798 : vector<8x128xf32>
    %800 = vector.extract_strided_slice %799 {offsets = [0, 0], sizes = [8, 32], strides = [1, 1]} : vector<8x128xf32> to vector<8x32xf32>
    %801 = vector.extract_strided_slice %799 {offsets = [0, 32], sizes = [8, 32], strides = [1, 1]} : vector<8x128xf32> to vector<8x32xf32>
    %802 = vector.extract_strided_slice %794 {offsets = [0, 64], sizes = [8, 32], strides = [1, 1]} : vector<8x128xf32> to vector<8x32xf32>
    %803 = math.tanh %802 : vector<8x32xf32>
    %804 = vector.extract_strided_slice %799 {offsets = [0, 96], sizes = [8, 32], strides = [1, 1]} : vector<8x128xf32> to vector<8x32xf32>
    %805 = arith.mulf %800, %692 : vector<8x32xf32>
    %806 = arith.mulf %801, %803 : vector<8x32xf32>
    %807 = arith.addf %805, %806 : vector<8x32xf32>
    %808 = math.tanh %807 : vector<8x32xf32>
    %809 = arith.mulf %804, %808 : vector<8x32xf32>
    %c6_147 = arith.constant 6 : index
    %c0_148 = arith.constant 0 : index
    %c0_149 = arith.constant 0 : index
    %810 = vector.load %arg5[%c6_147, %c0_148, %c0_149] : memref<8x8x32xf32, #tpu.memory_space<vmem>>, vector<1x8x32xf32>
    %811 = vector.shape_cast %810 : vector<1x8x32xf32> to vector<8x32xf32>
    %812 = vector.shape_cast %809 : vector<8x32xf32> to vector<1x8x32xf32>
    tpu.vector_store %arg5[%c6_147, %c0_148, %c0_149], %812 {strides = array<i32>} : memref<8x8x32xf32, #tpu.memory_space<vmem>>, vector<1x8x32xf32>,
    %cst_150 = arith.constant dense<0.000000e+00> : vector<8x4xf32>
    %813 = tpu.matmul %809, %5, %cst_150 {dimension_numbers = #tpu.dot_dimension_numbers<[1], [0], [0], [1], [0, 0, 1, 1], [], []>} : vector<8x32xf32>, vector<32x4xf32>, vector<8x4xf32> -> vector<8x4xf32>
    %c7 = arith.constant 7 : index
    %c0_151 = arith.constant 0 : index
    %c0_152 = arith.constant 0 : index
    %814 = vector.load %arg1[%c7, %c0_151, %c0_152] : memref<8x8x4xf32, #tpu.memory_space<vmem>>, vector<1x8x4xf32>
    %815 = vector.shape_cast %814 : vector<1x8x4xf32> to vector<8x4xf32>
    %816 = arith.addf %813, %815 : vector<8x4xf32>
    %cst_153 = arith.constant 5.000000e-01 : f32
    %817 = vector.broadcast %cst_153 : f32 to vector<8x4xf32>
    %818 = arith.mulf %817, %816 : vector<8x4xf32>
    %819 = math.cos %818 : vector<8x4xf32>
    %cst_154 = arith.constant 5.000000e-01 : f32
    %820 = vector.broadcast %cst_154 : f32 to vector<8x4xf32>
    %821 = arith.mulf %820, %816 : vector<8x4xf32>
    %822 = math.sin %821 : vector<8x4xf32>
    %cst_155 = arith.constant 0.000000e+00 : f32
    %823 = vector.broadcast %cst_155 : f32 to vector<8x4xf32>
    %cst_156 = arith.constant 0.000000e+00 : f32
    %824 = vector.broadcast %cst_156 : f32 to vector<8x4xf32>
    %825 = arith.subf %824, %822 : vector<8x4xf32>
    %826 = arith.addf %819, %823 : vector<8x4xf32>
    %cst_157 = arith.constant 0.707106769 : f32
    %827 = vector.broadcast %cst_157 : f32 to vector<8x4xf32>
    %828 = arith.mulf %826, %827 : vector<8x4xf32>
    %829 = arith.addf %823, %825 : vector<8x4xf32>
    %cst_158 = arith.constant 0.707106769 : f32
    %830 = vector.broadcast %cst_158 : f32 to vector<8x4xf32>
    %831 = arith.mulf %829, %830 : vector<8x4xf32>
    %832 = arith.subf %819, %823 : vector<8x4xf32>
    %cst_159 = arith.constant 0.707106769 : f32
    %833 = vector.broadcast %cst_159 : f32 to vector<8x4xf32>
    %834 = arith.mulf %832, %833 : vector<8x4xf32>
    %835 = arith.subf %823, %825 : vector<8x4xf32>
    %cst_160 = arith.constant 0.707106769 : f32
    %836 = vector.broadcast %cst_160 : f32 to vector<8x4xf32>
    %837 = arith.mulf %835, %836 : vector<8x4xf32>
    %838 = vector.extract_strided_slice %816 {offsets = [0, 0], sizes = [1, 4], strides = [1, 1]} : vector<8x4xf32> to vector<1x4xf32>
    %839 = arith.mulf %838, %838 : vector<1x4xf32>
    %cst_161 = arith.constant 1.000000e+00 : f32
    %840 = vector.broadcast %cst_161 : f32 to vector<1x4xf32>
    %841 = arith.addf %840, %839 : vector<1x4xf32>
    %842 = math.rsqrt %841 : vector<1x4xf32>
    %cst_162 = arith.constant 1.000000e+00 : f32
    %843 = vector.broadcast %cst_162 : f32 to vector<1x4xf32>
    %844 = arith.addf %843, %842 : vector<1x4xf32>
    %cst_163 = arith.constant 5.000000e-01 : f32
    %845 = vector.broadcast %cst_163 : f32 to vector<1x4xf32>
    %846 = arith.mulf %845, %844 : vector<1x4xf32>
    %847 = math.sqrt %846 : vector<1x4xf32>
    %cst_164 = arith.constant 5.000000e-01 : f32
    %848 = vector.broadcast %cst_164 : f32 to vector<1x4xf32>
    %849 = arith.mulf %848, %838 : vector<1x4xf32>
    %850 = arith.mulf %849, %842 : vector<1x4xf32>
    %851 = tpu.reciprocal %847 {approx = true} : vector<1x4xf32> -> vector<1x4xf32>
    %852 = arith.mulf %850, %851 : vector<1x4xf32>
    %853 = vector.broadcast %847 : vector<1x4xf32> to vector<8x4xf32>
    %854 = arith.mulf %853, %828 : vector<8x4xf32>
    %855 = vector.broadcast %852 : vector<1x4xf32> to vector<8x4xf32>
    %856 = arith.mulf %855, %834 : vector<8x4xf32>
    %857 = arith.subf %854, %856 : vector<8x4xf32>
    %858 = vector.broadcast %847 : vector<1x4xf32> to vector<8x4xf32>
    %859 = arith.mulf %858, %831 : vector<8x4xf32>
    %860 = vector.broadcast %852 : vector<1x4xf32> to vector<8x4xf32>
    %861 = arith.mulf %860, %837 : vector<8x4xf32>
    %862 = arith.subf %859, %861 : vector<8x4xf32>
    %863 = vector.broadcast %852 : vector<1x4xf32> to vector<8x4xf32>
    %864 = arith.mulf %863, %828 : vector<8x4xf32>
    %865 = vector.broadcast %847 : vector<1x4xf32> to vector<8x4xf32>
    %866 = arith.mulf %865, %834 : vector<8x4xf32>
    %867 = arith.addf %864, %866 : vector<8x4xf32>
    %868 = vector.broadcast %852 : vector<1x4xf32> to vector<8x4xf32>
    %869 = arith.mulf %868, %831 : vector<8x4xf32>
    %870 = vector.broadcast %847 : vector<1x4xf32> to vector<8x4xf32>
    %871 = arith.mulf %870, %837 : vector<8x4xf32>
    %872 = arith.addf %869, %871 : vector<8x4xf32>
    %873 = vector.broadcast %847 : vector<1x4xf32> to vector<8x4xf32>
    %874 = arith.mulf %873, %857 : vector<8x4xf32>
    %875 = vector.broadcast %852 : vector<1x4xf32> to vector<8x4xf32>
    %876 = arith.mulf %875, %862 : vector<8x4xf32>
    %877 = arith.addf %874, %876 : vector<8x4xf32>
    %878 = vector.broadcast %847 : vector<1x4xf32> to vector<8x4xf32>
    %879 = arith.mulf %878, %862 : vector<8x4xf32>
    %880 = vector.broadcast %852 : vector<1x4xf32> to vector<8x4xf32>
    %881 = arith.mulf %880, %857 : vector<8x4xf32>
    %882 = arith.subf %879, %881 : vector<8x4xf32>
    %883 = vector.broadcast %847 : vector<1x4xf32> to vector<8x4xf32>
    %884 = arith.mulf %883, %867 : vector<8x4xf32>
    %885 = vector.broadcast %852 : vector<1x4xf32> to vector<8x4xf32>
    %886 = arith.mulf %885, %872 : vector<8x4xf32>
    %887 = arith.subf %884, %886 : vector<8x4xf32>
    %888 = vector.broadcast %847 : vector<1x4xf32> to vector<8x4xf32>
    %889 = arith.mulf %888, %872 : vector<8x4xf32>
    %890 = vector.broadcast %852 : vector<1x4xf32> to vector<8x4xf32>
    %891 = arith.mulf %890, %867 : vector<8x4xf32>
    %892 = arith.addf %889, %891 : vector<8x4xf32>
    %893 = arith.mulf %877, %877 : vector<8x4xf32>
    %894 = arith.mulf %882, %882 : vector<8x4xf32>
    %895 = arith.addf %893, %894 : vector<8x4xf32>
    %896 = arith.mulf %887, %887 : vector<8x4xf32>
    %897 = arith.subf %895, %896 : vector<8x4xf32>
    %898 = arith.mulf %892, %892 : vector<8x4xf32>
    %899 = arith.subf %897, %898 : vector<8x4xf32>
    %900 = arith.mulf %877, %887 : vector<8x4xf32>
    %901 = arith.mulf %882, %892 : vector<8x4xf32>
    %902 = arith.addf %900, %901 : vector<8x4xf32>
    %903 = arith.mulf %877, %892 : vector<8x4xf32>
    %904 = arith.mulf %882, %887 : vector<8x4xf32>
    %905 = arith.subf %903, %904 : vector<8x4xf32>
    %906 = tpu.concatenate %899, %902, %905 in 1 : vector<8x4xf32>, vector<8x4xf32>, vector<8x4xf32> -> vector<8x12xf32>
    %cst_165 = arith.constant dense<0.000000e+00> : vector<8x128xf32>
    %907 = tpu.matmul %906, %6, %cst_165 {dimension_numbers = #tpu.dot_dimension_numbers<[1], [0], [0], [1], [0, 0, 1, 1], [], []>} : vector<8x12xf32>, vector<12x128xf32>, vector<8x128xf32> -> vector<8x128xf32>
    %908 = vector.broadcast %7 : vector<1x128xf32> to vector<8x128xf32>
    %909 = arith.addf %907, %908 : vector<8x128xf32>
    %910 = arith.negf %909 : vector<8x128xf32>
    %911 = math.exp %910 : vector<8x128xf32>
    %cst_166 = arith.constant 1.000000e+00 : f32
    %912 = vector.broadcast %cst_166 : f32 to vector<8x128xf32>
    %913 = arith.addf %912, %911 : vector<8x128xf32>
    %914 = arith.divf %912, %913 : vector<8x128xf32>
    %915 = vector.extract_strided_slice %914 {offsets = [0, 0], sizes = [8, 32], strides = [1, 1]} : vector<8x128xf32> to vector<8x32xf32>
    %916 = vector.extract_strided_slice %914 {offsets = [0, 32], sizes = [8, 32], strides = [1, 1]} : vector<8x128xf32> to vector<8x32xf32>
    %917 = vector.extract_strided_slice %909 {offsets = [0, 64], sizes = [8, 32], strides = [1, 1]} : vector<8x128xf32> to vector<8x32xf32>
    %918 = math.tanh %917 : vector<8x32xf32>
    %919 = vector.extract_strided_slice %914 {offsets = [0, 96], sizes = [8, 32], strides = [1, 1]} : vector<8x128xf32> to vector<8x32xf32>
    %920 = arith.mulf %915, %807 : vector<8x32xf32>
    %921 = arith.mulf %916, %918 : vector<8x32xf32>
    %922 = arith.addf %920, %921 : vector<8x32xf32>
    %923 = math.tanh %922 : vector<8x32xf32>
    %924 = arith.mulf %919, %923 : vector<8x32xf32>
    %c7_167 = arith.constant 7 : index
    %c0_168 = arith.constant 0 : index
    %c0_169 = arith.constant 0 : index
    %925 = vector.load %arg5[%c7_167, %c0_168, %c0_169] : memref<8x8x32xf32, #tpu.memory_space<vmem>>, vector<1x8x32xf32>
    %926 = vector.shape_cast %925 : vector<1x8x32xf32> to vector<8x32xf32>
    %927 = vector.shape_cast %924 : vector<8x32xf32> to vector<1x8x32xf32>
    tpu.vector_store %arg5[%c7_167, %c0_168, %c0_169], %927 {strides = array<i32>} : memref<8x8x32xf32, #tpu.memory_space<vmem>>, vector<1x8x32xf32>,
    %c0_170 = arith.constant 0 : index
    %c0_171 = arith.constant 0 : index
    %928 = vector.load %arg8[%c0_170, %c0_171] : memref<8x32xf32, #tpu.memory_space<vmem>>, vector<8x32xf32>
    tpu.vector_store %arg8[%c0_170, %c0_171], %924 {strides = array<i32>} : memref<8x32xf32, #tpu.memory_space<vmem>>, vector<8x32xf32>,
    %c0_172 = arith.constant 0 : index
    %c0_173 = arith.constant 0 : index
    %929 = vector.load %arg9[%c0_172, %c0_173] : memref<8x32xf32, #tpu.memory_space<vmem>>, vector<8x32xf32>
    tpu.vector_store %arg9[%c0_172, %c0_173], %922 {strides = array<i32>} : memref<8x32xf32, #tpu.memory_space<vmem>>, vector<8x32xf32>,
    %c0_i32_174 = arith.constant 0 : i32
    %930 = arith.cmpi eq, %arg0, %c0_i32_174 : i32
    %931 = arith.extui %930 : i1 to i32
    %c0_i32_175 = arith.constant 0 : i32
    %932 = arith.cmpi ne, %931, %c0_i32_175 : i32
    scf.if %932 {
      %c0_176 = arith.constant 0 : index
      %c0_177 = arith.constant 0 : index
      %933 = vector.load %arg6[%c0_176, %c0_177] : memref<8x32xf32, #tpu.memory_space<vmem>>, vector<8x32xf32>
      tpu.vector_store %arg6[%c0_176, %c0_177], %924 {strides = array<i32>} : memref<8x32xf32, #tpu.memory_space<vmem>>, vector<8x32xf32>,
      %c0_178 = arith.constant 0 : index
      %c0_179 = arith.constant 0 : index
      %934 = vector.load %arg7[%c0_178, %c0_179] : memref<8x32xf32, #tpu.memory_space<vmem>>, vector<8x32xf32>
      tpu.vector_store %arg7[%c0_178, %c0_179], %922 {strides = array<i32>} : memref<8x32xf32, #tpu.memory_space<vmem>>, vector<8x32xf32>,
    } else {
    }
    return
  }
  func.func @transform_0(%arg0: i32) -> (i32, i32, i32) {
    %c0_i32 = arith.constant 0 : i32
    %c0_i32_0 = arith.constant 0 : i32
    %c0_i32_1 = arith.constant 0 : i32
    return %arg0, %c0_i32, %c0_i32_0 : i32, i32, i32
  }
  func.func @transform_1(%arg0: i32) -> (i32, i32) {
    %c0_i32 = arith.constant 0 : i32
    %c0_i32_0 = arith.constant 0 : i32
    %c0_i32_1 = arith.constant 0 : i32
    return %c0_i32, %c0_i32_0 : i32, i32
  }
  func.func @transform_2(%arg0: i32) -> (i32, i32) {
    %c0_i32 = arith.constant 0 : i32
    %c0_i32_0 = arith.constant 0 : i32
    %c0_i32_1 = arith.constant 0 : i32
    return %c0_i32, %c0_i32_0 : i32, i32
  }
  func.func @transform_3(%arg0: i32) -> (i32, i32) {
    %c0_i32 = arith.constant 0 : i32
    %c0_i32_0 = arith.constant 0 : i32
    %c0_i32_1 = arith.constant 0 : i32
    return %c0_i32, %c0_i32_0 : i32, i32
  }
  func.func @transform_4(%arg0: i32) -> (i32, i32, i32) {
    %c0_i32 = arith.constant 0 : i32
    %c0_i32_0 = arith.constant 0 : i32
    %c0_i32_1 = arith.constant 0 : i32
    return %arg0, %c0_i32, %c0_i32_0 : i32, i32, i32
  }
  func.func @transform_5(%arg0: i32) -> (i32, i32) {
    %c0_i32 = arith.constant 0 : i32
    %c0_i32_0 = arith.constant 0 : i32
    %c0_i32_1 = arith.constant 0 : i32
    return %c0_i32, %c0_i32_0 : i32, i32
  }
  func.func @transform_6(%arg0: i32) -> (i32, i32) {
    %c0_i32 = arith.constant 0 : i32
    %c0_i32_0 = arith.constant 0 : i32
    %c0_i32_1 = arith.constant 0 : i32
    return %c0_i32, %c0_i32_0 : i32, i32
  }
}

</mosaic_0001>

<llo_original>
// kernel: tpu_custom_call.1
$region0: #{tpu_custom_call.1}
  #allocation0 [shape = 'u32[]', space=smem, size = 0x4, offset = 0x4, fixed_abs, tag = 'smem constant byte address 0x4 - core index']
  #allocation1 [shape = 'u32[144,128]{1,0:T(1,128)}', space=vmem, size = 0x12000, scoped, tag = 'internal scratch']
  #allocation2 [shape = 'f32[8,32]{1,0:T(8,128)}', space=vmem, size = 0x1000, scoped, tag = 'scratch operand']
  #allocation3 [shape = 'f32[8,32]{1,0:T(8,128)}', space=vmem, size = 0x1000, scoped, tag = 'scratch operand']
  %s0 = inlined_call_operand.vmem [shape: f32[8,8,4], index: 0, kind: input, shape index: {}]
  %s1 = inlined_call_operand.vmem [shape: f32[32,4], index: 1, kind: input, shape index: {}]
  %s2 = inlined_call_operand.vmem [shape: f32[12,128], index: 2, kind: input, shape index: {}]
  %s3 = inlined_call_operand.vmem [shape: f32[1,128], index: 3, kind: input, shape index: {}]
  %s4 = inlined_call_operand.hbm [shape: f32[8,8,32], index: 4, kind: output, shape index: {0}]
  %s5 = inlined_call_operand.hbm [shape: f32[8,32], index: 5, kind: output, shape index: {1}]
  %s6 = inlined_call_operand.hbm [shape: f32[8,32], index: 6, kind: output, shape index: {2}]
  %7 = xla_tuple %s4, %s5, %s6
  %s8 = sld [smem:[#allocation0]]
  $region50: #{tpu_custom_call.1} parent=0
    _
  %s10 = ssub.s32 1, %s8
  %s11 = scalar_select 0, %s10, %s8
  $region1: #{tpu_custom_call.1} parent=0
    #allocation4 [shape = 'u8[32768]{0}', space=vmem, size = 0x8000, scoped, tag = 'output window, operand 0, single buffered']
    #allocation5 [shape = 's32[1]{0}', space=sflag, size = 0x4, scoped, tag = 'scoped memory for tpu_custom_call.1']
    #allocation6 [shape = 'u8[4096]{0}', space=vmem, size = 0x1000, scoped, tag = 'output window, operand 1, single buffered']
    #allocation7 [shape = 's32[1]{0}', space=sflag, size = 0x4, scoped, tag = 'scoped memory for tpu_custom_call.1']
    #allocation8 [shape = 'u8[4096]{0}', space=vmem, size = 0x1000, scoped, tag = 'output window, operand 2, single buffered']
    %12 = vsyncpa [#allocation5], 0
    %13 = vsyncpa [#allocation7], 0
    // Predicated region
    $region2: #{tpu_custom_call.1} parent=1 // pred_check
      _
    $region3: #{tpu_custom_call.1} parent=1 // pred_check_branch
      %15 = sbr.rel (0) target = $region5
    $region4: #{tpu_custom_call.1} parent=1 // pred_region
      _
    $region5: #{tpu_custom_call.1} parent=1 // pred_fallthru
      _
    // Predicated region
    $region6: #{tpu_custom_call.1} parent=1 // pred_check
      _
    $region7: #{tpu_custom_call.1} parent=1 // pred_check_branch
      %17 = sbr.rel (0) target = $region9
    $region8: #{tpu_custom_call.1} parent=1 // pred_region
      _
    $region9: #{tpu_custom_call.1} parent=1 // pred_fallthru
      _
    // Predicated region
    $region10: #{tpu_custom_call.1} parent=1 // pred_check
      _
    $region11: #{tpu_custom_call.1} parent=1 // pred_check_branch
      %19 = sbr.rel (0) target = $region13
    $region12: #{tpu_custom_call.1} parent=1 // pred_region
      _
    $region13: #{tpu_custom_call.1} parent=1 // pred_fallthru
      _
    // Predicated region
    $region14: #{tpu_custom_call.1} parent=1 // pred_check
      _
    $region15: #{tpu_custom_call.1} parent=1 // pred_check_branch
      %21 = sbr.rel (0) target = $region17
    $region16: #{tpu_custom_call.1} parent=1 // pred_region
      _
    $region17: #{tpu_custom_call.1} parent=1 // pred_fallthru
      _
    %p22 = scmp.eq.s32.totalorder 0, 0
    // Predicated region
    $region18: #{tpu_custom_call.1} parent=1 // pred_check
      %p23 = pneg %p22
    $region19: #{tpu_custom_call.1} parent=1 // pred_check_branch
      %25 = sbr.rel (%p23) target = $region21
    $region20: #{tpu_custom_call.1} parent=1 // pred_region
      %vm26 = vcmask 261120
      %27 = vst.msk [vmem:[#allocation2] sm:$0xff] %vm26, 0.0
      %28 = vst.msk [vmem:[#allocation3] sm:$0xff] %vm26, 0.0
    $region21: #{tpu_custom_call.1} parent=1 // pred_fallthru
      _
    %v29 = vld [vmem:[#allocation2] sm:$0xff]
    %v30 = vld [vmem:[#allocation3] sm:$0xff]
    %v31 = vld [vmem:[%s1] sm:$0xff]
    %v32 = vld [vmem:[%s1 + $0x8] sm:$0xff]
    %v33 = vld [vmem:[%s1 + $0x10] sm:$0xff]
    %v34 = vld [vmem:[%s1 + $0x18] sm:$0xff]
    %v35 = vld [vmem:[%s2] sm:$0xff]
    %v36 = vld [vmem:[%s2 + $0x8] sm:$0xf]
    %v37 = vld [vmem:[%s3] sm:$0x1]
    %v38 = vld [vmem:[%s0] sm:$0xff]
    %vm39 = vcmask 261120
    %v41 = vsel %vm39, %v29, 0
    %43 = vmatprep.subr.mxu0 0.0
    %44 = vmatpush1.msra.mxu0 %v31
    %45 = vmatprep.subr.mxu0 0.0
    %46 = vmatpush1.msra.mxu0 %v32
    %47 = vmatprep.subr.mxu0 0.0
    %48 = vmatpush1.msra.mxu0 %v33
    %49 = vmatprep.subr.mxu0 0.0
    %50 = vmatpush1.msra.mxu0 %v34
    %51 = vmatprep.subr.mxu0 0.0
    %52 = vmatpush1.msra.mxu0 0.0
    %53 = vmatprep.subr.mxu0 0.0
    %54 = vmatpush1.msra.mxu0 0.0
    %55 = vmatprep.subr.mxu0 0.0
    %56 = vmatpush1.msra.mxu0 0.0
    %57 = vmatprep.subr.mxu0 0.0
    %58 = vmatpush1.msra.mxu0 0.0
    %59 = vmatprep.subr.mxu0 0.0
    %60 = vmatpush1.msra.mxu0 0.0
    %61 = vmatprep.subr.mxu0 0.0
    %62 = vmatpush1.msra.mxu0 0.0
    %63 = vmatprep.subr.mxu0 0.0
    %64 = vmatpush1.msra.mxu0 0.0
    %65 = vmatprep.subr.mxu0 0.0
    %66 = vmatpush1.msra.mxu0 0.0
    %67 = vmatprep.subr.mxu0 0.0
    %68 = vmatpush1.msra.mxu0 0.0
    %69 = vmatprep.subr.mxu0 0.0
    %70 = vmatpush1.msra.mxu0 0.0
    %71 = vmatprep.subr.mxu0 0.0
    %72 = vmatpush1.msra.mxu0 0.0
    %73 = vmatprep.subr.mxu0 0.0
    %74 = vmatpush1.msra.mxu0 0.0
    %75 = vmatprep.subr.mxu0 0.0
    %76 = vmatpush1.msra.mxu0 0.0
    %77 = vmatprep.subr.mxu0 0.0
    %78 = vmatpush1.msra.mxu0 0.0
    %79 = vmatprep.subr.mxu0 0.0
    %80 = vmatpush1.msra.mxu0 0.0
    %81 = vmatprep.subr.mxu0 0.0
    %82 = vmatpush1.msra.mxu0 0.0
    %83 = vmatprep.subr.mxu0 0.0
    %84 = vmatpush1.msra.mxu0 0.0
    %85 = vmatprep.subr.mxu0 0.0
    %86 = vmatpush1.msra.mxu0 0.0
    %87 = vmatprep.subr.mxu0 0.0
    %88 = vmatpush1.msra.mxu0 0.0
    %89 = vmatprep.subr.mxu0 0.0
    %90 = vmatpush1.msra.mxu0 0.0
    %91 = vmatprep.subr.mxu0 0.0
    %92 = vmatpush1.msra.mxu0 0.0
    %93 = vmatprep.subr.mxu0 0.0
    %94 = vmatpush1.msra.mxu0 0.0
    %95 = vmatprep.subr.mxu0 0.0
    %96 = vmatpush1.msra.mxu0 0.0
    %97 = vmatprep.subr.mxu0 0.0
    %98 = vmatpush1.msra.mxu0 0.0
    %99 = vmatprep.subr.mxu0 0.0
    %100 = vmatpush1.msra.mxu0 0.0
    %101 = vmatprep.subr.mxu0 0.0
    %102 = vmatpush1.msra.mxu0 0.0
    %103 = vmatprep.subr.mxu0 0.0
    %104 = vmatpush1.msra.mxu0 0.0
    %105 = vmatprep.subr.mxu0 0.0
    %106 = vmatpush1.msra.mxu0 0.0
    %107 = vmatprep.mubr.f32.mxu0 0.0
    %108 = vmatmul.mubr.f32.gmra.mrb[0].mxu0 %v41
    %v109 = vpop.f32.mrb[0].mxu0
    %v110 = vadd.f32 %v38, %v109
    %v111 = vpop.f32.mrb[0].mxu0
    %112 = vdwg.mxu0
    %v113 = vmul.f32 %v110, 0.5
    %v114 = vand.u32 2147483647, %v113
    %vm115 = vcmp.le.f32.partialorder %v114, 0.7853982
    %vm116 = vcmp.lt.s32.totalorder %v113, 0
    %v117 = vand.u32 %v113, 2139095040
    %v118 = vshrl.u32 %v117, 23
    %v119 = vsub.s32 %v118, 127
    %v120 = vand.u32 2147483647, %v113
    %v121 = vand.u32 %v120, 8388607
    %v122 = vor.u32 %v121, 8388608
    %v123 = vsub.s32 0, %v122
    %v124 = vadd.s32 %v119, 1
    %vm125 = vcmp.gt.s32.totalorder %v124, 0
    %v126 = vsel %vm125, %v124, 0
    %v127 = vshrl.u32 %v126, 5
    %v128 = vand.u32 %v126, 31
    %v129 = vsub.s32 32, %v128
    %v130 = vshrl.u32 683565275, %v129
    %v131 = vshll.u32 683565275, %v128
    %v132 = vshrl.u32 2475754826, %v129
    %v133 = vor.u32 %v131, %v132
    %v134 = vshll.u32 2475754826, %v128
    %v135 = vshrl.u32 2131351028, %v129
    %v136 = vor.u32 %v134, %v135
    %v137 = vshll.u32 2131351028, %v128
    %v138 = vshrl.u32 2102212464, %v129
    %v139 = vor.u32 %v137, %v138
    %v140 = vshll.u32 2102212464, %v128
    %v141 = vshrl.u32 920167782, %v129
    %v142 = vor.u32 %v140, %v141
    %v143 = vshll.u32 920167782, %v128
    %v144 = vshrl.u32 1326507024, %v129
    %v145 = vor.u32 %v143, %v144
    %vm146 = vcmp.lt.s32.totalorder %v127, 1
    %vm147 = vcmp.lt.s32.totalorder %v127, 2
    %vm148 = vcmp.lt.s32.totalorder %v127, 3
    %vm149 = vcmp.lt.s32.totalorder %v127, 4
    %v150 = vsel %vm146, %v130, %v133
    %v151 = vsel %vm149, %v139, 2102212464
    %v152 = vsel %vm148, %v136, %v151
    %v153 = vsel %vm147, %v150, %v152
    %v154 = vsel %vm146, %v133, %v136
    %v155 = vsel %vm149, %v142, 920167782
    %v156 = vsel %vm148, %v139, %v155
    %v157 = vsel %vm147, %v154, %v156
    %v158 = vsel %vm146, %v136, %v139
    %v159 = vsel %vm149, %v145, 1326507024
    %v160 = vsel %vm148, %v142, %v159
    %v161 = vsel %vm147, %v158, %v160
    %v162 = vshll.u32 %v122, 8
    %v163 = vmul.u32.u64.compose %v162, %v161
    %v164 = vextract.low.u32 %v163
    %v165 = vextract.high.u32 %v163
    %v166 = vmul.u32.u64.compose %v162, %v157
    %v167 = vextract.low.u32 %v166
    %v168 = vextract.high.u32 %v166
    %v169 = vmul.u32 %v162, %v153
    %v170 = vadd.s32 %v165, %v167
    %vm171 = vc.u32 %v165, %v167
    %v172 = vadd.s32 %v168, 1
    %v173 = vsel %vm171, %v172, %v168
    %v174 = vadd.s32 %v169, %v173
    %v175 = vadd.s32 %v174, 536870912
    %v176 = vshrl.u32 %v175, 30
    %v177 = vshll.u32 %v176, 30
    %v178 = vsub.s32 %v174, %v177
    %vm179 = vcmp.lt.s32.totalorder %v178, 0
    %v180 = vsub.s32 0, %v178
    %v181 = vsel %vm179, %v180, %v178
    %v182 = vclz %v181
    %v183 = vsub.s32 %v182, 2
    %vm184 = vcmp.gt.s32.totalorder 0, %v183
    %v185 = vsel %vm184, 0, %v183
    %v186 = vsub.s32 32, %v185
    %v187 = vshll.u32 %v178, %v185
    %v188 = vshrl.u32 %v170, %v186
    %v189 = vor.u32 %v187, %v188
    %v190 = vsub.s32 4294967266, %v185
    %v191 = vadd.s32 %v190, 127
    %v192 = vshll.u32 %v191, 23
    %v193 = vor.u32 4788187, %v192
    %v194 = vand.u32 2147483647, %v193
    %v196 = vcvt.s32.f32 %v189
    %v197 = vmul.f32 %v196, %v194
    %v198 = vxor.u32 %v197, 2147483648
    %v199 = vsel %vm116, %v198, %v197
    %v200 = vsub.s32 4, %v176
    %v201 = vsel %vm116, %v200, %v176
    %v202 = vsel %vm115, %v113, %v199
    %v203 = vsel %vm115, 0, %v201
    %v204 = vcosq.f32.pop %v202
    %v205 = vsinq.f32.pop %v202
    %vm206 = vweird.f32 %v113
    %v207 = vand.u32 %v203, 3
    %vm208 = vcmp.lt.s32.totalorder %v207, 2
    %vm209 = vcmp.eq.s32.totalorder %v207, 0
    %v210 = vxor.u32 %v205, 2147483648
    %v211 = vsel %vm209, %v204, %v210
    %vm212 = vcmp.eq.s32.totalorder %v207, 2
    %v213 = vxor.u32 %v204, 2147483648
    %v214 = vsel %vm212, %v213, %v205
    %v215 = vsel %vm208, %v211, %v214
    %v216 = vsel %vm206, nan, %v215
    %v217 = vand.u32 2147483647, %v113
    %vm218 = vcmp.le.f32.partialorder %v217, 0.7853982
    %vm219 = vcmp.lt.s32.totalorder %v113, 0
    %v220 = vand.u32 %v113, 2139095040
    %v221 = vshrl.u32 %v220, 23
    %v222 = vsub.s32 %v221, 127
    %v223 = vand.u32 2147483647, %v113
    %v224 = vand.u32 %v223, 8388607
    %v225 = vor.u32 %v224, 8388608
    %v226 = vsub.s32 0, %v225
    %v227 = vadd.s32 %v222, 1
    %vm228 = vcmp.gt.s32.totalorder %v227, 0
    %v229 = vsel %vm228, %v227, 0
    %v230 = vshrl.u32 %v229, 5
    %v231 = vand.u32 %v229, 31
    %v232 = vsub.s32 32, %v231
    %v233 = vshrl.u32 683565275, %v232
    %v234 = vshll.u32 683565275, %v231
    %v235 = vshrl.u32 2475754826, %v232
    %v236 = vor.u32 %v234, %v235
    %v237 = vshll.u32 2475754826, %v231
    %v238 = vshrl.u32 2131351028, %v232
    %v239 = vor.u32 %v237, %v238
    %v240 = vshll.u32 2131351028, %v231
    %v241 = vshrl.u32 2102212464, %v232
    %v242 = vor.u32 %v240, %v241
    %v243 = vshll.u32 2102212464, %v231
    %v244 = vshrl.u32 920167782, %v232
    %v245 = vor.u32 %v243, %v244
    %v246 = vshll.u32 920167782, %v231
    %v247 = vshrl.u32 1326507024, %v232
    %v248 = vor.u32 %v246, %v247
    %vm249 = vcmp.lt.s32.totalorder %v230, 1
    %vm250 = vcmp.lt.s32.totalorder %v230, 2
    %vm251 = vcmp.lt.s32.totalorder %v230, 3
    %vm252 = vcmp.lt.s32.totalorder %v230, 4
    %v253 = vsel %vm249, %v233, %v236
    %v254 = vsel %vm252, %v242, 2102212464
    %v255 = vsel %vm251, %v239, %v254
    %v256 = vsel %vm250, %v253, %v255
    %v257 = vsel %vm249, %v236, %v239
    %v258 = vsel %vm252, %v245, 920167782
    %v259 = vsel %vm251, %v242, %v258
    %v260 = vsel %vm250, %v257, %v259
    %v261 = vsel %vm249, %v239, %v242
    %v262 = vsel %vm252, %v248, 1326507024
    %v263 = vsel %vm251, %v245, %v262
    %v264 = vsel %vm250, %v261, %v263
    %v265 = vshll.u32 %v225, 8
    %v266 = vmul.u32.u64.compose %v265, %v264
    %v267 = vextract.low.u32 %v266
    %v268 = vextract.high.u32 %v266
    %v269 = vmul.u32.u64.compose %v265, %v260
    %v270 = vextract.low.u32 %v269
    %v271 = vextract.high.u32 %v269
    %v272 = vmul.u32 %v265, %v256
    %v273 = vadd.s32 %v268, %v270
    %vm274 = vc.u32 %v268, %v270
    %v275 = vadd.s32 %v271, 1
    %v276 = vsel %vm274, %v275, %v271
    %v277 = vadd.s32 %v272, %v276
    %v278 = vadd.s32 %v277, 536870912
    %v279 = vshrl.u32 %v278, 30
    %v280 = vshll.u32 %v279, 30
    %v281 = vsub.s32 %v277, %v280
    %vm282 = vcmp.lt.s32.totalorder %v281, 0
    %v283 = vsub.s32 0, %v281
    %v284 = vsel %vm282, %v283, %v281
    %v285 = vclz %v284
    %v286 = vsub.s32 %v285, 2
    %vm287 = vcmp.gt.s32.totalorder 0, %v286
    %v288 = vsel %vm287, 0, %v286
    %v289 = vsub.s32 32, %v288
    %v290 = vshll.u32 %v281, %v288
    %v291 = vshrl.u32 %v273, %v289
    %v292 = vor.u32 %v290, %v291
    %v293 = vsub.s32 4294967266, %v288
    %v294 = vadd.s32 %v293, 127
    %v295 = vshll.u32 %v294, 23
    %v296 = vor.u32 4788187, %v295
    %v297 = vand.u32 2147483647, %v296
    %v299 = vcvt.s32.f32 %v292
    %v300 = vmul.f32 %v299, %v297
    %v301 = vxor.u32 %v300, 2147483648
    %v302 = vsel %vm219, %v301, %v300
    %v303 = vsub.s32 4, %v279
    %v304 = vsel %vm219, %v303, %v279
    %v305 = vsel %vm218, %v113, %v302
    %v306 = vsel %vm218, 0, %v304
    %v307 = vcosq.f32.pop %v305
    %v308 = vsinq.f32.pop %v305
    %vm309 = vweird.f32 %v113
    %v310 = vadd.s32 %v306, 3
    %v311 = vand.u32 %v310, 3
    %vm312 = vcmp.lt.s32.totalorder %v311, 2
    %vm313 = vcmp.eq.s32.totalorder %v311, 0
    %v314 = vxor.u32 %v308, 2147483648
    %v315 = vsel %vm313, %v307, %v314
    %vm316 = vcmp.eq.s32.totalorder %v311, 2
    %v317 = vxor.u32 %v307, 2147483648
    %v318 = vsel %vm316, %v317, %v308
    %v319 = vsel %vm312, %v315, %v318
    %v320 = vsel %vm309, nan, %v319
    %v321 = vsub.f32 0.0, %v320
    %v322 = vadd.f32 %v216, 0.0
    %v323 = vmul.f32 %v322, 0.70710677
    %v324 = vadd.f32 %v321, 0.0
    %v325 = vmul.f32 %v324, 0.70710677
    %v326 = vmul.f32 %v216, 0.70710677
    %v327 = vsub.f32 0.0, %v321
    %v328 = vmul.f32 %v327, 0.70710677
    %v329 = vmul.f32 %v110, %v110
    %v330 = vadd.f32 %v329, 1.0
    %v331 = vrsqrt.pop %v330
    %v332 = vadd.f32 %v331, 1.0
    %v333 = vmul.f32 %v332, 0.5
    %v334 = vrsqrt.pop %v333
    %v335 = vmul.f32 %v333, %v334
    %vm336 = vcmp.eq.f32.partialorder %v333, inf
    %v337 = vsel %vm336, %v333, %v335
    %vm338 = vcmp.eq.f32.partialorder %v333, 0.0
    %v339 = vand.u32 %v333, 2147483648
    %v340 = vsel %vm338, %v339, %v337
    %v341 = vmul.f32 %v113, %v331
    %v342 = vrcp.pop %v340
    %v343 = vmul.f32 %v341, %v342
    %v344 = vlaneseq
    %v345 = vshrl.u32 %v344, 7
    %v346 = vsub.s32 0, %v345
    %v347 = vrot.slane %v340, %v346
    %v348 = vmul.f32 %v347, %v323
    %v349 = vlaneseq
    %v350 = vshrl.u32 %v349, 7
    %v351 = vsub.s32 0, %v350
    %v352 = vrot.slane %v343, %v351
    %v353 = vmul.f32 %v352, %v326
    %v354 = vsub.f32 %v348, %v353
    %v355 = vmul.f32 %v347, %v325
    %v356 = vmul.f32 %v352, %v328
    %v357 = vsub.f32 %v355, %v356
    %v358 = vmul.f32 %v352, %v323
    %v359 = vmul.f32 %v347, %v326
    %v360 = vadd.f32 %v358, %v359
    %v361 = vmul.f32 %v352, %v325
    %v362 = vmul.f32 %v347, %v328
    %v363 = vadd.f32 %v361, %v362
    %v364 = vmul.f32 %v347, %v354
    %v365 = vmul.f32 %v352, %v357
    %v366 = vadd.f32 %v364, %v365
    %v367 = vmul.f32 %v347, %v357
    %v368 = vmul.f32 %v352, %v354
    %v369 = vsub.f32 %v367, %v368
    %v370 = vmul.f32 %v347, %v360
    %v371 = vmul.f32 %v352, %v363
    %v372 = vsub.f32 %v370, %v371
    %v373 = vmul.f32 %v347, %v363
    %v374 = vmul.f32 %v352, %v360
    %v375 = vadd.f32 %v373, %v374
    %v376 = vmul.f32 %v366, %v366
    %v377 = vmul.f32 %v369, %v369
    %v378 = vadd.f32 %v376, %v377
    %v379 = vmul.f32 %v372, %v372
    %v380 = vsub.f32 %v378, %v379
    %v381 = vmul.f32 %v375, %v375
    %v382 = vsub.f32 %v380, %v381
    %v383 = vmul.f32 %v366, %v372
    %v384 = vmul.f32 %v369, %v375
    %v385 = vadd.f32 %v383, %v384
    %v386 = vmul.f32 %v366, %v375
    %v387 = vmul.f32 %v369, %v372
    %v388 = vsub.f32 %v386, %v387
    %390 = vrot.lane.b32.xlu0 %v385, 4
    %v391 = vpop.permute.xlu0 %390
    %394 = vrot.lane.b32.xlu0 %v388, 8
    %v395 = vpop.permute.xlu0 %394
    %vm397 = vcmask 31744
    %v398 = vsel %vm397, %v382, %v391
    %vm399 = vcmask 64512
    %v400 = vsel %vm399, %v398, %v395
    %v402 = vlaneseq
    %v403 = vshrl.u32 %v402, 7
    %v404 = vsub.s32 0, %v403
    %v405 = vrot.slane %v37, %v404
    %vm407 = vcmask 97280
    %v409 = vsel %vm407, %v400, 0
    %vm411 = vcmask 1043456
    %v413 = vsel %vm411, %v36, 0
    %415 = vmatprep.subr.mxu0 0.0
    %416 = vmatpush1.msra.mxu0 %v35
    %417 = vmatprep.subr.mxu0 0.0
    %418 = vmatpush1.msra.mxu0 %v413
    %419 = vmatprep.subr.mxu0 0.0
    %420 = vmatpush1.msra.mxu0 0.0
    %421 = vmatprep.subr.mxu0 0.0
    %422 = vmatpush1.msra.mxu0 0.0
    %423 = vmatprep.subr.mxu0 0.0
    %424 = vmatpush1.msra.mxu0 0.0
    %425 = vmatprep.subr.mxu0 0.0
    %426 = vmatpush1.msra.mxu0 0.0
    %427 = vmatprep.subr.mxu0 0.0
    %428 = vmatpush1.msra.mxu0 0.0
    %429 = vmatprep.subr.mxu0 0.0
    %430 = vmatpush1.msra.mxu0 0.0
    %431 = vmatprep.subr.mxu0 0.0
    %432 = vmatpush1.msra.mxu0 0.0
    %433 = vmatprep.subr.mxu0 0.0
    %434 = vmatpush1.msra.mxu0 0.0
    %435 = vmatprep.subr.mxu0 0.0
    %436 = vmatpush1.msra.mxu0 0.0
    %437 = vmatprep.subr.mxu0 0.0
    %438 = vmatpush1.msra.mxu0 0.0
    %439 = vmatprep.subr.mxu0 0.0
    %440 = vmatpush1.msra.mxu0 0.0
    %441 = vmatprep.subr.mxu0 0.0
    %442 = vmatpush1.msra.mxu0 0.0
    %443 = vmatprep.subr.mxu0 0.0
    %444 = vmatpush1.msra.mxu0 0.0
    %445 = vmatprep.subr.mxu0 0.0
    %446 = vmatpush1.msra.mxu0 0.0
    %447 = vmatprep.subr.mxu0 0.0
    %448 = vmatpush1.msra.mxu0 0.0
    %449 = vmatprep.subr.mxu0 0.0
    %450 = vmatpush1.msra.mxu0 0.0
    %451 = vmatprep.subr.mxu0 0.0
    %452 = vmatpush1.msra.mxu0 0.0
    %453 = vmatprep.subr.mxu0 0.0
    %454 = vmatpush1.msra.mxu0 0.0
    %455 = vmatprep.subr.mxu0 0.0
    %456 = vmatpush1.msra.mxu0 0.0
    %457 = vmatprep.subr.mxu0 0.0
    %458 = vmatpush1.msra.mxu0 0.0
    %459 = vmatprep.subr.mxu0 0.0
    %460 = vmatpush1.msra.mxu0 0.0
    %461 = vmatprep.subr.mxu0 0.0
    %462 = vmatpush1.msra.mxu0 0.0
    %463 = vmatprep.subr.mxu0 0.0
    %464 = vmatpush1.msra.mxu0 0.0
    %465 = vmatprep.subr.mxu0 0.0
    %466 = vmatpush1.msra.mxu0 0.0
    %467 = vmatprep.subr.mxu0 0.0
    %468 = vmatpush1.msra.mxu0 0.0
    %469 = vmatprep.subr.mxu0 0.0
    %470 = vmatpush1.msra.mxu0 0.0
    %471 = vmatprep.subr.mxu0 0.0
    %472 = vmatpush1.msra.mxu0 0.0
    %473 = vmatprep.subr.mxu0 0.0
    %474 = vmatpush1.msra.mxu0 0.0
    %475 = vmatprep.subr.mxu0 0.0
    %476 = vmatpush1.msra.mxu0 0.0
    %477 = vmatprep.subr.mxu0 0.0
    %478 = vmatpush1.msra.mxu0 0.0
    %479 = vmatprep.mubr.f32.mxu0 0.0
    %480 = vmatmul.mubr.f32.gmra.mrb[0].mxu0 %v409
    %v481 = vpop.f32.mrb[0].mxu0
    %v482 = vadd.f32 %v405, %v481
    %v483 = vpop.f32.mrb[0].mxu0
    %484 = vdwg.mxu0
    %v485 = vxor.u32 %v482, 2147483648
    %v486 = vmul.f32 %v485, 1.442695
    %v487 = vpow.pop %v486
    %v488 = vadd.f32 %v487, 1.0
    %v489 = vrcp.pop %v488
    %v490 = vmul.f32 1.0, %v489
    %v491 = vtanh.pop %v482
    %v492 = vmul.f32 %v490, %v30
    %494 = vrot.lane.b32.xlu0 %v491, 96
    %v495 = vpop.permute.xlu0 %494
    %v497 = vmul.f32 %v490, %v495
    %499 = vrot.lane.b32.xlu0 %v497, 96
    %v500 = vpop.permute.xlu0 %499
    %v502 = vadd.f32 %v492, %v500
    %v503 = vtanh.pop %v502
    %505 = vrot.lane.b32.xlu0 %v503, 96
    %v506 = vpop.permute.xlu0 %505
    %v508 = vmul.f32 %v490, %v506
    %510 = vrot.lane.b32.xlu0 %v508, 32
    %v511 = vpop.permute.xlu0 %510
    %513 = vst.msk [vmem:[#allocation4] sm:$0xff] %vm39, %v511
    %s514 = scalar_lea.vmem %s0, 8
    %v515 = vld [vmem:[%s514] sm:$0xff]
    %v516 = vsel %vm39, %v511, 0
    %518 = vmatprep.subr.mxu0 0.0
    %519 = vmatpush1.msra.mxu0 %v31
    %520 = vmatprep.subr.mxu0 0.0
    %521 = vmatpush1.msra.mxu0 %v32
    %522 = vmatprep.subr.mxu0 0.0
    %523 = vmatpush1.msra.mxu0 %v33
    %524 = vmatprep.subr.mxu0 0.0
    %525 = vmatpush1.msra.mxu0 %v34
    %526 = vmatprep.subr.mxu0 0.0
    %527 = vmatpush1.msra.mxu0 0.0
    %528 = vmatprep.subr.mxu0 0.0
    %529 = vmatpush1.msra.mxu0 0.0
    %530 = vmatprep.subr.mxu0 0.0
    %531 = vmatpush1.msra.mxu0 0.0
    %532 = vmatprep.subr.mxu0 0.0
    %533 = vmatpush1.msra.mxu0 0.0
    %534 = vmatprep.subr.mxu0 0.0
    %535 = vmatpush1.msra.mxu0 0.0
    %536 = vmatprep.subr.mxu0 0.0
    %537 = vmatpush1.msra.mxu0 0.0
    %538 = vmatprep.subr.mxu0 0.0
    %539 = vmatpush1.msra.mxu0 0.0
    %540 = vmatprep.subr.mxu0 0.0
    %541 = vmatpush1.msra.mxu0 0.0
    %542 = vmatprep.subr.mxu0 0.0
    %543 = vmatpush1.msra.mxu0 0.0
    %544 = vmatprep.subr.mxu0 0.0
    %545 = vmatpush1.msra.mxu0 0.0
    %546 = vmatprep.subr.mxu0 0.0
    %547 = vmatpush1.msra.mxu0 0.0
    %548 = vmatprep.subr.mxu0 0.0
    %549 = vmatpush1.msra.mxu0 0.0
    %550 = vmatprep.subr.mxu0 0.0
    %551 = vmatpush1.msra.mxu0 0.0
    %552 = vmatprep.subr.mxu0 0.0
    %553 = vmatpush1.msra.mxu0 0.0
    %554 = vmatprep.subr.mxu0 0.0
    %555 = vmatpush1.msra.mxu0 0.0
    %556 = vmatprep.subr.mxu0 0.0
    %557 = vmatpush1.msra.mxu0 0.0
    %558 = vmatprep.subr.mxu0 0.0
    %559 = vmatpush1.msra.mxu0 0.0
    %560 = vmatprep.subr.mxu0 0.0
    %561 = vmatpush1.msra.mxu0 0.0
    %562 = vmatprep.subr.mxu0 0.0
    %563 = vmatpush1.msra.mxu0 0.0
    %564 = vmatprep.subr.mxu0 0.0
    %565 = vmatpush1.msra.mxu0 0.0
    %566 = vmatprep.subr.mxu0 0.0
    %567 = vmatpush1.msra.mxu0 0.0
    %568 = vmatprep.subr.mxu0 0.0
    %569 = vmatpush1.msra.mxu0 0.0
    %570 = vmatprep.subr.mxu0 0.0
    %571 = vmatpush1.msra.mxu0 0.0
    %572 = vmatprep.subr.mxu0 0.0
    %573 = vmatpush1.msra.mxu0 0.0
    %574 = vmatprep.subr.mxu0 0.0
    %575 = vmatpush1.msra.mxu0 0.0
    %576 = vmatprep.subr.mxu0 0.0
    %577 = vmatpush1.msra.mxu0 0.0
    %578 = vmatprep.subr.mxu0 0.0
    %579 = vmatpush1.msra.mxu0 0.0
    %580 = vmatprep.subr.mxu0 0.0
    %581 = vmatpush1.msra.mxu0 0.0
    %582 = vmatprep.mubr.f32.mxu0 0.0
    %583 = vmatmul.mubr.f32.gmra.mrb[0].mxu0 %v516
    %v584 = vpop.f32.mrb[0].mxu0
    %v585 = vadd.f32 %v515, %v584
    %v586 = vpop.f32.mrb[0].mxu0
    %587 = vdwg.mxu0
    %v588 = vmul.f32 %v585, 0.5
    %v589 = vand.u32 2147483647, %v588
    %vm590 = vcmp.le.f32.partialorder %v589, 0.7853982
    %vm591 = vcmp.lt.s32.totalorder %v588, 0
    %v592 = vand.u32 %v588, 2139095040
    %v593 = vshrl.u32 %v592, 23
    %v594 = vsub.s32 %v593, 127
    %v595 = vand.u32 2147483647, %v588
    %v596 = vand.u32 %v595, 8388607
    %v597 = vor.u32 %v596, 8388608
    %v598 = vsub.s32 0, %v597
    %v599 = vadd.s32 %v594, 1
    %vm600 = vcmp.gt.s32.totalorder %v599, 0
    %v601 = vsel %vm600, %v599, 0
    %v602 = vshrl.u32 %v601, 5
    %v603 = vand.u32 %v601, 31
    %v604 = vsub.s32 32, %v603
    %v605 = vshrl.u32 683565275, %v604
    %v606 = vshll.u32 683565275, %v603
    %v607 = vshrl.u32 2475754826, %v604
    %v608 = vor.u32 %v606, %v607
    %v609 = vshll.u32 2475754826, %v603
    %v610 = vshrl.u32 2131351028, %v604
    %v611 = vor.u32 %v609, %v610
    %v612 = vshll.u32 2131351028, %v603
    %v613 = vshrl.u32 2102212464, %v604
    %v614 = vor.u32 %v612, %v613
    %v615 = vshll.u32 2102212464, %v603
    %v616 = vshrl.u32 920167782, %v604
    %v617 = vor.u32 %v615, %v616
    %v618 = vshll.u32 920167782, %v603
    %v619 = vshrl.u32 1326507024, %v604
    %v620 = vor.u32 %v618, %v619
    %vm621 = vcmp.lt.s32.totalorder %v602, 1
    %vm622 = vcmp.lt.s32.totalorder %v602, 2
    %vm623 = vcmp.lt.s32.totalorder %v602, 3
    %vm624 = vcmp.lt.s32.totalorder %v602, 4
    %v625 = vsel %vm621, %v605, %v608
    %v626 = vsel %vm624, %v614, 2102212464
    %v627 = vsel %vm623, %v611, %v626
    %v628 = vsel %vm622, %v625, %v627
    %v629 = vsel %vm621, %v608, %v611
    %v630 = vsel %vm624, %v617, 920167782
    %v631 = vsel %vm623, %v614, %v630
    %v632 = vsel %vm622, %v629, %v631
    %v633 = vsel %vm621, %v611, %v614
    %v634 = vsel %vm624, %v620, 1326507024
    %v635 = vsel %vm623, %v617, %v634
    %v636 = vsel %vm622, %v633, %v635
    %v637 = vshll.u32 %v597, 8
    %v638 = vmul.u32.u64.compose %v637, %v636
    %v639 = vextract.low.u32 %v638
    %v640 = vextract.high.u32 %v638
    %v641 = vmul.u32.u64.compose %v637, %v632
    %v642 = vextract.low.u32 %v641
    %v643 = vextract.high.u32 %v641
    %v644 = vmul.u32 %v637, %v628
    %v645 = vadd.s32 %v640, %v642
    %vm646 = vc.u32 %v640, %v642
    %v647 = vadd.s32 %v643, 1
    %v648 = vsel %vm646, %v647, %v643
    %v649 = vadd.s32 %v644, %v648
    %v650 = vadd.s32 %v649, 536870912
    %v651 = vshrl.u32 %v650, 30
    %v652 = vshll.u32 %v651, 30
    %v653 = vsub.s32 %v649, %v652
    %vm654 = vcmp.lt.s32.totalorder %v653, 0
    %v655 = vsub.s32 0, %v653
    %v656 = vsel %vm654, %v655, %v653
    %v657 = vclz %v656
    %v658 = vsub.s32 %v657, 2
    %vm659 = vcmp.gt.s32.totalorder 0, %v658
    %v660 = vsel %vm659, 0, %v658
    %v661 = vsub.s32 32, %v660
    %v662 = vshll.u32 %v653, %v660
    %v663 = vshrl.u32 %v645, %v661
    %v664 = vor.u32 %v662, %v663
    %v665 = vsub.s32 4294967266, %v660
    %v666 = vadd.s32 %v665, 127
    %v667 = vshll.u32 %v666, 23
    %v668 = vor.u32 4788187, %v667
    %v669 = vand.u32 2147483647, %v668
    %v671 = vcvt.s32.f32 %v664
    %v672 = vmul.f32 %v671, %v669
    %v673 = vxor.u32 %v672, 2147483648
    %v674 = vsel %vm591, %v673, %v672
    %v675 = vsub.s32 4, %v651
    %v676 = vsel %vm591, %v675, %v651
    %v677 = vsel %vm590, %v588, %v674
    %v678 = vsel %vm590, 0, %v676
    %v679 = vcosq.f32.pop %v677
    %v680 = vsinq.f32.pop %v677
    %vm681 = vweird.f32 %v588
    %v682 = vand.u32 %v678, 3
    %vm683 = vcmp.lt.s32.totalorder %v682, 2
    %vm684 = vcmp.eq.s32.totalorder %v682, 0
    %v685 = vxor.u32 %v680, 2147483648
    %v686 = vsel %vm684, %v679, %v685
    %vm687 = vcmp.eq.s32.totalorder %v682, 2
    %v688 = vxor.u32 %v679, 2147483648
    %v689 = vsel %vm687, %v688, %v680
    %v690 = vsel %vm683, %v686, %v689
    %v691 = vsel %vm681, nan, %v690
    %v692 = vand.u32 2147483647, %v588
    %vm693 = vcmp.le.f32.partialorder %v692, 0.7853982
    %vm694 = vcmp.lt.s32.totalorder %v588, 0
    %v695 = vand.u32 %v588, 2139095040
    %v696 = vshrl.u32 %v695, 23
    %v697 = vsub.s32 %v696, 127
    %v698 = vand.u32 2147483647, %v588
    %v699 = vand.u32 %v698, 8388607
    %v700 = vor.u32 %v699, 8388608
    %v701 = vsub.s32 0, %v700
    %v702 = vadd.s32 %v697, 1
    %vm703 = vcmp.gt.s32.totalorder %v702, 0
    %v704 = vsel %vm703, %v702, 0
    %v705 = vshrl.u32 %v704, 5
    %v706 = vand.u32 %v704, 31
    %v707 = vsub.s32 32, %v706
    %v708 = vshrl.u32 683565275, %v707
    %v709 = vshll.u32 683565275, %v706
    %v710 = vshrl.u32 2475754826, %v707
    %v711 = vor.u32 %v709, %v710
    %v712 = vshll.u32 2475754826, %v706
    %v713 = vshrl.u32 2131351028, %v707
    %v714 = vor.u32 %v712, %v713
    %v715 = vshll.u32 2131351028, %v706
    %v716 = vshrl.u32 2102212464, %v707
    %v717 = vor.u32 %v715, %v716
    %v718 = vshll.u32 2102212464, %v706
    %v719 = vshrl.u32 920167782, %v707
    %v720 = vor.u32 %v718, %v719
    %v721 = vshll.u32 920167782, %v706
    %v722 = vshrl.u32 1326507024, %v707
    %v723 = vor.u32 %v721, %v722
    %vm724 = vcmp.lt.s32.totalorder %v705, 1
    %vm725 = vcmp.lt.s32.totalorder %v705, 2
    %vm726 = vcmp.lt.s32.totalorder %v705, 3
    %vm727 = vcmp.lt.s32.totalorder %v705, 4
    %v728 = vsel %vm724, %v708, %v711
    %v729 = vsel %vm727, %v717, 2102212464
    %v730 = vsel %vm726, %v714, %v729
    %v731 = vsel %vm725, %v728, %v730
    %v732 = vsel %vm724, %v711, %v714
    %v733 = vsel %vm727, %v720, 920167782
    %v734 = vsel %vm726, %v717, %v733
    %v735 = vsel %vm725, %v732, %v734
    %v736 = vsel %vm724, %v714, %v717
    %v737 = vsel %vm727, %v723, 1326507024
    %v738 = vsel %vm726, %v720, %v737
    %v739 = vsel %vm725, %v736, %v738
    %v740 = vshll.u32 %v700, 8
    %v741 = vmul.u32.u64.compose %v740, %v739
    %v742 = vextract.low.u32 %v741
    %v743 = vextract.high.u32 %v741
    %v744 = vmul.u32.u64.compose %v740, %v735
    %v745 = vextract.low.u32 %v744
    %v746 = vextract.high.u32 %v744
    %v747 = vmul.u32 %v740, %v731
    %v748 = vadd.s32 %v743, %v745
    %vm749 = vc.u32 %v743, %v745
    %v750 = vadd.s32 %v746, 1
    %v751 = vsel %vm749, %v750, %v746
    %v752 = vadd.s32 %v747, %v751
    %v753 = vadd.s32 %v752, 536870912
    %v754 = vshrl.u32 %v753, 30
    %v755 = vshll.u32 %v754, 30
    %v756 = vsub.s32 %v752, %v755
    %vm757 = vcmp.lt.s32.totalorder %v756, 0
    %v758 = vsub.s32 0, %v756
    %v759 = vsel %vm757, %v758, %v756
    %v760 = vclz %v759
    %v761 = vsub.s32 %v760, 2
    %vm762 = vcmp.gt.s32.totalorder 0, %v761
    %v763 = vsel %vm762, 0, %v761
    %v764 = vsub.s32 32, %v763
    %v765 = vshll.u32 %v756, %v763
    %v766 = vshrl.u32 %v748, %v764
    %v767 = vor.u32 %v765, %v766
    %v768 = vsub.s32 4294967266, %v763
    %v769 = vadd.s32 %v768, 127
    %v770 = vshll.u32 %v769, 23
    %v771 = vor.u32 4788187, %v770
    %v772 = vand.u32 2147483647, %v771
    %v774 = vcvt.s32.f32 %v767
    %v775 = vmul.f32 %v774, %v772
    %v776 = vxor.u32 %v775, 2147483648
    %v777 = vsel %vm694, %v776, %v775
    %v778 = vsub.s32 4, %v754
    %v779 = vsel %vm694, %v778, %v754
    %v780 = vsel %vm693, %v588, %v777
    %v781 = vsel %vm693, 0, %v779
    %v782 = vcosq.f32.pop %v780
    %v783 = vsinq.f32.pop %v780
    %vm784 = vweird.f32 %v588
    %v785 = vadd.s32 %v781, 3
    %v786 = vand.u32 %v785, 3
    %vm787 = vcmp.lt.s32.totalorder %v786, 2
    %vm788 = vcmp.eq.s32.totalorder %v786, 0
    %v789 = vxor.u32 %v783, 2147483648
    %v790 = vsel %vm788, %v782, %v789
    %vm791 = vcmp.eq.s32.totalorder %v786, 2
    %v792 = vxor.u32 %v782, 2147483648
    %v793 = vsel %vm791, %v792, %v783
    %v794 = vsel %vm787, %v790, %v793
    %v795 = vsel %vm784, nan, %v794
    %v796 = vsub.f32 0.0, %v795
    %v797 = vadd.f32 %v691, 0.0
    %v798 = vmul.f32 %v797, 0.70710677
    %v799 = vadd.f32 %v796, 0.0
    %v800 = vmul.f32 %v799, 0.70710677
    %v801 = vmul.f32 %v691, 0.70710677
    %v802 = vsub.f32 0.0, %v796
    %v803 = vmul.f32 %v802, 0.70710677
    %v804 = vmul.f32 %v585, %v585
    %v805 = vadd.f32 %v804, 1.0
    %v806 = vrsqrt.pop %v805
    %v807 = vadd.f32 %v806, 1.0
    %v808 = vmul.f32 %v807, 0.5
    %v809 = vrsqrt.pop %v808
    %v810 = vmul.f32 %v808, %v809
    %vm811 = vcmp.eq.f32.partialorder %v808, inf
    %v812 = vsel %vm811, %v808, %v810
    %vm813 = vcmp.eq.f32.partialorder %v808, 0.0
    %v814 = vand.u32 %v808, 2147483648
    %v815 = vsel %vm813, %v814, %v812
    %v816 = vmul.f32 %v588, %v806
    %v817 = vrcp.pop %v815
    %v818 = vmul.f32 %v816, %v817
    %v819 = vlaneseq
    %v820 = vshrl.u32 %v819, 7
    %v821 = vsub.s32 0, %v820
    %v822 = vrot.slane %v815, %v821
    %v823 = vmul.f32 %v822, %v798
    %v824 = vlaneseq
    %v825 = vshrl.u32 %v824, 7
    %v826 = vsub.s32 0, %v825
    %v827 = vrot.slane %v818, %v826
    %v828 = vmul.f32 %v827, %v801
    %v829 = vsub.f32 %v823, %v828
    %v830 = vmul.f32 %v822, %v800
    %v831 = vmul.f32 %v827, %v803
    %v832 = vsub.f32 %v830, %v831
    %v833 = vmul.f32 %v827, %v798
    %v834 = vmul.f32 %v822, %v801
    %v835 = vadd.f32 %v833, %v834
    %v836 = vmul.f32 %v827, %v800
    %v837 = vmul.f32 %v822, %v803
    %v838 = vadd.f32 %v836, %v837
    %v839 = vmul.f32 %v822, %v829
    %v840 = vmul.f32 %v827, %v832
    %v841 = vadd.f32 %v839, %v840
    %v842 = vmul.f32 %v822, %v832
    %v843 = vmul.f32 %v827, %v829
    %v844 = vsub.f32 %v842, %v843
    %v845 = vmul.f32 %v822, %v835
    %v846 = vmul.f32 %v827, %v838
    %v847 = vsub.f32 %v845, %v846
    %v848 = vmul.f32 %v822, %v838
    %v849 = vmul.f32 %v827, %v835
    %v850 = vadd.f32 %v848, %v849
    %v851 = vmul.f32 %v841, %v841
    %v852 = vmul.f32 %v844, %v844
    %v853 = vadd.f32 %v851, %v852
    %v854 = vmul.f32 %v847, %v847
    %v855 = vsub.f32 %v853, %v854
    %v856 = vmul.f32 %v850, %v850
    %v857 = vsub.f32 %v855, %v856
    %v858 = vmul.f32 %v841, %v847
    %v859 = vmul.f32 %v844, %v850
    %v860 = vadd.f32 %v858, %v859
    %v861 = vmul.f32 %v841, %v850
    %v862 = vmul.f32 %v844, %v847
    %v863 = vsub.f32 %v861, %v862
    %865 = vrot.lane.b32.xlu0 %v860, 4
    %v866 = vpop.permute.xlu0 %865
    %869 = vrot.lane.b32.xlu0 %v863, 8
    %v870 = vpop.permute.xlu0 %869
    %v872 = vsel %vm397, %v857, %v866
    %v873 = vsel %vm399, %v872, %v870
    %v875 = vsel %vm407, %v873, 0
    %877 = vmatprep.subr.mxu0 0.0
    %878 = vmatpush1.msra.mxu0 %v35
    %879 = vmatprep.subr.mxu0 0.0
    %880 = vmatpush1.msra.mxu0 %v413
    %881 = vmatprep.subr.mxu0 0.0
    %882 = vmatpush1.msra.mxu0 0.0
    %883 = vmatprep.subr.mxu0 0.0
    %884 = vmatpush1.msra.mxu0 0.0
    %885 = vmatprep.subr.mxu0 0.0
    %886 = vmatpush1.msra.mxu0 0.0
    %887 = vmatprep.subr.mxu0 0.0
    %888 = vmatpush1.msra.mxu0 0.0
    %889 = vmatprep.subr.mxu0 0.0
    %890 = vmatpush1.msra.mxu0 0.0
    %891 = vmatprep.subr.mxu0 0.0
    %892 = vmatpush1.msra.mxu0 0.0
    %893 = vmatprep.subr.mxu0 0.0
    %894 = vmatpush1.msra.mxu0 0.0
    %895 = vmatprep.subr.mxu0 0.0
    %896 = vmatpush1.msra.mxu0 0.0
    %897 = vmatprep.subr.mxu0 0.0
    %898 = vmatpush1.msra.mxu0 0.0
    %899 = vmatprep.subr.mxu0 0.0
    %900 = vmatpush1.msra.mxu0 0.0
    %901 = vmatprep.subr.mxu0 0.0
    %902 = vmatpush1.msra.mxu0 0.0
    %903 = vmatprep.subr.mxu0 0.0
    %904 = vmatpush1.msra.mxu0 0.0
    %905 = vmatprep.subr.mxu0 0.0
    %906 = vmatpush1.msra.mxu0 0.0
    %907 = vmatprep.subr.mxu0 0.0
    %908 = vmatpush1.msra.mxu0 0.0
    %909 = vmatprep.subr.mxu0 0.0
    %910 = vmatpush1.msra.mxu0 0.0
    %911 = vmatprep.subr.mxu0 0.0
    %912 = vmatpush1.msra.mxu0 0.0
    %913 = vmatprep.subr.mxu0 0.0
    %914 = vmatpush1.msra.mxu0 0.0
    %915 = vmatprep.subr.mxu0 0.0
    %916 = vmatpush1.msra.mxu0 0.0
    %917 = vmatprep.subr.mxu0 0.0
    %918 = vmatpush1.msra.mxu0 0.0
    %919 = vmatprep.subr.mxu0 0.0
    %920 = vmatpush1.msra.mxu0 0.0
    %921 = vmatprep.subr.mxu0 0.0
    %922 = vmatpush1.msra.mxu0 0.0
    %923 = vmatprep.subr.mxu0 0.0
    %924 = vmatpush1.msra.mxu0 0.0
    %925 = vmatprep.subr.mxu0 0.0
    %926 = vmatpush1.msra.mxu0 0.0
    %927 = vmatprep.subr.mxu0 0.0
    %928 = vmatpush1.msra.mxu0 0.0
    %929 = vmatprep.subr.mxu0 0.0
    %930 = vmatpush1.msra.mxu0 0.0
    %931 = vmatprep.subr.mxu0 0.0
    %932 = vmatpush1.msra.mxu0 0.0
    %933 = vmatprep.subr.mxu0 0.0
    %934 = vmatpush1.msra.mxu0 0.0
    %935 = vmatprep.subr.mxu0 0.0
    %936 = vmatpush1.msra.mxu0 0.0
    %937 = vmatprep.subr.mxu0 0.0
    %938 = vmatpush1.msra.mxu0 0.0
    %939 = vmatprep.subr.mxu0 0.0
    %940 = vmatpush1.msra.mxu0 0.0
    %941 = vmatprep.mubr.f32.mxu0 0.0
    %942 = vmatmul.mubr.f32.gmra.mrb[0].mxu0 %v875
    %v943 = vpop.f32.mrb[0].mxu0
    %v944 = vadd.f32 %v405, %v943
    %v945 = vpop.f32.mrb[0].mxu0
    %946 = vdwg.mxu0
    %v947 = vxor.u32 %v944, 2147483648
    %v948 = vmul.f32 %v947, 1.442695
    %v949 = vpow.pop %v948
    %v950 = vadd.f32 %v949, 1.0
    %v951 = vrcp.pop %v950
    %v952 = vmul.f32 1.0, %v951
    %v953 = vtanh.pop %v944
    %v954 = vmul.f32 %v952, %v502
    %956 = vrot.lane.b32.xlu0 %v953, 96
    %v957 = vpop.permute.xlu0 %956
    %v959 = vmul.f32 %v952, %v957
    %961 = vrot.lane.b32.xlu0 %v959, 96
    %v962 = vpop.permute.xlu0 %961
    %v964 = vadd.f32 %v954, %v962
    %v965 = vtanh.pop %v964
    %967 = vrot.lane.b32.xlu0 %v965, 96
    %v968 = vpop.permute.xlu0 %967
    %v970 = vmul.f32 %v952, %v968
    %972 = vrot.lane.b32.xlu0 %v970, 32
    %v973 = vpop.permute.xlu0 %972
    %s975 = scalar_lea.vmem [#allocation4], 8
    %976 = vst.msk [vmem:[%s975] sm:$0xff] %vm39, %v973
    %s977 = scalar_lea.vmem %s0, 16
    %v978 = vld [vmem:[%s977] sm:$0xff]
    %v979 = vsel %vm39, %v973, 0
    %981 = vmatprep.subr.mxu0 0.0
    %982 = vmatpush1.msra.mxu0 %v31
    %983 = vmatprep.subr.mxu0 0.0
    %984 = vmatpush1.msra.mxu0 %v32
    %985 = vmatprep.subr.mxu0 0.0
    %986 = vmatpush1.msra.mxu0 %v33
    %987 = vmatprep.subr.mxu0 0.0
    %988 = vmatpush1.msra.mxu0 %v34
    %989 = vmatprep.subr.mxu0 0.0
    %990 = vmatpush1.msra.mxu0 0.0
    %991 = vmatprep.subr.mxu0 0.0
    %992 = vmatpush1.msra.mxu0 0.0
    %993 = vmatprep.subr.mxu0 0.0
    %994 = vmatpush1.msra.mxu0 0.0
    %995 = vmatprep.subr.mxu0 0.0
    %996 = vmatpush1.msra.mxu0 0.0
    %997 = vmatprep.subr.mxu0 0.0
    %998 = vmatpush1.msra.mxu0 0.0
    %999 = vmatprep.subr.mxu0 0.0
    %1000 = vmatpush1.msra.mxu0 0.0
    %1001 = vmatprep.subr.mxu0 0.0
    %1002 = vmatpush1.msra.mxu0 0.0
    %1003 = vmatprep.subr.mxu0 0.0
    %1004 = vmatpush1.msra.mxu0 0.0
    %1005 = vmatprep.subr.mxu0 0.0
    %1006 = vmatpush1.msra.mxu0 0.0
    %1007 = vmatprep.subr.mxu0 0.0
    %1008 = vmatpush1.msra.mxu0 0.0
    %1009 = vmatprep.subr.mxu0 0.0
    %1010 = vmatpush1.msra.mxu0 0.0
    %1011 = vmatprep.subr.mxu0 0.0
    %1012 = vmatpush1.msra.mxu0 0.0
    %1013 = vmatprep.subr.mxu0 0.0
    %1014 = vmatpush1.msra.mxu0 0.0
    %1015 = vmatprep.subr.mxu0 0.0
    %1016 = vmatpush1.msra.mxu0 0.0
    %1017 = vmatprep.subr.mxu0 0.0
    %1018 = vmatpush1.msra.mxu0 0.0
    %1019 = vmatprep.subr.mxu0 0.0
    %1020 = vmatpush1.msra.mxu0 0.0
    %1021 = vmatprep.subr.mxu0 0.0
    %1022 = vmatpush1.msra.mxu0 0.0
    %1023 = vmatprep.subr.mxu0 0.0
    %1024 = vmatpush1.msra.mxu0 0.0
    %1025 = vmatprep.subr.mxu0 0.0
    %1026 = vmatpush1.msra.mxu0 0.0
    %1027 = vmatprep.subr.mxu0 0.0
    %1028 = vmatpush1.msra.mxu0 0.0
    %1029 = vmatprep.subr.mxu0 0.0
    %1030 = vmatpush1.msra.mxu0 0.0
    %1031 = vmatprep.subr.mxu0 0.0
    %1032 = vmatpush1.msra.mxu0 0.0
    %1033 = vmatprep.subr.mxu0 0.0
    %1034 = vmatpush1.msra.mxu0 0.0
    %1035 = vmatprep.subr.mxu0 0.0
    %1036 = vmatpush1.msra.mxu0 0.0
    %1037 = vmatprep.subr.mxu0 0.0
    %1038 = vmatpush1.msra.mxu0 0.0
    %1039 = vmatprep.subr.mxu0 0.0
    %1040 = vmatpush1.msra.mxu0 0.0
    %1041 = vmatprep.subr.mxu0 0.0
    %1042 = vmatpush1.msra.mxu0 0.0
    %1043 = vmatprep.subr.mxu0 0.0
    %1044 = vmatpush1.msra.mxu0 0.0
    %1045 = vmatprep.mubr.f32.mxu0 0.0
    %1046 = vmatmul.mubr.f32.gmra.mrb[0].mxu0 %v979
    %v1047 = vpop.f32.mrb[0].mxu0
    %v1048 = vadd.f32 %v978, %v1047
    %v1049 = vpop.f32.mrb[0].mxu0
    %1050 = vdwg.mxu0
    %v1051 = vmul.f32 %v1048, 0.5
    %v1052 = vand.u32 2147483647, %v1051
    %vm1053 = vcmp.le.f32.partialorder %v1052, 0.7853982
    %vm1054 = vcmp.lt.s32.totalorder %v1051, 0
    %v1055 = vand.u32 %v1051, 2139095040
    %v1056 = vshrl.u32 %v1055, 23
    %v1057 = vsub.s32 %v1056, 127
    %v1058 = vand.u32 2147483647, %v1051
    %v1059 = vand.u32 %v1058, 8388607
    %v1060 = vor.u32 %v1059, 8388608
    %v1061 = vsub.s32 0, %v1060
    %v1062 = vadd.s32 %v1057, 1
    %vm1063 = vcmp.gt.s32.totalorder %v1062, 0
    %v1064 = vsel %vm1063, %v1062, 0
    %v1065 = vshrl.u32 %v1064, 5
    %v1066 = vand.u32 %v1064, 31
    %v1067 = vsub.s32 32, %v1066
    %v1068 = vshrl.u32 683565275, %v1067
    %v1069 = vshll.u32 683565275, %v1066
    %v1070 = vshrl.u32 2475754826, %v1067
    %v1071 = vor.u32 %v1069, %v1070
    %v1072 = vshll.u32 2475754826, %v1066
    %v1073 = vshrl.u32 2131351028, %v1067
    %v1074 = vor.u32 %v1072, %v1073
    %v1075 = vshll.u32 2131351028, %v1066
    %v1076 = vshrl.u32 2102212464, %v1067
    %v1077 = vor.u32 %v1075, %v1076
    %v1078 = vshll.u32 2102212464, %v1066
    %v1079 = vshrl.u32 920167782, %v1067
    %v1080 = vor.u32 %v1078, %v1079
    %v1081 = vshll.u32 920167782, %v1066
    %v1082 = vshrl.u32 1326507024, %v1067
    %v1083 = vor.u32 %v1081, %v1082
    %vm1084 = vcmp.lt.s32.totalorder %v1065, 1
    %vm1085 = vcmp.lt.s32.totalorder %v1065, 2
    %vm1086 = vcmp.lt.s32.totalorder %v1065, 3
    %vm1087 = vcmp.lt.s32.totalorder %v1065, 4
    %v1088 = vsel %vm1084, %v1068, %v1071
    %v1089 = vsel %vm1087, %v1077, 2102212464
    %v1090 = vsel %vm1086, %v1074, %v1089
    %v1091 = vsel %vm1085, %v1088, %v1090
    %v1092 = vsel %vm1084, %v1071, %v1074
    %v1093 = vsel %vm1087, %v1080, 920167782
    %v1094 = vsel %vm1086, %v1077, %v1093
    %v1095 = vsel %vm1085, %v1092, %v1094
    %v1096 = vsel %vm1084, %v1074, %v1077
    %v1097 = vsel %vm1087, %v1083, 1326507024
    %v1098 = vsel %vm1086, %v1080, %v1097
    %v1099 = vsel %vm1085, %v1096, %v1098
    %v1100 = vshll.u32 %v1060, 8
    %v1101 = vmul.u32.u64.compose %v1100, %v1099
    %v1102 = vextract.low.u32 %v1101
    %v1103 = vextract.high.u32 %v1101
    %v1104 = vmul.u32.u64.compose %v1100, %v1095
    %v1105 = vextract.low.u32 %v1104
    %v1106 = vextract.high.u32 %v1104
    %v1107 = vmul.u32 %v1100, %v1091
    %v1108 = vadd.s32 %v1103, %v1105
    %vm1109 = vc.u32 %v1103, %v1105
    %v1110 = vadd.s32 %v1106, 1
    %v1111 = vsel %vm1109, %v1110, %v1106
    %v1112 = vadd.s32 %v1107, %v1111
    %v1113 = vadd.s32 %v1112, 536870912
    %v1114 = vshrl.u32 %v1113, 30
    %v1115 = vshll.u32 %v1114, 30
    %v1116 = vsub.s32 %v1112, %v1115
    %vm1117 = vcmp.lt.s32.totalorder %v1116, 0
    %v1118 = vsub.s32 0, %v1116
    %v1119 = vsel %vm1117, %v1118, %v1116
    %v1120 = vclz %v1119
    %v1121 = vsub.s32 %v1120, 2
    %vm1122 = vcmp.gt.s32.totalorder 0, %v1121
    %v1123 = vsel %vm1122, 0, %v1121
    %v1124 = vsub.s32 32, %v1123
    %v1125 = vshll.u32 %v1116, %v1123
    %v1126 = vshrl.u32 %v1108, %v1124
    %v1127 = vor.u32 %v1125, %v1126
    %v1128 = vsub.s32 4294967266, %v1123
    %v1129 = vadd.s32 %v1128, 127
    %v1130 = vshll.u32 %v1129, 23
    %v1131 = vor.u32 4788187, %v1130
    %v1132 = vand.u32 2147483647, %v1131
    %v1134 = vcvt.s32.f32 %v1127
    %v1135 = vmul.f32 %v1134, %v1132
    %v1136 = vxor.u32 %v1135, 2147483648
    %v1137 = vsel %vm1054, %v1136, %v1135
    %v1138 = vsub.s32 4, %v1114
    %v1139 = vsel %vm1054, %v1138, %v1114
    %v1140 = vsel %vm1053, %v1051, %v1137
    %v1141 = vsel %vm1053, 0, %v1139
    %v1142 = vcosq.f32.pop %v1140
    %v1143 = vsinq.f32.pop %v1140
    %vm1144 = vweird.f32 %v1051
    %v1145 = vand.u32 %v1141, 3
    %vm1146 = vcmp.lt.s32.totalorder %v1145, 2
    %vm1147 = vcmp.eq.s32.totalorder %v1145, 0
    %v1148 = vxor.u32 %v1143, 2147483648
    %v1149 = vsel %vm1147, %v1142, %v1148
    %vm1150 = vcmp.eq.s32.totalorder %v1145, 2
    %v1151 = vxor.u32 %v1142, 2147483648
    %v1152 = vsel %vm1150, %v1151, %v1143
    %v1153 = vsel %vm1146, %v1149, %v1152
    %v1154 = vsel %vm1144, nan, %v1153
    %v1155 = vand.u32 2147483647, %v1051
    %vm1156 = vcmp.le.f32.partialorder %v1155, 0.7853982
    %vm1157 = vcmp.lt.s32.totalorder %v1051, 0
    %v1158 = vand.u32 %v1051, 2139095040
    %v1159 = vshrl.u32 %v1158, 23
    %v1160 = vsub.s32 %v1159, 127
    %v1161 = vand.u32 2147483647, %v1051
    %v1162 = vand.u32 %v1161, 8388607
    %v1163 = vor.u32 %v1162, 8388608
    %v1164 = vsub.s32 0, %v1163
    %v1165 = vadd.s32 %v1160, 1
    %vm1166 = vcmp.gt.s32.totalorder %v1165, 0
    %v1167 = vsel %vm1166, %v1165, 0
    %v1168 = vshrl.u32 %v1167, 5
    %v1169 = vand.u32 %v1167, 31
    %v1170 = vsub.s32 32, %v1169
    %v1171 = vshrl.u32 683565275, %v1170
    %v1172 = vshll.u32 683565275, %v1169
    %v1173 = vshrl.u32 2475754826, %v1170
    %v1174 = vor.u32 %v1172, %v1173
    %v1175 = vshll.u32 2475754826, %v1169
    %v1176 = vshrl.u32 2131351028, %v1170
    %v1177 = vor.u32 %v1175, %v1176
    %v1178 = vshll.u32 2131351028, %v1169
    %v1179 = vshrl.u32 2102212464, %v1170
    %v1180 = vor.u32 %v1178, %v1179
    %v1181 = vshll.u32 2102212464, %v1169
    %v1182 = vshrl.u32 920167782, %v1170
    %v1183 = vor.u32 %v1181, %v1182
    %v1184 = vshll.u32 920167782, %v1169
    %v1185 = vshrl.u32 1326507024, %v1170
    %v1186 = vor.u32 %v1184, %v1185
    %vm1187 = vcmp.lt.s32.totalorder %v1168, 1
    %vm1188 = vcmp.lt.s32.totalorder %v1168, 2
    %vm1189 = vcmp.lt.s32.totalorder %v1168, 3
    %vm1190 = vcmp.lt.s32.totalorder %v1168, 4
    %v1191 = vsel %vm1187, %v1171, %v1174
    %v1192 = vsel %vm1190, %v1180, 2102212464
    %v1193 = vsel %vm1189, %v1177, %v1192
    %v1194 = vsel %vm1188, %v1191, %v1193
    %v1195 = vsel %vm1187, %v1174, %v1177
    %v1196 = vsel %vm1190, %v1183, 920167782
    %v1197 = vsel %vm1189, %v1180, %v1196
    %v1198 = vsel %vm1188, %v1195, %v1197
    %v1199 = vsel %vm1187, %v1177, %v1180
    %v1200 = vsel %vm1190, %v1186, 1326507024
    %v1201 = vsel %vm1189, %v1183, %v1200
    %v1202 = vsel %vm1188, %v1199, %v1201
    %v1203 = vshll.u32 %v1163, 8
    %v1204 = vmul.u32.u64.compose %v1203, %v1202
    %v1205 = vextract.low.u32 %v1204
    %v1206 = vextract.high.u32 %v1204
    %v1207 = vmul.u32.u64.compose %v1203, %v1198
    %v1208 = vextract.low.u32 %v1207
    %v1209 = vextract.high.u32 %v1207
    %v1210 = vmul.u32 %v1203, %v1194
    %v1211 = vadd.s32 %v1206, %v1208
    %vm1212 = vc.u32 %v1206, %v1208
    %v1213 = vadd.s32 %v1209, 1
    %v1214 = vsel %vm1212, %v1213, %v1209
    %v1215 = vadd.s32 %v1210, %v1214
    %v1216 = vadd.s32 %v1215, 536870912
    %v1217 = vshrl.u32 %v1216, 30
    %v1218 = vshll.u32 %v1217, 30
    %v1219 = vsub.s32 %v1215, %v1218
    %vm1220 = vcmp.lt.s32.totalorder %v1219, 0
    %v1221 = vsub.s32 0, %v1219
    %v1222 = vsel %vm1220, %v1221, %v1219
    %v1223 = vclz %v1222
    %v1224 = vsub.s32 %v1223, 2
    %vm1225 = vcmp.gt.s32.totalorder 0, %v1224
    %v1226 = vsel %vm1225, 0, %v1224
    %v1227 = vsub.s32 32, %v1226
    %v1228 = vshll.u32 %v1219, %v1226
    %v1229 = vshrl.u32 %v1211, %v1227
    %v1230 = vor.u32 %v1228, %v1229
    %v1231 = vsub.s32 4294967266, %v1226
    %v1232 = vadd.s32 %v1231, 127
    %v1233 = vshll.u32 %v1232, 23
    %v1234 = vor.u32 4788187, %v1233
    %v1235 = vand.u32 2147483647, %v1234
    %v1237 = vcvt.s32.f32 %v1230
    %v1238 = vmul.f32 %v1237, %v1235
    %v1239 = vxor.u32 %v1238, 2147483648
    %v1240 = vsel %vm1157, %v1239, %v1238
    %v1241 = vsub.s32 4, %v1217
    %v1242 = vsel %vm1157, %v1241, %v1217
    %v1243 = vsel %vm1156, %v1051, %v1240
    %v1244 = vsel %vm1156, 0, %v1242
    %v1245 = vcosq.f32.pop %v1243
    %v1246 = vsinq.f32.pop %v1243
    %vm1247 = vweird.f32 %v1051
    %v1248 = vadd.s32 %v1244, 3
    %v1249 = vand.u32 %v1248, 3
    %vm1250 = vcmp.lt.s32.totalorder %v1249, 2
    %vm1251 = vcmp.eq.s32.totalorder %v1249, 0
    %v1252 = vxor.u32 %v1246, 2147483648
    %v1253 = vsel %vm1251, %v1245, %v1252
    %vm1254 = vcmp.eq.s32.totalorder %v1249, 2
    %v1255 = vxor.u32 %v1245, 2147483648
    %v1256 = vsel %vm1254, %v1255, %v1246
    %v1257 = vsel %vm1250, %v1253, %v1256
    %v1258 = vsel %vm1247, nan, %v1257
    %v1259 = vsub.f32 0.0, %v1258
    %v1260 = vadd.f32 %v1154, 0.0
    %v1261 = vmul.f32 %v1260, 0.70710677
    %v1262 = vadd.f32 %v1259, 0.0
    %v1263 = vmul.f32 %v1262, 0.70710677
    %v1264 = vmul.f32 %v1154, 0.70710677
    %v1265 = vsub.f32 0.0, %v1259
    %v1266 = vmul.f32 %v1265, 0.70710677
    %v1267 = vmul.f32 %v1048, %v1048
    %v1268 = vadd.f32 %v1267, 1.0
    %v1269 = vrsqrt.pop %v1268
    %v1270 = vadd.f32 %v1269, 1.0
    %v1271 = vmul.f32 %v1270, 0.5
    %v1272 = vrsqrt.pop %v1271
    %v1273 = vmul.f32 %v1271, %v1272
    %vm1274 = vcmp.eq.f32.partialorder %v1271, inf
    %v1275 = vsel %vm1274, %v1271, %v1273
    %vm1276 = vcmp.eq.f32.partialorder %v1271, 0.0
    %v1277 = vand.u32 %v1271, 2147483648
    %v1278 = vsel %vm1276, %v1277, %v1275
    %v1279 = vmul.f32 %v1051, %v1269
    %v1280 = vrcp.pop %v1278
    %v1281 = vmul.f32 %v1279, %v1280
    %v1282 = vlaneseq
    %v1283 = vshrl.u32 %v1282, 7
    %v1284 = vsub.s32 0, %v1283
    %v1285 = vrot.slane %v1278, %v1284
    %v1286 = vmul.f32 %v1285, %v1261
    %v1287 = vlaneseq
    %v1288 = vshrl.u32 %v1287, 7
    %v1289 = vsub.s32 0, %v1288
    %v1290 = vrot.slane %v1281, %v1289
    %v1291 = vmul.f32 %v1290, %v1264
    %v1292 = vsub.f32 %v1286, %v1291
    %v1293 = vmul.f32 %v1285, %v1263
    %v1294 = vmul.f32 %v1290, %v1266
    %v1295 = vsub.f32 %v1293, %v1294
    %v1296 = vmul.f32 %v1290, %v1261
    %v1297 = vmul.f32 %v1285, %v1264
    %v1298 = vadd.f32 %v1296, %v1297
    %v1299 = vmul.f32 %v1290, %v1263
    %v1300 = vmul.f32 %v1285, %v1266
    %v1301 = vadd.f32 %v1299, %v1300
    %v1302 = vmul.f32 %v1285, %v1292
    %v1303 = vmul.f32 %v1290, %v1295
    %v1304 = vadd.f32 %v1302, %v1303
    %v1305 = vmul.f32 %v1285, %v1295
    %v1306 = vmul.f32 %v1290, %v1292
    %v1307 = vsub.f32 %v1305, %v1306
    %v1308 = vmul.f32 %v1285, %v1298
    %v1309 = vmul.f32 %v1290, %v1301
    %v1310 = vsub.f32 %v1308, %v1309
    %v1311 = vmul.f32 %v1285, %v1301
    %v1312 = vmul.f32 %v1290, %v1298
    %v1313 = vadd.f32 %v1311, %v1312
    %v1314 = vmul.f32 %v1304, %v1304
    %v1315 = vmul.f32 %v1307, %v1307
    %v1316 = vadd.f32 %v1314, %v1315
    %v1317 = vmul.f32 %v1310, %v1310
    %v1318 = vsub.f32 %v1316, %v1317
    %v1319 = vmul.f32 %v1313, %v1313
    %v1320 = vsub.f32 %v1318, %v1319
    %v1321 = vmul.f32 %v1304, %v1310
    %v1322 = vmul.f32 %v1307, %v1313
    %v1323 = vadd.f32 %v1321, %v1322
    %v1324 = vmul.f32 %v1304, %v1313
    %v1325 = vmul.f32 %v1307, %v1310
    %v1326 = vsub.f32 %v1324, %v1325
    %1328 = vrot.lane.b32.xlu0 %v1323, 4
    %v1329 = vpop.permute.xlu0 %1328
    %1332 = vrot.lane.b32.xlu0 %v1326, 8
    %v1333 = vpop.permute.xlu0 %1332
    %v1335 = vsel %vm397, %v1320, %v1329
    %v1336 = vsel %vm399, %v1335, %v1333
    %v1338 = vsel %vm407, %v1336, 0
    %1340 = vmatprep.subr.mxu0 0.0
    %1341 = vmatpush1.msra.mxu0 %v35
    %1342 = vmatprep.subr.mxu0 0.0
    %1343 = vmatpush1.msra.mxu0 %v413
    %1344 = vmatprep.subr.mxu0 0.0
    %1345 = vmatpush1.msra.mxu0 0.0
    %1346 = vmatprep.subr.mxu0 0.0
    %1347 = vmatpush1.msra.mxu0 0.0
    %1348 = vmatprep.subr.mxu0 0.0
    %1349 = vmatpush1.msra.mxu0 0.0
    %1350 = vmatprep.subr.mxu0 0.0
    %1351 = vmatpush1.msra.mxu0 0.0
    %1352 = vmatprep.subr.mxu0 0.0
    %1353 = vmatpush1.msra.mxu0 0.0
    %1354 = vmatprep.subr.mxu0 0.0
    %1355 = vmatpush1.msra.mxu0 0.0
    %1356 = vmatprep.subr.mxu0 0.0
    %1357 = vmatpush1.msra.mxu0 0.0
    %1358 = vmatprep.subr.mxu0 0.0
    %1359 = vmatpush1.msra.mxu0 0.0
    %1360 = vmatprep.subr.mxu0 0.0
    %1361 = vmatpush1.msra.mxu0 0.0
    %1362 = vmatprep.subr.mxu0 0.0
    %1363 = vmatpush1.msra.mxu0 0.0
    %1364 = vmatprep.subr.mxu0 0.0
    %1365 = vmatpush1.msra.mxu0 0.0
    %1366 = vmatprep.subr.mxu0 0.0
    %1367 = vmatpush1.msra.mxu0 0.0
    %1368 = vmatprep.subr.mxu0 0.0
    %1369 = vmatpush1.msra.mxu0 0.0
    %1370 = vmatprep.subr.mxu0 0.0
    %1371 = vmatpush1.msra.mxu0 0.0
    %1372 = vmatprep.subr.mxu0 0.0
    %1373 = vmatpush1.msra.mxu0 0.0
    %1374 = vmatprep.subr.mxu0 0.0
    %1375 = vmatpush1.msra.mxu0 0.0
    %1376 = vmatprep.subr.mxu0 0.0
    %1377 = vmatpush1.msra.mxu0 0.0
    %1378 = vmatprep.subr.mxu0 0.0
    %1379 = vmatpush1.msra.mxu0 0.0
    %1380 = vmatprep.subr.mxu0 0.0
    %1381 = vmatpush1.msra.mxu0 0.0
    %1382 = vmatprep.subr.mxu0 0.0
    %1383 = vmatpush1.msra.mxu0 0.0
    %1384 = vmatprep.subr.mxu0 0.0
    %1385 = vmatpush1.msra.mxu0 0.0
    %1386 = vmatprep.subr.mxu0 0.0
    %1387 = vmatpush1.msra.mxu0 0.0
    %1388 = vmatprep.subr.mxu0 0.0
    %1389 = vmatpush1.msra.mxu0 0.0
    %1390 = vmatprep.subr.mxu0 0.0
    %1391 = vmatpush1.msra.mxu0 0.0
    %1392 = vmatprep.subr.mxu0 0.0
    %1393 = vmatpush1.msra.mxu0 0.0
    %1394 = vmatprep.subr.mxu0 0.0
    %1395 = vmatpush1.msra.mxu0 0.0
    %1396 = vmatprep.subr.mxu0 0.0
    %1397 = vmatpush1.msra.mxu0 0.0
    %1398 = vmatprep.subr.mxu0 0.0
    %1399 = vmatpush1.msra.mxu0 0.0
    %1400 = vmatprep.subr.mxu0 0.0
    %1401 = vmatpush1.msra.mxu0 0.0
    %1402 = vmatprep.subr.mxu0 0.0
    %1403 = vmatpush1.msra.mxu0 0.0
    %1404 = vmatprep.mubr.f32.mxu0 0.0
    %1405 = vmatmul.mubr.f32.gmra.mrb[0].mxu0 %v1338
    %v1406 = vpop.f32.mrb[0].mxu0
    %v1407 = vadd.f32 %v405, %v1406
    %v1408 = vpop.f32.mrb[0].mxu0
    %1409 = vdwg.mxu0
    %v1410 = vxor.u32 %v1407, 2147483648
    %v1411 = vmul.f32 %v1410, 1.442695
    %v1412 = vpow.pop %v1411
    %v1413 = vadd.f32 %v1412, 1.0
    %v1414 = vrcp.pop %v1413
    %v1415 = vmul.f32 1.0, %v1414
    %v1416 = vtanh.pop %v1407
    %v1417 = vmul.f32 %v1415, %v964
    %1419 = vrot.lane.b32.xlu0 %v1416, 96
    %v1420 = vpop.permute.xlu0 %1419
    %v1422 = vmul.f32 %v1415, %v1420
    %1424 = vrot.lane.b32.xlu0 %v1422, 96
    %v1425 = vpop.permute.xlu0 %1424
    %v1427 = vadd.f32 %v1417, %v1425
    %v1428 = vtanh.pop %v1427
    %1430 = vrot.lane.b32.xlu0 %v1428, 96
    %v1431 = vpop.permute.xlu0 %1430
    %v1433 = vmul.f32 %v1415, %v1431
    %1435 = vrot.lane.b32.xlu0 %v1433, 32
    %v1436 = vpop.permute.xlu0 %1435
    %s1438 = scalar_lea.vmem [#allocation4], 16
    %1439 = vst.msk [vmem:[%s1438] sm:$0xff] %vm39, %v1436
    %s1440 = scalar_lea.vmem %s0, 24
    %v1441 = vld [vmem:[%s1440] sm:$0xff]
    %v1442 = vsel %vm39, %v1436, 0
    %1444 = vmatprep.subr.mxu0 0.0
    %1445 = vmatpush1.msra.mxu0 %v31
    %1446 = vmatprep.subr.mxu0 0.0
    %1447 = vmatpush1.msra.mxu0 %v32
    %1448 = vmatprep.subr.mxu0 0.0
    %1449 = vmatpush1.msra.mxu0 %v33
    %1450 = vmatprep.subr.mxu0 0.0
    %1451 = vmatpush1.msra.mxu0 %v34
    %1452 = vmatprep.subr.mxu0 0.0
    %1453 = vmatpush1.msra.mxu0 0.0
    %1454 = vmatprep.subr.mxu0 0.0
    %1455 = vmatpush1.msra.mxu0 0.0
    %1456 = vmatprep.subr.mxu0 0.0
    %1457 = vmatpush1.msra.mxu0 0.0
    %1458 = vmatprep.subr.mxu0 0.0
    %1459 = vmatpush1.msra.mxu0 0.0
    %1460 = vmatprep.subr.mxu0 0.0
    %1461 = vmatpush1.msra.mxu0 0.0
    %1462 = vmatprep.subr.mxu0 0.0
    %1463 = vmatpush1.msra.mxu0 0.0
    %1464 = vmatprep.subr.mxu0 0.0
    %1465 = vmatpush1.msra.mxu0 0.0
    %1466 = vmatprep.subr.mxu0 0.0
    %1467 = vmatpush1.msra.mxu0 0.0
    %1468 = vmatprep.subr.mxu0 0.0
    %1469 = vmatpush1.msra.mxu0 0.0
    %1470 = vmatprep.subr.mxu0 0.0
    %1471 = vmatpush1.msra.mxu0 0.0
    %1472 = vmatprep.subr.mxu0 0.0
    %1473 = vmatpush1.msra.mxu0 0.0
    %1474 = vmatprep.subr.mxu0 0.0
    %1475 = vmatpush1.msra.mxu0 0.0
    %1476 = vmatprep.subr.mxu0 0.0
    %1477 = vmatpush1.msra.mxu0 0.0
    %1478 = vmatprep.subr.mxu0 0.0
    %1479 = vmatpush1.msra.mxu0 0.0
    %1480 = vmatprep.subr.mxu0 0.0
    %1481 = vmatpush1.msra.mxu0 0.0
    %1482 = vmatprep.subr.mxu0 0.0
    %1483 = vmatpush1.msra.mxu0 0.0
    %1484 = vmatprep.subr.mxu0 0.0
    %1485 = vmatpush1.msra.mxu0 0.0
    %1486 = vmatprep.subr.mxu0 0.0
    %1487 = vmatpush1.msra.mxu0 0.0
    %1488 = vmatprep.subr.mxu0 0.0
    %1489 = vmatpush1.msra.mxu0 0.0
    %1490 = vmatprep.subr.mxu0 0.0
    %1491 = vmatpush1.msra.mxu0 0.0
    %1492 = vmatprep.subr.mxu0 0.0
    %1493 = vmatpush1.msra.mxu0 0.0
    %1494 = vmatprep.subr.mxu0 0.0
    %1495 = vmatpush1.msra.mxu0 0.0
    %1496 = vmatprep.subr.mxu0 0.0
    %1497 = vmatpush1.msra.mxu0 0.0
    %1498 = vmatprep.subr.mxu0 0.0
    %1499 = vmatpush1.msra.mxu0 0.0
    %1500 = vmatprep.subr.mxu0 0.0
    %1501 = vmatpush1.msra.mxu0 0.0
    %1502 = vmatprep.subr.mxu0 0.0
    %1503 = vmatpush1.msra.mxu0 0.0
    %1504 = vmatprep.subr.mxu0 0.0
    %1505 = vmatpush1.msra.mxu0 0.0
    %1506 = vmatprep.subr.mxu0 0.0
    %1507 = vmatpush1.msra.mxu0 0.0
    %1508 = vmatprep.mubr.f32.mxu0 0.0
    %1509 = vmatmul.mubr.f32.gmra.mrb[0].mxu0 %v1442
    %v1510 = vpop.f32.mrb[0].mxu0
    %v1511 = vadd.f32 %v1441, %v1510
    %v1512 = vpop.f32.mrb[0].mxu0
    %1513 = vdwg.mxu0
    %v1514 = vmul.f32 %v1511, 0.5
    %v1515 = vand.u32 2147483647, %v1514
    %vm1516 = vcmp.le.f32.partialorder %v1515, 0.7853982
    %vm1517 = vcmp.lt.s32.totalorder %v1514, 0
    %v1518 = vand.u32 %v1514, 2139095040
    %v1519 = vshrl.u32 %v1518, 23
    %v1520 = vsub.s32 %v1519, 127
    %v1521 = vand.u32 2147483647, %v1514
    %v1522 = vand.u32 %v1521, 8388607
    %v1523 = vor.u32 %v1522, 8388608
    %v1524 = vsub.s32 0, %v1523
    %v1525 = vadd.s32 %v1520, 1
    %vm1526 = vcmp.gt.s32.totalorder %v1525, 0
    %v1527 = vsel %vm1526, %v1525, 0
    %v1528 = vshrl.u32 %v1527, 5
    %v1529 = vand.u32 %v1527, 31
    %v1530 = vsub.s32 32, %v1529
    %v1531 = vshrl.u32 683565275, %v1530
    %v1532 = vshll.u32 683565275, %v1529
    %v1533 = vshrl.u32 2475754826, %v1530
    %v1534 = vor.u32 %v1532, %v1533
    %v1535 = vshll.u32 2475754826, %v1529
    %v1536 = vshrl.u32 2131351028, %v1530
    %v1537 = vor.u32 %v1535, %v1536
    %v1538 = vshll.u32 2131351028, %v1529
    %v1539 = vshrl.u32 2102212464, %v1530
    %v1540 = vor.u32 %v1538, %v1539
    %v1541 = vshll.u32 2102212464, %v1529
    %v1542 = vshrl.u32 920167782, %v1530
    %v1543 = vor.u32 %v1541, %v1542
    %v1544 = vshll.u32 920167782, %v1529
    %v1545 = vshrl.u32 1326507024, %v1530
    %v1546 = vor.u32 %v1544, %v1545
    %vm1547 = vcmp.lt.s32.totalorder %v1528, 1
    %vm1548 = vcmp.lt.s32.totalorder %v1528, 2
    %vm1549 = vcmp.lt.s32.totalorder %v1528, 3
    %vm1550 = vcmp.lt.s32.totalorder %v1528, 4
    %v1551 = vsel %vm1547, %v1531, %v1534
    %v1552 = vsel %vm1550, %v1540, 2102212464
    %v1553 = vsel %vm1549, %v1537, %v1552
    %v1554 = vsel %vm1548, %v1551, %v1553
    %v1555 = vsel %vm1547, %v1534, %v1537
    %v1556 = vsel %vm1550, %v1543, 920167782
    %v1557 = vsel %vm1549, %v1540, %v1556
    %v1558 = vsel %vm1548, %v1555, %v1557
    %v1559 = vsel %vm1547, %v1537, %v1540
    %v1560 = vsel %vm1550, %v1546, 1326507024
    %v1561 = vsel %vm1549, %v1543, %v1560
    %v1562 = vsel %vm1548, %v1559, %v1561
    %v1563 = vshll.u32 %v1523, 8
    %v1564 = vmul.u32.u64.compose %v1563, %v1562
    %v1565 = vextract.low.u32 %v1564
    %v1566 = vextract.high.u32 %v1564
    %v1567 = vmul.u32.u64.compose %v1563, %v1558
    %v1568 = vextract.low.u32 %v1567
    %v1569 = vextract.high.u32 %v1567
    %v1570 = vmul.u32 %v1563, %v1554
    %v1571 = vadd.s32 %v1566, %v1568
    %vm1572 = vc.u32 %v1566, %v1568
    %v1573 = vadd.s32 %v1569, 1
    %v1574 = vsel %vm1572, %v1573, %v1569
    %v1575 = vadd.s32 %v1570, %v1574
    %v1576 = vadd.s32 %v1575, 536870912
    %v1577 = vshrl.u32 %v1576, 30
    %v1578 = vshll.u32 %v1577, 30
    %v1579 = vsub.s32 %v1575, %v1578
    %vm1580 = vcmp.lt.s32.totalorder %v1579, 0
    %v1581 = vsub.s32 0, %v1579
    %v1582 = vsel %vm1580, %v1581, %v1579
    %v1583 = vclz %v1582
    %v1584 = vsub.s32 %v1583, 2
    %vm1585 = vcmp.gt.s32.totalorder 0, %v1584
    %v1586 = vsel %vm1585, 0, %v1584
    %v1587 = vsub.s32 32, %v1586
    %v1588 = vshll.u32 %v1579, %v1586
    %v1589 = vshrl.u32 %v1571, %v1587
    %v1590 = vor.u32 %v1588, %v1589
    %v1591 = vsub.s32 4294967266, %v1586
    %v1592 = vadd.s32 %v1591, 127
    %v1593 = vshll.u32 %v1592, 23
    %v1594 = vor.u32 4788187, %v1593
    %v1595 = vand.u32 2147483647, %v1594
    %v1597 = vcvt.s32.f32 %v1590
    %v1598 = vmul.f32 %v1597, %v1595
    %v1599 = vxor.u32 %v1598, 2147483648
    %v1600 = vsel %vm1517, %v1599, %v1598
    %v1601 = vsub.s32 4, %v1577
    %v1602 = vsel %vm1517, %v1601, %v1577
    %v1603 = vsel %vm1516, %v1514, %v1600
    %v1604 = vsel %vm1516, 0, %v1602
    %v1605 = vcosq.f32.pop %v1603
    %v1606 = vsinq.f32.pop %v1603
    %vm1607 = vweird.f32 %v1514
    %v1608 = vand.u32 %v1604, 3
    %vm1609 = vcmp.lt.s32.totalorder %v1608, 2
    %vm1610 = vcmp.eq.s32.totalorder %v1608, 0
    %v1611 = vxor.u32 %v1606, 2147483648
    %v1612 = vsel %vm1610, %v1605, %v1611
    %vm1613 = vcmp.eq.s32.totalorder %v1608, 2
    %v1614 = vxor.u32 %v1605, 2147483648
    %v1615 = vsel %vm1613, %v1614, %v1606
    %v1616 = vsel %vm1609, %v1612, %v1615
    %v1617 = vsel %vm1607, nan, %v1616
    %v1618 = vand.u32 2147483647, %v1514
    %vm1619 = vcmp.le.f32.partialorder %v1618, 0.7853982
    %vm1620 = vcmp.lt.s32.totalorder %v1514, 0
    %v1621 = vand.u32 %v1514, 2139095040
    %v1622 = vshrl.u32 %v1621, 23
    %v1623 = vsub.s32 %v1622, 127
    %v1624 = vand.u32 2147483647, %v1514
    %v1625 = vand.u32 %v1624, 8388607
    %v1626 = vor.u32 %v1625, 8388608
    %v1627 = vsub.s32 0, %v1626
    %v1628 = vadd.s32 %v1623, 1
    %vm1629 = vcmp.gt.s32.totalorder %v1628, 0
    %v1630 = vsel %vm1629, %v1628, 0
    %v1631 = vshrl.u32 %v1630, 5
    %v1632 = vand.u32 %v1630, 31
    %v1633 = vsub.s32 32, %v1632
    %v1634 = vshrl.u32 683565275, %v1633
    %v1635 = vshll.u32 683565275, %v1632
    %v1636 = vshrl.u32 2475754826, %v1633
    %v1637 = vor.u32 %v1635, %v1636
    %v1638 = vshll.u32 2475754826, %v1632
    %v1639 = vshrl.u32 2131351028, %v1633
    %v1640 = vor.u32 %v1638, %v1639
    %v1641 = vshll.u32 2131351028, %v1632
    %v1642 = vshrl.u32 2102212464, %v1633
    %v1643 = vor.u32 %v1641, %v1642
    %v1644 = vshll.u32 2102212464, %v1632
    %v1645 = vshrl.u32 920167782, %v1633
    %v1646 = vor.u32 %v1644, %v1645
    %v1647 = vshll.u32 920167782, %v1632
    %v1648 = vshrl.u32 1326507024, %v1633
    %v1649 = vor.u32 %v1647, %v1648
    %vm1650 = vcmp.lt.s32.totalorder %v1631, 1
    %vm1651 = vcmp.lt.s32.totalorder %v1631, 2
    %vm1652 = vcmp.lt.s32.totalorder %v1631, 3
    %vm1653 = vcmp.lt.s32.totalorder %v1631, 4
    %v1654 = vsel %vm1650, %v1634, %v1637
    %v1655 = vsel %vm1653, %v1643, 2102212464
    %v1656 = vsel %vm1652, %v1640, %v1655
    %v1657 = vsel %vm1651, %v1654, %v1656
    %v1658 = vsel %vm1650, %v1637, %v1640
    %v1659 = vsel %vm1653, %v1646, 920167782
    %v1660 = vsel %vm1652, %v1643, %v1659
    %v1661 = vsel %vm1651, %v1658, %v1660
    %v1662 = vsel %vm1650, %v1640, %v1643
    %v1663 = vsel %vm1653, %v1649, 1326507024
    %v1664 = vsel %vm1652, %v1646, %v1663
    %v1665 = vsel %vm1651, %v1662, %v1664
    %v1666 = vshll.u32 %v1626, 8
    %v1667 = vmul.u32.u64.compose %v1666, %v1665
    %v1668 = vextract.low.u32 %v1667
    %v1669 = vextract.high.u32 %v1667
    %v1670 = vmul.u32.u64.compose %v1666, %v1661
    %v1671 = vextract.low.u32 %v1670
    %v1672 = vextract.high.u32 %v1670
    %v1673 = vmul.u32 %v1666, %v1657
    %v1674 = vadd.s32 %v1669, %v1671
    %vm1675 = vc.u32 %v1669, %v1671
    %v1676 = vadd.s32 %v1672, 1
    %v1677 = vsel %vm1675, %v1676, %v1672
    %v1678 = vadd.s32 %v1673, %v1677
    %v1679 = vadd.s32 %v1678, 536870912
    %v1680 = vshrl.u32 %v1679, 30
    %v1681 = vshll.u32 %v1680, 30
    %v1682 = vsub.s32 %v1678, %v1681
    %vm1683 = vcmp.lt.s32.totalorder %v1682, 0
    %v1684 = vsub.s32 0, %v1682
    %v1685 = vsel %vm1683, %v1684, %v1682
    %v1686 = vclz %v1685
    %v1687 = vsub.s32 %v1686, 2
    %vm1688 = vcmp.gt.s32.totalorder 0, %v1687
    %v1689 = vsel %vm1688, 0, %v1687
    %v1690 = vsub.s32 32, %v1689
    %v1691 = vshll.u32 %v1682, %v1689
    %v1692 = vshrl.u32 %v1674, %v1690
    %v1693 = vor.u32 %v1691, %v1692
    %v1694 = vsub.s32 4294967266, %v1689
    %v1695 = vadd.s32 %v1694, 127
    %v1696 = vshll.u32 %v1695, 23
    %v1697 = vor.u32 4788187, %v1696
    %v1698 = vand.u32 2147483647, %v1697
    %v1700 = vcvt.s32.f32 %v1693
    %v1701 = vmul.f32 %v1700, %v1698
    %v1702 = vxor.u32 %v1701, 2147483648
    %v1703 = vsel %vm1620, %v1702, %v1701
    %v1704 = vsub.s32 4, %v1680
    %v1705 = vsel %vm1620, %v1704, %v1680
    %v1706 = vsel %vm1619, %v1514, %v1703
    %v1707 = vsel %vm1619, 0, %v1705
    %v1708 = vcosq.f32.pop %v1706
    %v1709 = vsinq.f32.pop %v1706
    %vm1710 = vweird.f32 %v1514
    %v1711 = vadd.s32 %v1707, 3
    %v1712 = vand.u32 %v1711, 3
    %vm1713 = vcmp.lt.s32.totalorder %v1712, 2
    %vm1714 = vcmp.eq.s32.totalorder %v1712, 0
    %v1715 = vxor.u32 %v1709, 2147483648
    %v1716 = vsel %vm1714, %v1708, %v1715
    %vm1717 = vcmp.eq.s32.totalorder %v1712, 2
    %v1718 = vxor.u32 %v1708, 2147483648
    %v1719 = vsel %vm1717, %v1718, %v1709
    %v1720 = vsel %vm1713, %v1716, %v1719
    %v1721 = vsel %vm1710, nan, %v1720
    %v1722 = vsub.f32 0.0, %v1721
    %v1723 = vadd.f32 %v1617, 0.0
    %v1724 = vmul.f32 %v1723, 0.70710677
    %v1725 = vadd.f32 %v1722, 0.0
    %v1726 = vmul.f32 %v1725, 0.70710677
    %v1727 = vmul.f32 %v1617, 0.70710677
    %v1728 = vsub.f32 0.0, %v1722
    %v1729 = vmul.f32 %v1728, 0.70710677
    %v1730 = vmul.f32 %v1511, %v1511
    %v1731 = vadd.f32 %v1730, 1.0
    %v1732 = vrsqrt.pop %v1731
    %v1733 = vadd.f32 %v1732, 1.0
    %v1734 = vmul.f32 %v1733, 0.5
    %v1735 = vrsqrt.pop %v1734
    %v1736 = vmul.f32 %v1734, %v1735
    %vm1737 = vcmp.eq.f32.partialorder %v1734, inf
    %v1738 = vsel %vm1737, %v1734, %v1736
    %vm1739 = vcmp.eq.f32.partialorder %v1734, 0.0
    %v1740 = vand.u32 %v1734, 2147483648
    %v1741 = vsel %vm1739, %v1740, %v1738
    %v1742 = vmul.f32 %v1514, %v1732
    %v1743 = vrcp.pop %v1741
    %v1744 = vmul.f32 %v1742, %v1743
    %v1745 = vlaneseq
    %v1746 = vshrl.u32 %v1745, 7
    %v1747 = vsub.s32 0, %v1746
    %v1748 = vrot.slane %v1741, %v1747
    %v1749 = vmul.f32 %v1748, %v1724
    %v1750 = vlaneseq
    %v1751 = vshrl.u32 %v1750, 7
    %v1752 = vsub.s32 0, %v1751
    %v1753 = vrot.slane %v1744, %v1752
    %v1754 = vmul.f32 %v1753, %v1727
    %v1755 = vsub.f32 %v1749, %v1754
    %v1756 = vmul.f32 %v1748, %v1726
    %v1757 = vmul.f32 %v1753, %v1729
    %v1758 = vsub.f32 %v1756, %v1757
    %v1759 = vmul.f32 %v1753, %v1724
    %v1760 = vmul.f32 %v1748, %v1727
    %v1761 = vadd.f32 %v1759, %v1760
    %v1762 = vmul.f32 %v1753, %v1726
    %v1763 = vmul.f32 %v1748, %v1729
    %v1764 = vadd.f32 %v1762, %v1763
    %v1765 = vmul.f32 %v1748, %v1755
    %v1766 = vmul.f32 %v1753, %v1758
    %v1767 = vadd.f32 %v1765, %v1766
    %v1768 = vmul.f32 %v1748, %v1758
    %v1769 = vmul.f32 %v1753, %v1755
    %v1770 = vsub.f32 %v1768, %v1769
    %v1771 = vmul.f32 %v1748, %v1761
    %v1772 = vmul.f32 %v1753, %v1764
    %v1773 = vsub.f32 %v1771, %v1772
    %v1774 = vmul.f32 %v1748, %v1764
    %v1775 = vmul.f32 %v1753, %v1761
    %v1776 = vadd.f32 %v1774, %v1775
    %v1777 = vmul.f32 %v1767, %v1767
    %v1778 = vmul.f32 %v1770, %v1770
    %v1779 = vadd.f32 %v1777, %v1778
    %v1780 = vmul.f32 %v1773, %v1773
    %v1781 = vsub.f32 %v1779, %v1780
    %v1782 = vmul.f32 %v1776, %v1776
    %v1783 = vsub.f32 %v1781, %v1782
    %v1784 = vmul.f32 %v1767, %v1773
    %v1785 = vmul.f32 %v1770, %v1776
    %v1786 = vadd.f32 %v1784, %v1785
    %v1787 = vmul.f32 %v1767, %v1776
    %v1788 = vmul.f32 %v1770, %v1773
    %v1789 = vsub.f32 %v1787, %v1788
    %1791 = vrot.lane.b32.xlu0 %v1786, 4
    %v1792 = vpop.permute.xlu0 %1791
    %1795 = vrot.lane.b32.xlu0 %v1789, 8
    %v1796 = vpop.permute.xlu0 %1795
    %v1798 = vsel %vm397, %v1783, %v1792
    %v1799 = vsel %vm399, %v1798, %v1796
    %v1801 = vsel %vm407, %v1799, 0
    %1803 = vmatprep.subr.mxu0 0.0
    %1804 = vmatpush1.msra.mxu0 %v35
    %1805 = vmatprep.subr.mxu0 0.0
    %1806 = vmatpush1.msra.mxu0 %v413
    %1807 = vmatprep.subr.mxu0 0.0
    %1808 = vmatpush1.msra.mxu0 0.0
    %1809 = vmatprep.subr.mxu0 0.0
    %1810 = vmatpush1.msra.mxu0 0.0
    %1811 = vmatprep.subr.mxu0 0.0
    %1812 = vmatpush1.msra.mxu0 0.0
    %1813 = vmatprep.subr.mxu0 0.0
    %1814 = vmatpush1.msra.mxu0 0.0
    %1815 = vmatprep.subr.mxu0 0.0
    %1816 = vmatpush1.msra.mxu0 0.0
    %1817 = vmatprep.subr.mxu0 0.0
    %1818 = vmatpush1.msra.mxu0 0.0
    %1819 = vmatprep.subr.mxu0 0.0
    %1820 = vmatpush1.msra.mxu0 0.0
    %1821 = vmatprep.subr.mxu0 0.0
    %1822 = vmatpush1.msra.mxu0 0.0
    %1823 = vmatprep.subr.mxu0 0.0
    %1824 = vmatpush1.msra.mxu0 0.0
    %1825 = vmatprep.subr.mxu0 0.0
    %1826 = vmatpush1.msra.mxu0 0.0
    %1827 = vmatprep.subr.mxu0 0.0
    %1828 = vmatpush1.msra.mxu0 0.0
    %1829 = vmatprep.subr.mxu0 0.0
    %1830 = vmatpush1.msra.mxu0 0.0
    %1831 = vmatprep.subr.mxu0 0.0
    %1832 = vmatpush1.msra.mxu0 0.0
    %1833 = vmatprep.subr.mxu0 0.0
    %1834 = vmatpush1.msra.mxu0 0.0
    %1835 = vmatprep.subr.mxu0 0.0
    %1836 = vmatpush1.msra.mxu0 0.0
    %1837 = vmatprep.subr.mxu0 0.0
    %1838 = vmatpush1.msra.mxu0 0.0
    %1839 = vmatprep.subr.mxu0 0.0
    %1840 = vmatpush1.msra.mxu0 0.0
    %1841 = vmatprep.subr.mxu0 0.0
    %1842 = vmatpush1.msra.mxu0 0.0
    %1843 = vmatprep.subr.mxu0 0.0
    %1844 = vmatpush1.msra.mxu0 0.0
    %1845 = vmatprep.subr.mxu0 0.0
    %1846 = vmatpush1.msra.mxu0 0.0
    %1847 = vmatprep.subr.mxu0 0.0
    %1848 = vmatpush1.msra.mxu0 0.0
    %1849 = vmatprep.subr.mxu0 0.0
    %1850 = vmatpush1.msra.mxu0 0.0
    %1851 = vmatprep.subr.mxu0 0.0
    %1852 = vmatpush1.msra.mxu0 0.0
    %1853 = vmatprep.subr.mxu0 0.0
    %1854 = vmatpush1.msra.mxu0 0.0
    %1855 = vmatprep.subr.mxu0 0.0
    %1856 = vmatpush1.msra.mxu0 0.0
    %1857 = vmatprep.subr.mxu0 0.0
    %1858 = vmatpush1.msra.mxu0 0.0
    %1859 = vmatprep.subr.mxu0 0.0
    %1860 = vmatpush1.msra.mxu0 0.0
    %1861 = vmatprep.subr.mxu0 0.0
    %1862 = vmatpush1.msra.mxu0 0.0
    %1863 = vmatprep.subr.mxu0 0.0
    %1864 = vmatpush1.msra.mxu0 0.0
    %1865 = vmatprep.subr.mxu0 0.0
    %1866 = vmatpush1.msra.mxu0 0.0
    %1867 = vmatprep.mubr.f32.mxu0 0.0
    %1868 = vmatmul.mubr.f32.gmra.mrb[0].mxu0 %v1801
    %v1869 = vpop.f32.mrb[0].mxu0
    %v1870 = vadd.f32 %v405, %v1869
    %v1871 = vpop.f32.mrb[0].mxu0
    %1872 = vdwg.mxu0
    %v1873 = vxor.u32 %v1870, 2147483648
    %v1874 = vmul.f32 %v1873, 1.442695
    %v1875 = vpow.pop %v1874
    %v1876 = vadd.f32 %v1875, 1.0
    %v1877 = vrcp.pop %v1876
    %v1878 = vmul.f32 1.0, %v1877
    %v1879 = vtanh.pop %v1870
    %v1880 = vmul.f32 %v1878, %v1427
    %1882 = vrot.lane.b32.xlu0 %v1879, 96
    %v1883 = vpop.permute.xlu0 %1882
    %v1885 = vmul.f32 %v1878, %v1883
    %1887 = vrot.lane.b32.xlu0 %v1885, 96
    %v1888 = vpop.permute.xlu0 %1887
    %v1890 = vadd.f32 %v1880, %v1888
    %v1891 = vtanh.pop %v1890
    %1893 = vrot.lane.b32.xlu0 %v1891, 96
    %v1894 = vpop.permute.xlu0 %1893
    %v1896 = vmul.f32 %v1878, %v1894
    %1898 = vrot.lane.b32.xlu0 %v1896, 32
    %v1899 = vpop.permute.xlu0 %1898
    %s1901 = scalar_lea.vmem [#allocation4], 24
    %1902 = vst.msk [vmem:[%s1901] sm:$0xff] %vm39, %v1899
    %s1903 = scalar_lea.vmem %s0, 32
    %v1904 = vld [vmem:[%s1903] sm:$0xff]
    %v1905 = vsel %vm39, %v1899, 0
    %1907 = vmatprep.subr.mxu0 0.0
    %1908 = vmatpush1.msra.mxu0 %v31
    %1909 = vmatprep.subr.mxu0 0.0
    %1910 = vmatpush1.msra.mxu0 %v32
    %1911 = vmatprep.subr.mxu0 0.0
    %1912 = vmatpush1.msra.mxu0 %v33
    %1913 = vmatprep.subr.mxu0 0.0
    %1914 = vmatpush1.msra.mxu0 %v34
    %1915 = vmatprep.subr.mxu0 0.0
    %1916 = vmatpush1.msra.mxu0 0.0
    %1917 = vmatprep.subr.mxu0 0.0
    %1918 = vmatpush1.msra.mxu0 0.0
    %1919 = vmatprep.subr.mxu0 0.0
    %1920 = vmatpush1.msra.mxu0 0.0
    %1921 = vmatprep.subr.mxu0 0.0
    %1922 = vmatpush1.msra.mxu0 0.0
    %1923 = vmatprep.subr.mxu0 0.0
    %1924 = vmatpush1.msra.mxu0 0.0
    %1925 = vmatprep.subr.mxu0 0.0
    %1926 = vmatpush1.msra.mxu0 0.0
    %1927 = vmatprep.subr.mxu0 0.0
    %1928 = vmatpush1.msra.mxu0 0.0
    %1929 = vmatprep.subr.mxu0 0.0
    %1930 = vmatpush1.msra.mxu0 0.0
    %1931 = vmatprep.subr.mxu0 0.0
    %1932 = vmatpush1.msra.mxu0 0.0
    %1933 = vmatprep.subr.mxu0 0.0
    %1934 = vmatpush1.msra.mxu0 0.0
    %1935 = vmatprep.subr.mxu0 0.0
    %1936 = vmatpush1.msra.mxu0 0.0
    %1937 = vmatprep.subr.mxu0 0.0
    %1938 = vmatpush1.msra.mxu0 0.0
    %1939 = vmatprep.subr.mxu0 0.0
    %1940 = vmatpush1.msra.mxu0 0.0
    %1941 = vmatprep.subr.mxu0 0.0
    %1942 = vmatpush1.msra.mxu0 0.0
    %1943 = vmatprep.subr.mxu0 0.0
    %1944 = vmatpush1.msra.mxu0 0.0
    %1945 = vmatprep.subr.mxu0 0.0
    %1946 = vmatpush1.msra.mxu0 0.0
    %1947 = vmatprep.subr.mxu0 0.0
    %1948 = vmatpush1.msra.mxu0 0.0
    %1949 = vmatprep.subr.mxu0 0.0
    %1950 = vmatpush1.msra.mxu0 0.0
    %1951 = vmatprep.subr.mxu0 0.0
    %1952 = vmatpush1.msra.mxu0 0.0
    %1953 = vmatprep.subr.mxu0 0.0
    %1954 = vmatpush1.msra.mxu0 0.0
    %1955 = vmatprep.subr.mxu0 0.0
    %1956 = vmatpush1.msra.mxu0 0.0
    %1957 = vmatprep.subr.mxu0 0.0
    %1958 = vmatpush1.msra.mxu0 0.0
    %1959 = vmatprep.subr.mxu0 0.0
    %1960 = vmatpush1.msra.mxu0 0.0
    %1961 = vmatprep.subr.mxu0 0.0
    %1962 = vmatpush1.msra.mxu0 0.0
    %1963 = vmatprep.subr.mxu0 0.0
    %1964 = vmatpush1.msra.mxu0 0.0
    %1965 = vmatprep.subr.mxu0 0.0
    %1966 = vmatpush1.msra.mxu0 0.0
    %1967 = vmatprep.subr.mxu0 0.0
    %1968 = vmatpush1.msra.mxu0 0.0
    %1969 = vmatprep.subr.mxu0 0.0
    %1970 = vmatpush1.msra.mxu0 0.0
    %1971 = vmatprep.mubr.f32.mxu0 0.0
    %1972 = vmatmul.mubr.f32.gmra.mrb[0].mxu0 %v1905
    %v1973 = vpop.f32.mrb[0].mxu0
    %v1974 = vadd.f32 %v1904, %v1973
    %v1975 = vpop.f32.mrb[0].mxu0
    %1976 = vdwg.mxu0
    %v1977 = vmul.f32 %v1974, 0.5
    %v1978 = vand.u32 2147483647, %v1977
    %vm1979 = vcmp.le.f32.partialorder %v1978, 0.7853982
    %vm1980 = vcmp.lt.s32.totalorder %v1977, 0
    %v1981 = vand.u32 %v1977, 2139095040
    %v1982 = vshrl.u32 %v1981, 23
    %v1983 = vsub.s32 %v1982, 127
    %v1984 = vand.u32 2147483647, %v1977
    %v1985 = vand.u32 %v1984, 8388607
    %v1986 = vor.u32 %v1985, 8388608
    %v1987 = vsub.s32 0, %v1986
    %v1988 = vadd.s32 %v1983, 1
    %vm1989 = vcmp.gt.s32.totalorder %v1988, 0
    %v1990 = vsel %vm1989, %v1988, 0
    %v1991 = vshrl.u32 %v1990, 5
    %v1992 = vand.u32 %v1990, 31
    %v1993 = vsub.s32 32, %v1992
    %v1994 = vshrl.u32 683565275, %v1993
    %v1995 = vshll.u32 683565275, %v1992
    %v1996 = vshrl.u32 2475754826, %v1993
    %v1997 = vor.u32 %v1995, %v1996
    %v1998 = vshll.u32 2475754826, %v1992
    %v1999 = vshrl.u32 2131351028, %v1993
    %v2000 = vor.u32 %v1998, %v1999
    %v2001 = vshll.u32 2131351028, %v1992
    %v2002 = vshrl.u32 2102212464, %v1993
    %v2003 = vor.u32 %v2001, %v2002
    %v2004 = vshll.u32 2102212464, %v1992
    %v2005 = vshrl.u32 920167782, %v1993
    %v2006 = vor.u32 %v2004, %v2005
    %v2007 = vshll.u32 920167782, %v1992
    %v2008 = vshrl.u32 1326507024, %v1993
    %v2009 = vor.u32 %v2007, %v2008
    %vm2010 = vcmp.lt.s32.totalorder %v1991, 1
    %vm2011 = vcmp.lt.s32.totalorder %v1991, 2
    %vm2012 = vcmp.lt.s32.totalorder %v1991, 3
    %vm2013 = vcmp.lt.s32.totalorder %v1991, 4
    %v2014 = vsel %vm2010, %v1994, %v1997
    %v2015 = vsel %vm2013, %v2003, 2102212464
    %v2016 = vsel %vm2012, %v2000, %v2015
    %v2017 = vsel %vm2011, %v2014, %v2016
    %v2018 = vsel %vm2010, %v1997, %v2000
    %v2019 = vsel %vm2013, %v2006, 920167782
    %v2020 = vsel %vm2012, %v2003, %v2019
    %v2021 = vsel %vm2011, %v2018, %v2020
    %v2022 = vsel %vm2010, %v2000, %v2003
    %v2023 = vsel %vm2013, %v2009, 1326507024
    %v2024 = vsel %vm2012, %v2006, %v2023
    %v2025 = vsel %vm2011, %v2022, %v2024
    %v2026 = vshll.u32 %v1986, 8
    %v2027 = vmul.u32.u64.compose %v2026, %v2025
    %v2028 = vextract.low.u32 %v2027
    %v2029 = vextract.high.u32 %v2027
    %v2030 = vmul.u32.u64.compose %v2026, %v2021
    %v2031 = vextract.low.u32 %v2030
    %v2032 = vextract.high.u32 %v2030
    %v2033 = vmul.u32 %v2026, %v2017
    %v2034 = vadd.s32 %v2029, %v2031
    %vm2035 = vc.u32 %v2029, %v2031
    %v2036 = vadd.s32 %v2032, 1
    %v2037 = vsel %vm2035, %v2036, %v2032
    %v2038 = vadd.s32 %v2033, %v2037
    %v2039 = vadd.s32 %v2038, 536870912
    %v2040 = vshrl.u32 %v2039, 30
    %v2041 = vshll.u32 %v2040, 30
    %v2042 = vsub.s32 %v2038, %v2041
    %vm2043 = vcmp.lt.s32.totalorder %v2042, 0
    %v2044 = vsub.s32 0, %v2042
    %v2045 = vsel %vm2043, %v2044, %v2042
    %v2046 = vclz %v2045
    %v2047 = vsub.s32 %v2046, 2
    %vm2048 = vcmp.gt.s32.totalorder 0, %v2047
    %v2049 = vsel %vm2048, 0, %v2047
    %v2050 = vsub.s32 32, %v2049
    %v2051 = vshll.u32 %v2042, %v2049
    %v2052 = vshrl.u32 %v2034, %v2050
    %v2053 = vor.u32 %v2051, %v2052
    %v2054 = vsub.s32 4294967266, %v2049
    %v2055 = vadd.s32 %v2054, 127
    %v2056 = vshll.u32 %v2055, 23
    %v2057 = vor.u32 4788187, %v2056
    %v2058 = vand.u32 2147483647, %v2057
    %v2060 = vcvt.s32.f32 %v2053
    %v2061 = vmul.f32 %v2060, %v2058
    %v2062 = vxor.u32 %v2061, 2147483648
    %v2063 = vsel %vm1980, %v2062, %v2061
    %v2064 = vsub.s32 4, %v2040
    %v2065 = vsel %vm1980, %v2064, %v2040
    %v2066 = vsel %vm1979, %v1977, %v2063
    %v2067 = vsel %vm1979, 0, %v2065
    %v2068 = vcosq.f32.pop %v2066
    %v2069 = vsinq.f32.pop %v2066
    %vm2070 = vweird.f32 %v1977
    %v2071 = vand.u32 %v2067, 3
    %vm2072 = vcmp.lt.s32.totalorder %v2071, 2
    %vm2073 = vcmp.eq.s32.totalorder %v2071, 0
    %v2074 = vxor.u32 %v2069, 2147483648
    %v2075 = vsel %vm2073, %v2068, %v2074
    %vm2076 = vcmp.eq.s32.totalorder %v2071, 2
    %v2077 = vxor.u32 %v2068, 2147483648
    %v2078 = vsel %vm2076, %v2077, %v2069
    %v2079 = vsel %vm2072, %v2075, %v2078
    %v2080 = vsel %vm2070, nan, %v2079
    %v2081 = vand.u32 2147483647, %v1977
    %vm2082 = vcmp.le.f32.partialorder %v2081, 0.7853982
    %vm2083 = vcmp.lt.s32.totalorder %v1977, 0
    %v2084 = vand.u32 %v1977, 2139095040
    %v2085 = vshrl.u32 %v2084, 23
    %v2086 = vsub.s32 %v2085, 127
    %v2087 = vand.u32 2147483647, %v1977
    %v2088 = vand.u32 %v2087, 8388607
    %v2089 = vor.u32 %v2088, 8388608
    %v2090 = vsub.s32 0, %v2089
    %v2091 = vadd.s32 %v2086, 1
    %vm2092 = vcmp.gt.s32.totalorder %v2091, 0
    %v2093 = vsel %vm2092, %v2091, 0
    %v2094 = vshrl.u32 %v2093, 5
    %v2095 = vand.u32 %v2093, 31
    %v2096 = vsub.s32 32, %v2095
    %v2097 = vshrl.u32 683565275, %v2096
    %v2098 = vshll.u32 683565275, %v2095
    %v2099 = vshrl.u32 2475754826, %v2096
    %v2100 = vor.u32 %v2098, %v2099
    %v2101 = vshll.u32 2475754826, %v2095
    %v2102 = vshrl.u32 2131351028, %v2096
    %v2103 = vor.u32 %v2101, %v2102
    %v2104 = vshll.u32 2131351028, %v2095
    %v2105 = vshrl.u32 2102212464, %v2096
    %v2106 = vor.u32 %v2104, %v2105
    %v2107 = vshll.u32 2102212464, %v2095
    %v2108 = vshrl.u32 920167782, %v2096
    %v2109 = vor.u32 %v2107, %v2108
    %v2110 = vshll.u32 920167782, %v2095
    %v2111 = vshrl.u32 1326507024, %v2096
    %v2112 = vor.u32 %v2110, %v2111
    %vm2113 = vcmp.lt.s32.totalorder %v2094, 1
    %vm2114 = vcmp.lt.s32.totalorder %v2094, 2
    %vm2115 = vcmp.lt.s32.totalorder %v2094, 3
    %vm2116 = vcmp.lt.s32.totalorder %v2094, 4
    %v2117 = vsel %vm2113, %v2097, %v2100
    %v2118 = vsel %vm2116, %v2106, 2102212464
    %v2119 = vsel %vm2115, %v2103, %v2118
    %v2120 = vsel %vm2114, %v2117, %v2119
    %v2121 = vsel %vm2113, %v2100, %v2103
    %v2122 = vsel %vm2116, %v2109, 920167782
    %v2123 = vsel %vm2115, %v2106, %v2122
    %v2124 = vsel %vm2114, %v2121, %v2123
    %v2125 = vsel %vm2113, %v2103, %v2106
    %v2126 = vsel %vm2116, %v2112, 1326507024
    %v2127 = vsel %vm2115, %v2109, %v2126
    %v2128 = vsel %vm2114, %v2125, %v2127
    %v2129 = vshll.u32 %v2089, 8
    %v2130 = vmul.u32.u64.compose %v2129, %v2128
    %v2131 = vextract.low.u32 %v2130
    %v2132 = vextract.high.u32 %v2130
    %v2133 = vmul.u32.u64.compose %v2129, %v2124
    %v2134 = vextract.low.u32 %v2133
    %v2135 = vextract.high.u32 %v2133
    %v2136 = vmul.u32 %v2129, %v2120
    %v2137 = vadd.s32 %v2132, %v2134
    %vm2138 = vc.u32 %v2132, %v2134
    %v2139 = vadd.s32 %v2135, 1
    %v2140 = vsel %vm2138, %v2139, %v2135
    %v2141 = vadd.s32 %v2136, %v2140
    %v2142 = vadd.s32 %v2141, 536870912
    %v2143 = vshrl.u32 %v2142, 30
    %v2144 = vshll.u32 %v2143, 30
    %v2145 = vsub.s32 %v2141, %v2144
    %vm2146 = vcmp.lt.s32.totalorder %v2145, 0
    %v2147 = vsub.s32 0, %v2145
    %v2148 = vsel %vm2146, %v2147, %v2145
    %v2149 = vclz %v2148
    %v2150 = vsub.s32 %v2149, 2
    %vm2151 = vcmp.gt.s32.totalorder 0, %v2150
    %v2152 = vsel %vm2151, 0, %v2150
    %v2153 = vsub.s32 32, %v2152
    %v2154 = vshll.u32 %v2145, %v2152
    %v2155 = vshrl.u32 %v2137, %v2153
    %v2156 = vor.u32 %v2154, %v2155
    %v2157 = vsub.s32 4294967266, %v2152
    %v2158 = vadd.s32 %v2157, 127
    %v2159 = vshll.u32 %v2158, 23
    %v2160 = vor.u32 4788187, %v2159
    %v2161 = vand.u32 2147483647, %v2160
    %v2163 = vcvt.s32.f32 %v2156
    %v2164 = vmul.f32 %v2163, %v2161
    %v2165 = vxor.u32 %v2164, 2147483648
    %v2166 = vsel %vm2083, %v2165, %v2164
    %v2167 = vsub.s32 4, %v2143
    %v2168 = vsel %vm2083, %v2167, %v2143
    %v2169 = vsel %vm2082, %v1977, %v2166
    %v2170 = vsel %vm2082, 0, %v2168
    %v2171 = vcosq.f32.pop %v2169
    %v2172 = vsinq.f32.pop %v2169
    %vm2173 = vweird.f32 %v1977
    %v2174 = vadd.s32 %v2170, 3
    %v2175 = vand.u32 %v2174, 3
    %vm2176 = vcmp.lt.s32.totalorder %v2175, 2
    %vm2177 = vcmp.eq.s32.totalorder %v2175, 0
    %v2178 = vxor.u32 %v2172, 2147483648
    %v2179 = vsel %vm2177, %v2171, %v2178
    %vm2180 = vcmp.eq.s32.totalorder %v2175, 2
    %v2181 = vxor.u32 %v2171, 2147483648
    %v2182 = vsel %vm2180, %v2181, %v2172
    %v2183 = vsel %vm2176, %v2179, %v2182
    %v2184 = vsel %vm2173, nan, %v2183
    %v2185 = vsub.f32 0.0, %v2184
    %v2186 = vadd.f32 %v2080, 0.0
    %v2187 = vmul.f32 %v2186, 0.70710677
    %v2188 = vadd.f32 %v2185, 0.0
    %v2189 = vmul.f32 %v2188, 0.70710677
    %v2190 = vmul.f32 %v2080, 0.70710677
    %v2191 = vsub.f32 0.0, %v2185
    %v2192 = vmul.f32 %v2191, 0.70710677
    %v2193 = vmul.f32 %v1974, %v1974
    %v2194 = vadd.f32 %v2193, 1.0
    %v2195 = vrsqrt.pop %v2194
    %v2196 = vadd.f32 %v2195, 1.0
    %v2197 = vmul.f32 %v2196, 0.5
    %v2198 = vrsqrt.pop %v2197
    %v2199 = vmul.f32 %v2197, %v2198
    %vm2200 = vcmp.eq.f32.partialorder %v2197, inf
    %v2201 = vsel %vm2200, %v2197, %v2199
    %vm2202 = vcmp.eq.f32.partialorder %v2197, 0.0
    %v2203 = vand.u32 %v2197, 2147483648
    %v2204 = vsel %vm2202, %v2203, %v2201
    %v2205 = vmul.f32 %v1977, %v2195
    %v2206 = vrcp.pop %v2204
    %v2207 = vmul.f32 %v2205, %v2206
    %v2208 = vlaneseq
    %v2209 = vshrl.u32 %v2208, 7
    %v2210 = vsub.s32 0, %v2209
    %v2211 = vrot.slane %v2204, %v2210
    %v2212 = vmul.f32 %v2211, %v2187
    %v2213 = vlaneseq
    %v2214 = vshrl.u32 %v2213, 7
    %v2215 = vsub.s32 0, %v2214
    %v2216 = vrot.slane %v2207, %v2215
    %v2217 = vmul.f32 %v2216, %v2190
    %v2218 = vsub.f32 %v2212, %v2217
    %v2219 = vmul.f32 %v2211, %v2189
    %v2220 = vmul.f32 %v2216, %v2192
    %v2221 = vsub.f32 %v2219, %v2220
    %v2222 = vmul.f32 %v2216, %v2187
    %v2223 = vmul.f32 %v2211, %v2190
    %v2224 = vadd.f32 %v2222, %v2223
    %v2225 = vmul.f32 %v2216, %v2189
    %v2226 = vmul.f32 %v2211, %v2192
    %v2227 = vadd.f32 %v2225, %v2226
    %v2228 = vmul.f32 %v2211, %v2218
    %v2229 = vmul.f32 %v2216, %v2221
    %v2230 = vadd.f32 %v2228, %v2229
    %v2231 = vmul.f32 %v2211, %v2221
    %v2232 = vmul.f32 %v2216, %v2218
    %v2233 = vsub.f32 %v2231, %v2232
    %v2234 = vmul.f32 %v2211, %v2224
    %v2235 = vmul.f32 %v2216, %v2227
    %v2236 = vsub.f32 %v2234, %v2235
    %v2237 = vmul.f32 %v2211, %v2227
    %v2238 = vmul.f32 %v2216, %v2224
    %v2239 = vadd.f32 %v2237, %v2238
    %v2240 = vmul.f32 %v2230, %v2230
    %v2241 = vmul.f32 %v2233, %v2233
    %v2242 = vadd.f32 %v2240, %v2241
    %v2243 = vmul.f32 %v2236, %v2236
    %v2244 = vsub.f32 %v2242, %v2243
    %v2245 = vmul.f32 %v2239, %v2239
    %v2246 = vsub.f32 %v2244, %v2245
    %v2247 = vmul.f32 %v2230, %v2236
    %v2248 = vmul.f32 %v2233, %v2239
    %v2249 = vadd.f32 %v2247, %v2248
    %v2250 = vmul.f32 %v2230, %v2239
    %v2251 = vmul.f32 %v2233, %v2236
    %v2252 = vsub.f32 %v2250, %v2251
    %2254 = vrot.lane.b32.xlu0 %v2249, 4
    %v2255 = vpop.permute.xlu0 %2254
    %2258 = vrot.lane.b32.xlu0 %v2252, 8
    %v2259 = vpop.permute.xlu0 %2258
    %v2261 = vsel %vm397, %v2246, %v2255
    %v2262 = vsel %vm399, %v2261, %v2259
    %v2264 = vsel %vm407, %v2262, 0
    %2266 = vmatprep.subr.mxu0 0.0
    %2267 = vmatpush1.msra.mxu0 %v35
    %2268 = vmatprep.subr.mxu0 0.0
    %2269 = vmatpush1.msra.mxu0 %v413
    %2270 = vmatprep.subr.mxu0 0.0
    %2271 = vmatpush1.msra.mxu0 0.0
    %2272 = vmatprep.subr.mxu0 0.0
    %2273 = vmatpush1.msra.mxu0 0.0
    %2274 = vmatprep.subr.mxu0 0.0
    %2275 = vmatpush1.msra.mxu0 0.0
    %2276 = vmatprep.subr.mxu0 0.0
    %2277 = vmatpush1.msra.mxu0 0.0
    %2278 = vmatprep.subr.mxu0 0.0
    %2279 = vmatpush1.msra.mxu0 0.0
    %2280 = vmatprep.subr.mxu0 0.0
    %2281 = vmatpush1.msra.mxu0 0.0
    %2282 = vmatprep.subr.mxu0 0.0
    %2283 = vmatpush1.msra.mxu0 0.0
    %2284 = vmatprep.subr.mxu0 0.0
    %2285 = vmatpush1.msra.mxu0 0.0
    %2286 = vmatprep.subr.mxu0 0.0
    %2287 = vmatpush1.msra.mxu0 0.0
    %2288 = vmatprep.subr.mxu0 0.0
    %2289 = vmatpush1.msra.mxu0 0.0
    %2290 = vmatprep.subr.mxu0 0.0
    %2291 = vmatpush1.msra.mxu0 0.0
    %2292 = vmatprep.subr.mxu0 0.0
    %2293 = vmatpush1.msra.mxu0 0.0
    %2294 = vmatprep.subr.mxu0 0.0
    %2295 = vmatpush1.msra.mxu0 0.0
    %2296 = vmatprep.subr.mxu0 0.0
    %2297 = vmatpush1.msra.mxu0 0.0
    %2298 = vmatprep.subr.mxu0 0.0
    %2299 = vmatpush1.msra.mxu0 0.0
    %2300 = vmatprep.subr.mxu0 0.0
    %2301 = vmatpush1.msra.mxu0 0.0
    %2302 = vmatprep.subr.mxu0 0.0
    %2303 = vmatpush1.msra.mxu0 0.0
    %2304 = vmatprep.subr.mxu0 0.0
    %2305 = vmatpush1.msra.mxu0 0.0
    %2306 = vmatprep.subr.mxu0 0.0
    %2307 = vmatpush1.msra.mxu0 0.0
    %2308 = vmatprep.subr.mxu0 0.0
    %2309 = vmatpush1.msra.mxu0 0.0
    %2310 = vmatprep.subr.mxu0 0.0
    %2311 = vmatpush1.msra.mxu0 0.0
    %2312 = vmatprep.subr.mxu0 0.0
    %2313 = vmatpush1.msra.mxu0 0.0
    %2314 = vmatprep.subr.mxu0 0.0
    %2315 = vmatpush1.msra.mxu0 0.0
    %2316 = vmatprep.subr.mxu0 0.0
    %2317 = vmatpush1.msra.mxu0 0.0
    %2318 = vmatprep.subr.mxu0 0.0
    %2319 = vmatpush1.msra.mxu0 0.0
    %2320 = vmatprep.subr.mxu0 0.0
    %2321 = vmatpush1.msra.mxu0 0.0
    %2322 = vmatprep.subr.mxu0 0.0
    %2323 = vmatpush1.msra.mxu0 0.0
    %2324 = vmatprep.subr.mxu0 0.0
    %2325 = vmatpush1.msra.mxu0 0.0
    %2326 = vmatprep.subr.mxu0 0.0
    %2327 = vmatpush1.msra.mxu0 0.0
    %2328 = vmatprep.subr.mxu0 0.0
    %2329 = vmatpush1.msra.mxu0 0.0
    %2330 = vmatprep.mubr.f32.mxu0 0.0
    %2331 = vmatmul.mubr.f32.gmra.mrb[0].mxu0 %v2264
    %v2332 = vpop.f32.mrb[0].mxu0
    %v2333 = vadd.f32 %v405, %v2332
    %v2334 = vpop.f32.mrb[0].mxu0
    %2335 = vdwg.mxu0
    %v2336 = vxor.u32 %v2333, 2147483648
    %v2337 = vmul.f32 %v2336, 1.442695
    %v2338 = vpow.pop %v2337
    %v2339 = vadd.f32 %v2338, 1.0
    %v2340 = vrcp.pop %v2339
    %v2341 = vmul.f32 1.0, %v2340
    %v2342 = vtanh.pop %v2333
    %v2343 = vmul.f32 %v2341, %v1890
    %2345 = vrot.lane.b32.xlu0 %v2342, 96
    %v2346 = vpop.permute.xlu0 %2345
    %v2348 = vmul.f32 %v2341, %v2346
    %2350 = vrot.lane.b32.xlu0 %v2348, 96
    %v2351 = vpop.permute.xlu0 %2350
    %v2353 = vadd.f32 %v2343, %v2351
    %v2354 = vtanh.pop %v2353
    %2356 = vrot.lane.b32.xlu0 %v2354, 96
    %v2357 = vpop.permute.xlu0 %2356
    %v2359 = vmul.f32 %v2341, %v2357
    %2361 = vrot.lane.b32.xlu0 %v2359, 32
    %v2362 = vpop.permute.xlu0 %2361
    %s2364 = scalar_lea.vmem [#allocation4], 32
    %2365 = vst.msk [vmem:[%s2364] sm:$0xff] %vm39, %v2362
    %s2366 = scalar_lea.vmem %s0, 40
    %v2367 = vld [vmem:[%s2366] sm:$0xff]
    %v2368 = vsel %vm39, %v2362, 0
    %2370 = vmatprep.subr.mxu0 0.0
    %2371 = vmatpush1.msra.mxu0 %v31
    %2372 = vmatprep.subr.mxu0 0.0
    %2373 = vmatpush1.msra.mxu0 %v32
    %2374 = vmatprep.subr.mxu0 0.0
    %2375 = vmatpush1.msra.mxu0 %v33
    %2376 = vmatprep.subr.mxu0 0.0
    %2377 = vmatpush1.msra.mxu0 %v34
    %2378 = vmatprep.subr.mxu0 0.0
    %2379 = vmatpush1.msra.mxu0 0.0
    %2380 = vmatprep.subr.mxu0 0.0
    %2381 = vmatpush1.msra.mxu0 0.0
    %2382 = vmatprep.subr.mxu0 0.0
    %2383 = vmatpush1.msra.mxu0 0.0
    %2384 = vmatprep.subr.mxu0 0.0
    %2385 = vmatpush1.msra.mxu0 0.0
    %2386 = vmatprep.subr.mxu0 0.0
    %2387 = vmatpush1.msra.mxu0 0.0
    %2388 = vmatprep.subr.mxu0 0.0
    %2389 = vmatpush1.msra.mxu0 0.0
    %2390 = vmatprep.subr.mxu0 0.0
    %2391 = vmatpush1.msra.mxu0 0.0
    %2392 = vmatprep.subr.mxu0 0.0
    %2393 = vmatpush1.msra.mxu0 0.0
    %2394 = vmatprep.subr.mxu0 0.0
    %2395 = vmatpush1.msra.mxu0 0.0
    %2396 = vmatprep.subr.mxu0 0.0
    %2397 = vmatpush1.msra.mxu0 0.0
    %2398 = vmatprep.subr.mxu0 0.0
    %2399 = vmatpush1.msra.mxu0 0.0
    %2400 = vmatprep.subr.mxu0 0.0
    %2401 = vmatpush1.msra.mxu0 0.0
    %2402 = vmatprep.subr.mxu0 0.0
    %2403 = vmatpush1.msra.mxu0 0.0
    %2404 = vmatprep.subr.mxu0 0.0
    %2405 = vmatpush1.msra.mxu0 0.0
    %2406 = vmatprep.subr.mxu0 0.0
    %2407 = vmatpush1.msra.mxu0 0.0
    %2408 = vmatprep.subr.mxu0 0.0
    %2409 = vmatpush1.msra.mxu0 0.0
    %2410 = vmatprep.subr.mxu0 0.0
    %2411 = vmatpush1.msra.mxu0 0.0
    %2412 = vmatprep.subr.mxu0 0.0
    %2413 = vmatpush1.msra.mxu0 0.0
    %2414 = vmatprep.subr.mxu0 0.0
    %2415 = vmatpush1.msra.mxu0 0.0
    %2416 = vmatprep.subr.mxu0 0.0
    %2417 = vmatpush1.msra.mxu0 0.0
    %2418 = vmatprep.subr.mxu0 0.0
    %2419 = vmatpush1.msra.mxu0 0.0
    %2420 = vmatprep.subr.mxu0 0.0
    %2421 = vmatpush1.msra.mxu0 0.0
    %2422 = vmatprep.subr.mxu0 0.0
    %2423 = vmatpush1.msra.mxu0 0.0
    %2424 = vmatprep.subr.mxu0 0.0
    %2425 = vmatpush1.msra.mxu0 0.0
    %2426 = vmatprep.subr.mxu0 0.0
    %2427 = vmatpush1.msra.mxu0 0.0
    %2428 = vmatprep.subr.mxu0 0.0
    %2429 = vmatpush1.msra.mxu0 0.0
    %2430 = vmatprep.subr.mxu0 0.0
    %2431 = vmatpush1.msra.mxu0 0.0
    %2432 = vmatprep.subr.mxu0 0.0
    %2433 = vmatpush1.msra.mxu0 0.0
    %2434 = vmatprep.mubr.f32.mxu0 0.0
    %2435 = vmatmul.mubr.f32.gmra.mrb[0].mxu0 %v2368
    %v2436 = vpop.f32.mrb[0].mxu0
    %v2437 = vadd.f32 %v2367, %v2436
    %v2438 = vpop.f32.mrb[0].mxu0
    %2439 = vdwg.mxu0
    %v2440 = vmul.f32 %v2437, 0.5
    %v2441 = vand.u32 2147483647, %v2440
    %vm2442 = vcmp.le.f32.partialorder %v2441, 0.7853982
    %vm2443 = vcmp.lt.s32.totalorder %v2440, 0
    %v2444 = vand.u32 %v2440, 2139095040
    %v2445 = vshrl.u32 %v2444, 23
    %v2446 = vsub.s32 %v2445, 127
    %v2447 = vand.u32 2147483647, %v2440
    %v2448 = vand.u32 %v2447, 8388607
    %v2449 = vor.u32 %v2448, 8388608
    %v2450 = vsub.s32 0, %v2449
    %v2451 = vadd.s32 %v2446, 1
    %vm2452 = vcmp.gt.s32.totalorder %v2451, 0
    %v2453 = vsel %vm2452, %v2451, 0
    %v2454 = vshrl.u32 %v2453, 5
    %v2455 = vand.u32 %v2453, 31
    %v2456 = vsub.s32 32, %v2455
    %v2457 = vshrl.u32 683565275, %v2456
    %v2458 = vshll.u32 683565275, %v2455
    %v2459 = vshrl.u32 2475754826, %v2456
    %v2460 = vor.u32 %v2458, %v2459
    %v2461 = vshll.u32 2475754826, %v2455
    %v2462 = vshrl.u32 2131351028, %v2456
    %v2463 = vor.u32 %v2461, %v2462
    %v2464 = vshll.u32 2131351028, %v2455
    %v2465 = vshrl.u32 2102212464, %v2456
    %v2466 = vor.u32 %v2464, %v2465
    %v2467 = vshll.u32 2102212464, %v2455
    %v2468 = vshrl.u32 920167782, %v2456
    %v2469 = vor.u32 %v2467, %v2468
    %v2470 = vshll.u32 920167782, %v2455
    %v2471 = vshrl.u32 1326507024, %v2456
    %v2472 = vor.u32 %v2470, %v2471
    %vm2473 = vcmp.lt.s32.totalorder %v2454, 1
    %vm2474 = vcmp.lt.s32.totalorder %v2454, 2
    %vm2475 = vcmp.lt.s32.totalorder %v2454, 3
    %vm2476 = vcmp.lt.s32.totalorder %v2454, 4
    %v2477 = vsel %vm2473, %v2457, %v2460
    %v2478 = vsel %vm2476, %v2466, 2102212464
    %v2479 = vsel %vm2475, %v2463, %v2478
    %v2480 = vsel %vm2474, %v2477, %v2479
    %v2481 = vsel %vm2473, %v2460, %v2463
    %v2482 = vsel %vm2476, %v2469, 920167782
    %v2483 = vsel %vm2475, %v2466, %v2482
    %v2484 = vsel %vm2474, %v2481, %v2483
    %v2485 = vsel %vm2473, %v2463, %v2466
    %v2486 = vsel %vm2476, %v2472, 1326507024
    %v2487 = vsel %vm2475, %v2469, %v2486
    %v2488 = vsel %vm2474, %v2485, %v2487
    %v2489 = vshll.u32 %v2449, 8
    %v2490 = vmul.u32.u64.compose %v2489, %v2488
    %v2491 = vextract.low.u32 %v2490
    %v2492 = vextract.high.u32 %v2490
    %v2493 = vmul.u32.u64.compose %v2489, %v2484
    %v2494 = vextract.low.u32 %v2493
    %v2495 = vextract.high.u32 %v2493
    %v2496 = vmul.u32 %v2489, %v2480
    %v2497 = vadd.s32 %v2492, %v2494
    %vm2498 = vc.u32 %v2492, %v2494
    %v2499 = vadd.s32 %v2495, 1
    %v2500 = vsel %vm2498, %v2499, %v2495
    %v2501 = vadd.s32 %v2496, %v2500
    %v2502 = vadd.s32 %v2501, 536870912
    %v2503 = vshrl.u32 %v2502, 30
    %v2504 = vshll.u32 %v2503, 30
    %v2505 = vsub.s32 %v2501, %v2504
    %vm2506 = vcmp.lt.s32.totalorder %v2505, 0
    %v2507 = vsub.s32 0, %v2505
    %v2508 = vsel %vm2506, %v2507, %v2505
    %v2509 = vclz %v2508
    %v2510 = vsub.s32 %v2509, 2
    %vm2511 = vcmp.gt.s32.totalorder 0, %v2510
    %v2512 = vsel %vm2511, 0, %v2510
    %v2513 = vsub.s32 32, %v2512
    %v2514 = vshll.u32 %v2505, %v2512
    %v2515 = vshrl.u32 %v2497, %v2513
    %v2516 = vor.u32 %v2514, %v2515
    %v2517 = vsub.s32 4294967266, %v2512
    %v2518 = vadd.s32 %v2517, 127
    %v2519 = vshll.u32 %v2518, 23
    %v2520 = vor.u32 4788187, %v2519
    %v2521 = vand.u32 2147483647, %v2520
    %v2523 = vcvt.s32.f32 %v2516
    %v2524 = vmul.f32 %v2523, %v2521
    %v2525 = vxor.u32 %v2524, 2147483648
    %v2526 = vsel %vm2443, %v2525, %v2524
    %v2527 = vsub.s32 4, %v2503
    %v2528 = vsel %vm2443, %v2527, %v2503
    %v2529 = vsel %vm2442, %v2440, %v2526
    %v2530 = vsel %vm2442, 0, %v2528
    %v2531 = vcosq.f32.pop %v2529
    %v2532 = vsinq.f32.pop %v2529
    %vm2533 = vweird.f32 %v2440
    %v2534 = vand.u32 %v2530, 3
    %vm2535 = vcmp.lt.s32.totalorder %v2534, 2
    %vm2536 = vcmp.eq.s32.totalorder %v2534, 0
    %v2537 = vxor.u32 %v2532, 2147483648
    %v2538 = vsel %vm2536, %v2531, %v2537
    %vm2539 = vcmp.eq.s32.totalorder %v2534, 2
    %v2540 = vxor.u32 %v2531, 2147483648
    %v2541 = vsel %vm2539, %v2540, %v2532
    %v2542 = vsel %vm2535, %v2538, %v2541
    %v2543 = vsel %vm2533, nan, %v2542
    %v2544 = vand.u32 2147483647, %v2440
    %vm2545 = vcmp.le.f32.partialorder %v2544, 0.7853982
    %vm2546 = vcmp.lt.s32.totalorder %v2440, 0
    %v2547 = vand.u32 %v2440, 2139095040
    %v2548 = vshrl.u32 %v2547, 23
    %v2549 = vsub.s32 %v2548, 127
    %v2550 = vand.u32 2147483647, %v2440
    %v2551 = vand.u32 %v2550, 8388607
    %v2552 = vor.u32 %v2551, 8388608
    %v2553 = vsub.s32 0, %v2552
    %v2554 = vadd.s32 %v2549, 1
    %vm2555 = vcmp.gt.s32.totalorder %v2554, 0
    %v2556 = vsel %vm2555, %v2554, 0
    %v2557 = vshrl.u32 %v2556, 5
    %v2558 = vand.u32 %v2556, 31
    %v2559 = vsub.s32 32, %v2558
    %v2560 = vshrl.u32 683565275, %v2559
    %v2561 = vshll.u32 683565275, %v2558
    %v2562 = vshrl.u32 2475754826, %v2559
    %v2563 = vor.u32 %v2561, %v2562
    %v2564 = vshll.u32 2475754826, %v2558
    %v2565 = vshrl.u32 2131351028, %v2559
    %v2566 = vor.u32 %v2564, %v2565
    %v2567 = vshll.u32 2131351028, %v2558
    %v2568 = vshrl.u32 2102212464, %v2559
    %v2569 = vor.u32 %v2567, %v2568
    %v2570 = vshll.u32 2102212464, %v2558
    %v2571 = vshrl.u32 920167782, %v2559
    %v2572 = vor.u32 %v2570, %v2571
    %v2573 = vshll.u32 920167782, %v2558
    %v2574 = vshrl.u32 1326507024, %v2559
    %v2575 = vor.u32 %v2573, %v2574
    %vm2576 = vcmp.lt.s32.totalorder %v2557, 1
    %vm2577 = vcmp.lt.s32.totalorder %v2557, 2
    %vm2578 = vcmp.lt.s32.totalorder %v2557, 3
    %vm2579 = vcmp.lt.s32.totalorder %v2557, 4
    %v2580 = vsel %vm2576, %v2560, %v2563
    %v2581 = vsel %vm2579, %v2569, 2102212464
    %v2582 = vsel %vm2578, %v2566, %v2581
    %v2583 = vsel %vm2577, %v2580, %v2582
    %v2584 = vsel %vm2576, %v2563, %v2566
    %v2585 = vsel %vm2579, %v2572, 920167782
    %v2586 = vsel %vm2578, %v2569, %v2585
    %v2587 = vsel %vm2577, %v2584, %v2586
    %v2588 = vsel %vm2576, %v2566, %v2569
    %v2589 = vsel %vm2579, %v2575, 1326507024
    %v2590 = vsel %vm2578, %v2572, %v2589
    %v2591 = vsel %vm2577, %v2588, %v2590
    %v2592 = vshll.u32 %v2552, 8
    %v2593 = vmul.u32.u64.compose %v2592, %v2591
    %v2594 = vextract.low.u32 %v2593
    %v2595 = vextract.high.u32 %v2593
    %v2596 = vmul.u32.u64.compose %v2592, %v2587
    %v2597 = vextract.low.u32 %v2596
    %v2598 = vextract.high.u32 %v2596
    %v2599 = vmul.u32 %v2592, %v2583
    %v2600 = vadd.s32 %v2595, %v2597
    %vm2601 = vc.u32 %v2595, %v2597
    %v2602 = vadd.s32 %v2598, 1
    %v2603 = vsel %vm2601, %v2602, %v2598
    %v2604 = vadd.s32 %v2599, %v2603
    %v2605 = vadd.s32 %v2604, 536870912
    %v2606 = vshrl.u32 %v2605, 30
    %v2607 = vshll.u32 %v2606, 30
    %v2608 = vsub.s32 %v2604, %v2607
    %vm2609 = vcmp.lt.s32.totalorder %v2608, 0
    %v2610 = vsub.s32 0, %v2608
    %v2611 = vsel %vm2609, %v2610, %v2608
    %v2612 = vclz %v2611
    %v2613 = vsub.s32 %v2612, 2
    %vm2614 = vcmp.gt.s32.totalorder 0, %v2613
    %v2615 = vsel %vm2614, 0, %v2613
    %v2616 = vsub.s32 32, %v2615
    %v2617 = vshll.u32 %v2608, %v2615
    %v2618 = vshrl.u32 %v2600, %v2616
    %v2619 = vor.u32 %v2617, %v2618
    %v2620 = vsub.s32 4294967266, %v2615
    %v2621 = vadd.s32 %v2620, 127
    %v2622 = vshll.u32 %v2621, 23
    %v2623 = vor.u32 4788187, %v2622
    %v2624 = vand.u32 2147483647, %v2623
    %v2626 = vcvt.s32.f32 %v2619
    %v2627 = vmul.f32 %v2626, %v2624
    %v2628 = vxor.u32 %v2627, 2147483648
    %v2629 = vsel %vm2546, %v2628, %v2627
    %v2630 = vsub.s32 4, %v2606
    %v2631 = vsel %vm2546, %v2630, %v2606
    %v2632 = vsel %vm2545, %v2440, %v2629
    %v2633 = vsel %vm2545, 0, %v2631
    %v2634 = vcosq.f32.pop %v2632
    %v2635 = vsinq.f32.pop %v2632
    %vm2636 = vweird.f32 %v2440
    %v2637 = vadd.s32 %v2633, 3
    %v2638 = vand.u32 %v2637, 3
    %vm2639 = vcmp.lt.s32.totalorder %v2638, 2
    %vm2640 = vcmp.eq.s32.totalorder %v2638, 0
    %v2641 = vxor.u32 %v2635, 2147483648
    %v2642 = vsel %vm2640, %v2634, %v2641
    %vm2643 = vcmp.eq.s32.totalorder %v2638, 2
    %v2644 = vxor.u32 %v2634, 2147483648
    %v2645 = vsel %vm2643, %v2644, %v2635
    %v2646 = vsel %vm2639, %v2642, %v2645
    %v2647 = vsel %vm2636, nan, %v2646
    %v2648 = vsub.f32 0.0, %v2647
    %v2649 = vadd.f32 %v2543, 0.0
    %v2650 = vmul.f32 %v2649, 0.70710677
    %v2651 = vadd.f32 %v2648, 0.0
    %v2652 = vmul.f32 %v2651, 0.70710677
    %v2653 = vmul.f32 %v2543, 0.70710677
    %v2654 = vsub.f32 0.0, %v2648
    %v2655 = vmul.f32 %v2654, 0.70710677
    %v2656 = vmul.f32 %v2437, %v2437
    %v2657 = vadd.f32 %v2656, 1.0
    %v2658 = vrsqrt.pop %v2657
    %v2659 = vadd.f32 %v2658, 1.0
    %v2660 = vmul.f32 %v2659, 0.5
    %v2661 = vrsqrt.pop %v2660
    %v2662 = vmul.f32 %v2660, %v2661
    %vm2663 = vcmp.eq.f32.partialorder %v2660, inf
    %v2664 = vsel %vm2663, %v2660, %v2662
    %vm2665 = vcmp.eq.f32.partialorder %v2660, 0.0
    %v2666 = vand.u32 %v2660, 2147483648
    %v2667 = vsel %vm2665, %v2666, %v2664
    %v2668 = vmul.f32 %v2440, %v2658
    %v2669 = vrcp.pop %v2667
    %v2670 = vmul.f32 %v2668, %v2669
    %v2671 = vlaneseq
    %v2672 = vshrl.u32 %v2671, 7
    %v2673 = vsub.s32 0, %v2672
    %v2674 = vrot.slane %v2667, %v2673
    %v2675 = vmul.f32 %v2674, %v2650
    %v2676 = vlaneseq
    %v2677 = vshrl.u32 %v2676, 7
    %v2678 = vsub.s32 0, %v2677
    %v2679 = vrot.slane %v2670, %v2678
    %v2680 = vmul.f32 %v2679, %v2653
    %v2681 = vsub.f32 %v2675, %v2680
    %v2682 = vmul.f32 %v2674, %v2652
    %v2683 = vmul.f32 %v2679, %v2655
    %v2684 = vsub.f32 %v2682, %v2683
    %v2685 = vmul.f32 %v2679, %v2650
    %v2686 = vmul.f32 %v2674, %v2653
    %v2687 = vadd.f32 %v2685, %v2686
    %v2688 = vmul.f32 %v2679, %v2652
    %v2689 = vmul.f32 %v2674, %v2655
    %v2690 = vadd.f32 %v2688, %v2689
    %v2691 = vmul.f32 %v2674, %v2681
    %v2692 = vmul.f32 %v2679, %v2684
    %v2693 = vadd.f32 %v2691, %v2692
    %v2694 = vmul.f32 %v2674, %v2684
    %v2695 = vmul.f32 %v2679, %v2681
    %v2696 = vsub.f32 %v2694, %v2695
    %v2697 = vmul.f32 %v2674, %v2687
    %v2698 = vmul.f32 %v2679, %v2690
    %v2699 = vsub.f32 %v2697, %v2698
    %v2700 = vmul.f32 %v2674, %v2690
    %v2701 = vmul.f32 %v2679, %v2687
    %v2702 = vadd.f32 %v2700, %v2701
    %v2703 = vmul.f32 %v2693, %v2693
    %v2704 = vmul.f32 %v2696, %v2696
    %v2705 = vadd.f32 %v2703, %v2704
    %v2706 = vmul.f32 %v2699, %v2699
    %v2707 = vsub.f32 %v2705, %v2706
    %v2708 = vmul.f32 %v2702, %v2702
    %v2709 = vsub.f32 %v2707, %v2708
    %v2710 = vmul.f32 %v2693, %v2699
    %v2711 = vmul.f32 %v2696, %v2702
    %v2712 = vadd.f32 %v2710, %v2711
    %v2713 = vmul.f32 %v2693, %v2702
    %v2714 = vmul.f32 %v2696, %v2699
    %v2715 = vsub.f32 %v2713, %v2714
    %2717 = vrot.lane.b32.xlu0 %v2712, 4
    %v2718 = vpop.permute.xlu0 %2717
    %2721 = vrot.lane.b32.xlu0 %v2715, 8
    %v2722 = vpop.permute.xlu0 %2721
    %v2724 = vsel %vm397, %v2709, %v2718
    %v2725 = vsel %vm399, %v2724, %v2722
    %v2727 = vsel %vm407, %v2725, 0
    %2729 = vmatprep.subr.mxu0 0.0
    %2730 = vmatpush1.msra.mxu0 %v35
    %2731 = vmatprep.subr.mxu0 0.0
    %2732 = vmatpush1.msra.mxu0 %v413
    %2733 = vmatprep.subr.mxu0 0.0
    %2734 = vmatpush1.msra.mxu0 0.0
    %2735 = vmatprep.subr.mxu0 0.0
    %2736 = vmatpush1.msra.mxu0 0.0
    %2737 = vmatprep.subr.mxu0 0.0
    %2738 = vmatpush1.msra.mxu0 0.0
    %2739 = vmatprep.subr.mxu0 0.0
    %2740 = vmatpush1.msra.mxu0 0.0
    %2741 = vmatprep.subr.mxu0 0.0
    %2742 = vmatpush1.msra.mxu0 0.0
    %2743 = vmatprep.subr.mxu0 0.0
    %2744 = vmatpush1.msra.mxu0 0.0
    %2745 = vmatprep.subr.mxu0 0.0
    %2746 = vmatpush1.msra.mxu0 0.0
    %2747 = vmatprep.subr.mxu0 0.0
    %2748 = vmatpush1.msra.mxu0 0.0
    %2749 = vmatprep.subr.mxu0 0.0
    %2750 = vmatpush1.msra.mxu0 0.0
    %2751 = vmatprep.subr.mxu0 0.0
    %2752 = vmatpush1.msra.mxu0 0.0
    %2753 = vmatprep.subr.mxu0 0.0
    %2754 = vmatpush1.msra.mxu0 0.0
    %2755 = vmatprep.subr.mxu0 0.0
    %2756 = vmatpush1.msra.mxu0 0.0
    %2757 = vmatprep.subr.mxu0 0.0
    %2758 = vmatpush1.msra.mxu0 0.0
    %2759 = vmatprep.subr.mxu0 0.0
    %2760 = vmatpush1.msra.mxu0 0.0
    %2761 = vmatprep.subr.mxu0 0.0
    %2762 = vmatpush1.msra.mxu0 0.0
    %2763 = vmatprep.subr.mxu0 0.0
    %2764 = vmatpush1.msra.mxu0 0.0
    %2765 = vmatprep.subr.mxu0 0.0
    %2766 = vmatpush1.msra.mxu0 0.0
    %2767 = vmatprep.subr.mxu0 0.0
    %2768 = vmatpush1.msra.mxu0 0.0
    %2769 = vmatprep.subr.mxu0 0.0
    %2770 = vmatpush1.msra.mxu0 0.0
    %2771 = vmatprep.subr.mxu0 0.0
    %2772 = vmatpush1.msra.mxu0 0.0
    %2773 = vmatprep.subr.mxu0 0.0
    %2774 = vmatpush1.msra.mxu0 0.0
    %2775 = vmatprep.subr.mxu0 0.0
    %2776 = vmatpush1.msra.mxu0 0.0
    %2777 = vmatprep.subr.mxu0 0.0
    %2778 = vmatpush1.msra.mxu0 0.0
    %2779 = vmatprep.subr.mxu0 0.0
    %2780 = vmatpush1.msra.mxu0 0.0
    %2781 = vmatprep.subr.mxu0 0.0
    %2782 = vmatpush1.msra.mxu0 0.0
    %2783 = vmatprep.subr.mxu0 0.0
    %2784 = vmatpush1.msra.mxu0 0.0
    %2785 = vmatprep.subr.mxu0 0.0
    %2786 = vmatpush1.msra.mxu0 0.0
    %2787 = vmatprep.subr.mxu0 0.0
    %2788 = vmatpush1.msra.mxu0 0.0
    %2789 = vmatprep.subr.mxu0 0.0
    %2790 = vmatpush1.msra.mxu0 0.0
    %2791 = vmatprep.subr.mxu0 0.0
    %2792 = vmatpush1.msra.mxu0 0.0
    %2793 = vmatprep.mubr.f32.mxu0 0.0
    %2794 = vmatmul.mubr.f32.gmra.mrb[0].mxu0 %v2727
    %v2795 = vpop.f32.mrb[0].mxu0
    %v2796 = vadd.f32 %v405, %v2795
    %v2797 = vpop.f32.mrb[0].mxu0
    %2798 = vdwg.mxu0
    %v2799 = vxor.u32 %v2796, 2147483648
    %v2800 = vmul.f32 %v2799, 1.442695
    %v2801 = vpow.pop %v2800
    %v2802 = vadd.f32 %v2801, 1.0
    %v2803 = vrcp.pop %v2802
    %v2804 = vmul.f32 1.0, %v2803
    %v2805 = vtanh.pop %v2796
    %v2806 = vmul.f32 %v2804, %v2353
    %2808 = vrot.lane.b32.xlu0 %v2805, 96
    %v2809 = vpop.permute.xlu0 %2808
    %v2811 = vmul.f32 %v2804, %v2809
    %2813 = vrot.lane.b32.xlu0 %v2811, 96
    %v2814 = vpop.permute.xlu0 %2813
    %v2816 = vadd.f32 %v2806, %v2814
    %v2817 = vtanh.pop %v2816
    %2819 = vrot.lane.b32.xlu0 %v2817, 96
    %v2820 = vpop.permute.xlu0 %2819
    %v2822 = vmul.f32 %v2804, %v2820
    %2824 = vrot.lane.b32.xlu0 %v2822, 32
    %v2825 = vpop.permute.xlu0 %2824
    %s2827 = scalar_lea.vmem [#allocation4], 40
    %2828 = vst.msk [vmem:[%s2827] sm:$0xff] %vm39, %v2825
    %s2829 = scalar_lea.vmem %s0, 48
    %v2830 = vld [vmem:[%s2829] sm:$0xff]
    %v2831 = vsel %vm39, %v2825, 0
    %2833 = vmatprep.subr.mxu0 0.0
    %2834 = vmatpush1.msra.mxu0 %v31
    %2835 = vmatprep.subr.mxu0 0.0
    %2836 = vmatpush1.msra.mxu0 %v32
    %2837 = vmatprep.subr.mxu0 0.0
    %2838 = vmatpush1.msra.mxu0 %v33
    %2839 = vmatprep.subr.mxu0 0.0
    %2840 = vmatpush1.msra.mxu0 %v34
    %2841 = vmatprep.subr.mxu0 0.0
    %2842 = vmatpush1.msra.mxu0 0.0
    %2843 = vmatprep.subr.mxu0 0.0
    %2844 = vmatpush1.msra.mxu0 0.0
    %2845 = vmatprep.subr.mxu0 0.0
    %2846 = vmatpush1.msra.mxu0 0.0
    %2847 = vmatprep.subr.mxu0 0.0
    %2848 = vmatpush1.msra.mxu0 0.0
    %2849 = vmatprep.subr.mxu0 0.0
    %2850 = vmatpush1.msra.mxu0 0.0
    %2851 = vmatprep.subr.mxu0 0.0
    %2852 = vmatpush1.msra.mxu0 0.0
    %2853 = vmatprep.subr.mxu0 0.0
    %2854 = vmatpush1.msra.mxu0 0.0
    %2855 = vmatprep.subr.mxu0 0.0
    %2856 = vmatpush1.msra.mxu0 0.0
    %2857 = vmatprep.subr.mxu0 0.0
    %2858 = vmatpush1.msra.mxu0 0.0
    %2859 = vmatprep.subr.mxu0 0.0
    %2860 = vmatpush1.msra.mxu0 0.0
    %2861 = vmatprep.subr.mxu0 0.0
    %2862 = vmatpush1.msra.mxu0 0.0
    %2863 = vmatprep.subr.mxu0 0.0
    %2864 = vmatpush1.msra.mxu0 0.0
    %2865 = vmatprep.subr.mxu0 0.0
    %2866 = vmatpush1.msra.mxu0 0.0
    %2867 = vmatprep.subr.mxu0 0.0
    %2868 = vmatpush1.msra.mxu0 0.0
    %2869 = vmatprep.subr.mxu0 0.0
    %2870 = vmatpush1.msra.mxu0 0.0
    %2871 = vmatprep.subr.mxu0 0.0
    %2872 = vmatpush1.msra.mxu0 0.0
    %2873 = vmatprep.subr.mxu0 0.0
    %2874 = vmatpush1.msra.mxu0 0.0
    %2875 = vmatprep.subr.mxu0 0.0
    %2876 = vmatpush1.msra.mxu0 0.0
    %2877 = vmatprep.subr.mxu0 0.0
    %2878 = vmatpush1.msra.mxu0 0.0
    %2879 = vmatprep.subr.mxu0 0.0
    %2880 = vmatpush1.msra.mxu0 0.0
    %2881 = vmatprep.subr.mxu0 0.0
    %2882 = vmatpush1.msra.mxu0 0.0
    %2883 = vmatprep.subr.mxu0 0.0
    %2884 = vmatpush1.msra.mxu0 0.0
    %2885 = vmatprep.subr.mxu0 0.0
    %2886 = vmatpush1.msra.mxu0 0.0
    %2887 = vmatprep.subr.mxu0 0.0
    %2888 = vmatpush1.msra.mxu0 0.0
    %2889 = vmatprep.subr.mxu0 0.0
    %2890 = vmatpush1.msra.mxu0 0.0
    %2891 = vmatprep.subr.mxu0 0.0
    %2892 = vmatpush1.msra.mxu0 0.0
    %2893 = vmatprep.subr.mxu0 0.0
    %2894 = vmatpush1.msra.mxu0 0.0
    %2895 = vmatprep.subr.mxu0 0.0
    %2896 = vmatpush1.msra.mxu0 0.0
    %2897 = vmatprep.mubr.f32.mxu0 0.0
    %2898 = vmatmul.mubr.f32.gmra.mrb[0].mxu0 %v2831
    %v2899 = vpop.f32.mrb[0].mxu0
    %v2900 = vadd.f32 %v2830, %v2899
    %v2901 = vpop.f32.mrb[0].mxu0
    %2902 = vdwg.mxu0
    %v2903 = vmul.f32 %v2900, 0.5
    %v2904 = vand.u32 2147483647, %v2903
    %vm2905 = vcmp.le.f32.partialorder %v2904, 0.7853982
    %vm2906 = vcmp.lt.s32.totalorder %v2903, 0
    %v2907 = vand.u32 %v2903, 2139095040
    %v2908 = vshrl.u32 %v2907, 23
    %v2909 = vsub.s32 %v2908, 127
    %v2910 = vand.u32 2147483647, %v2903
    %v2911 = vand.u32 %v2910, 8388607
    %v2912 = vor.u32 %v2911, 8388608
    %v2913 = vsub.s32 0, %v2912
    %v2914 = vadd.s32 %v2909, 1
    %vm2915 = vcmp.gt.s32.totalorder %v2914, 0
    %v2916 = vsel %vm2915, %v2914, 0
    %v2917 = vshrl.u32 %v2916, 5
    %v2918 = vand.u32 %v2916, 31
    %v2919 = vsub.s32 32, %v2918
    %v2920 = vshrl.u32 683565275, %v2919
    %v2921 = vshll.u32 683565275, %v2918
    %v2922 = vshrl.u32 2475754826, %v2919
    %v2923 = vor.u32 %v2921, %v2922
    %v2924 = vshll.u32 2475754826, %v2918
    %v2925 = vshrl.u32 2131351028, %v2919
    %v2926 = vor.u32 %v2924, %v2925
    %v2927 = vshll.u32 2131351028, %v2918
    %v2928 = vshrl.u32 2102212464, %v2919
    %v2929 = vor.u32 %v2927, %v2928
    %v2930 = vshll.u32 2102212464, %v2918
    %v2931 = vshrl.u32 920167782, %v2919
    %v2932 = vor.u32 %v2930, %v2931
    %v2933 = vshll.u32 920167782, %v2918
    %v2934 = vshrl.u32 1326507024, %v2919
    %v2935 = vor.u32 %v2933, %v2934
    %vm2936 = vcmp.lt.s32.totalorder %v2917, 1
    %vm2937 = vcmp.lt.s32.totalorder %v2917, 2
    %vm2938 = vcmp.lt.s32.totalorder %v2917, 3
    %vm2939 = vcmp.lt.s32.totalorder %v2917, 4
    %v2940 = vsel %vm2936, %v2920, %v2923
    %v2941 = vsel %vm2939, %v2929, 2102212464
    %v2942 = vsel %vm2938, %v2926, %v2941
    %v2943 = vsel %vm2937, %v2940, %v2942
    %v2944 = vsel %vm2936, %v2923, %v2926
    %v2945 = vsel %vm2939, %v2932, 920167782
    %v2946 = vsel %vm2938, %v2929, %v2945
    %v2947 = vsel %vm2937, %v2944, %v2946
    %v2948 = vsel %vm2936, %v2926, %v2929
    %v2949 = vsel %vm2939, %v2935, 1326507024
    %v2950 = vsel %vm2938, %v2932, %v2949
    %v2951 = vsel %vm2937, %v2948, %v2950
    %v2952 = vshll.u32 %v2912, 8
    %v2953 = vmul.u32.u64.compose %v2952, %v2951
    %v2954 = vextract.low.u32 %v2953
    %v2955 = vextract.high.u32 %v2953
    %v2956 = vmul.u32.u64.compose %v2952, %v2947
    %v2957 = vextract.low.u32 %v2956
    %v2958 = vextract.high.u32 %v2956
    %v2959 = vmul.u32 %v2952, %v2943
    %v2960 = vadd.s32 %v2955, %v2957
    %vm2961 = vc.u32 %v2955, %v2957
    %v2962 = vadd.s32 %v2958, 1
    %v2963 = vsel %vm2961, %v2962, %v2958
    %v2964 = vadd.s32 %v2959, %v2963
    %v2965 = vadd.s32 %v2964, 536870912
    %v2966 = vshrl.u32 %v2965, 30
    %v2967 = vshll.u32 %v2966, 30
    %v2968 = vsub.s32 %v2964, %v2967
    %vm2969 = vcmp.lt.s32.totalorder %v2968, 0
    %v2970 = vsub.s32 0, %v2968
    %v2971 = vsel %vm2969, %v2970, %v2968
    %v2972 = vclz %v2971
    %v2973 = vsub.s32 %v2972, 2
    %vm2974 = vcmp.gt.s32.totalorder 0, %v2973
    %v2975 = vsel %vm2974, 0, %v2973
    %v2976 = vsub.s32 32, %v2975
    %v2977 = vshll.u32 %v2968, %v2975
    %v2978 = vshrl.u32 %v2960, %v2976
    %v2979 = vor.u32 %v2977, %v2978
    %v2980 = vsub.s32 4294967266, %v2975
    %v2981 = vadd.s32 %v2980, 127
    %v2982 = vshll.u32 %v2981, 23
    %v2983 = vor.u32 4788187, %v2982
    %v2984 = vand.u32 2147483647, %v2983
    %v2986 = vcvt.s32.f32 %v2979
    %v2987 = vmul.f32 %v2986, %v2984
    %v2988 = vxor.u32 %v2987, 2147483648
    %v2989 = vsel %vm2906, %v2988, %v2987
    %v2990 = vsub.s32 4, %v2966
    %v2991 = vsel %vm2906, %v2990, %v2966
    %v2992 = vsel %vm2905, %v2903, %v2989
    %v2993 = vsel %vm2905, 0, %v2991
    %v2994 = vcosq.f32.pop %v2992
    %v2995 = vsinq.f32.pop %v2992
    %vm2996 = vweird.f32 %v2903
    %v2997 = vand.u32 %v2993, 3
    %vm2998 = vcmp.lt.s32.totalorder %v2997, 2
    %vm2999 = vcmp.eq.s32.totalorder %v2997, 0
    %v3000 = vxor.u32 %v2995, 2147483648
    %v3001 = vsel %vm2999, %v2994, %v3000
    %vm3002 = vcmp.eq.s32.totalorder %v2997, 2
    %v3003 = vxor.u32 %v2994, 2147483648
    %v3004 = vsel %vm3002, %v3003, %v2995
    %v3005 = vsel %vm2998, %v3001, %v3004
    %v3006 = vsel %vm2996, nan, %v3005
    %v3007 = vand.u32 2147483647, %v2903
    %vm3008 = vcmp.le.f32.partialorder %v3007, 0.7853982
    %vm3009 = vcmp.lt.s32.totalorder %v2903, 0
    %v3010 = vand.u32 %v2903, 2139095040
    %v3011 = vshrl.u32 %v3010, 23
    %v3012 = vsub.s32 %v3011, 127
    %v3013 = vand.u32 2147483647, %v2903
    %v3014 = vand.u32 %v3013, 8388607
    %v3015 = vor.u32 %v3014, 8388608
    %v3016 = vsub.s32 0, %v3015
    %v3017 = vadd.s32 %v3012, 1
    %vm3018 = vcmp.gt.s32.totalorder %v3017, 0
    %v3019 = vsel %vm3018, %v3017, 0
    %v3020 = vshrl.u32 %v3019, 5
    %v3021 = vand.u32 %v3019, 31
    %v3022 = vsub.s32 32, %v3021
    %v3023 = vshrl.u32 683565275, %v3022
    %v3024 = vshll.u32 683565275, %v3021
    %v3025 = vshrl.u32 2475754826, %v3022
    %v3026 = vor.u32 %v3024, %v3025
    %v3027 = vshll.u32 2475754826, %v3021
    %v3028 = vshrl.u32 2131351028, %v3022
    %v3029 = vor.u32 %v3027, %v3028
    %v3030 = vshll.u32 2131351028, %v3021
    %v3031 = vshrl.u32 2102212464, %v3022
    %v3032 = vor.u32 %v3030, %v3031
    %v3033 = vshll.u32 2102212464, %v3021
    %v3034 = vshrl.u32 920167782, %v3022
    %v3035 = vor.u32 %v3033, %v3034
    %v3036 = vshll.u32 920167782, %v3021
    %v3037 = vshrl.u32 1326507024, %v3022
    %v3038 = vor.u32 %v3036, %v3037
    %vm3039 = vcmp.lt.s32.totalorder %v3020, 1
    %vm3040 = vcmp.lt.s32.totalorder %v3020, 2
    %vm3041 = vcmp.lt.s32.totalorder %v3020, 3
    %vm3042 = vcmp.lt.s32.totalorder %v3020, 4
    %v3043 = vsel %vm3039, %v3023, %v3026
    %v3044 = vsel %vm3042, %v3032, 2102212464
    %v3045 = vsel %vm3041, %v3029, %v3044
    %v3046 = vsel %vm3040, %v3043, %v3045
    %v3047 = vsel %vm3039, %v3026, %v3029
    %v3048 = vsel %vm3042, %v3035, 920167782
    %v3049 = vsel %vm3041, %v3032, %v3048
    %v3050 = vsel %vm3040, %v3047, %v3049
    %v3051 = vsel %vm3039, %v3029, %v3032
    %v3052 = vsel %vm3042, %v3038, 1326507024
    %v3053 = vsel %vm3041, %v3035, %v3052
    %v3054 = vsel %vm3040, %v3051, %v3053
    %v3055 = vshll.u32 %v3015, 8
    %v3056 = vmul.u32.u64.compose %v3055, %v3054
    %v3057 = vextract.low.u32 %v3056
    %v3058 = vextract.high.u32 %v3056
    %v3059 = vmul.u32.u64.compose %v3055, %v3050
    %v3060 = vextract.low.u32 %v3059
    %v3061 = vextract.high.u32 %v3059
    %v3062 = vmul.u32 %v3055, %v3046
    %v3063 = vadd.s32 %v3058, %v3060
    %vm3064 = vc.u32 %v3058, %v3060
    %v3065 = vadd.s32 %v3061, 1
    %v3066 = vsel %vm3064, %v3065, %v3061
    %v3067 = vadd.s32 %v3062, %v3066
    %v3068 = vadd.s32 %v3067, 536870912
    %v3069 = vshrl.u32 %v3068, 30
    %v3070 = vshll.u32 %v3069, 30
    %v3071 = vsub.s32 %v3067, %v3070
    %vm3072 = vcmp.lt.s32.totalorder %v3071, 0
    %v3073 = vsub.s32 0, %v3071
    %v3074 = vsel %vm3072, %v3073, %v3071
    %v3075 = vclz %v3074
    %v3076 = vsub.s32 %v3075, 2
    %vm3077 = vcmp.gt.s32.totalorder 0, %v3076
    %v3078 = vsel %vm3077, 0, %v3076
    %v3079 = vsub.s32 32, %v3078
    %v3080 = vshll.u32 %v3071, %v3078
    %v3081 = vshrl.u32 %v3063, %v3079
    %v3082 = vor.u32 %v3080, %v3081
    %v3083 = vsub.s32 4294967266, %v3078
    %v3084 = vadd.s32 %v3083, 127
    %v3085 = vshll.u32 %v3084, 23
    %v3086 = vor.u32 4788187, %v3085
    %v3087 = vand.u32 2147483647, %v3086
    %v3089 = vcvt.s32.f32 %v3082
    %v3090 = vmul.f32 %v3089, %v3087
    %v3091 = vxor.u32 %v3090, 2147483648
    %v3092 = vsel %vm3009, %v3091, %v3090
    %v3093 = vsub.s32 4, %v3069
    %v3094 = vsel %vm3009, %v3093, %v3069
    %v3095 = vsel %vm3008, %v2903, %v3092
    %v3096 = vsel %vm3008, 0, %v3094
    %v3097 = vcosq.f32.pop %v3095
    %v3098 = vsinq.f32.pop %v3095
    %vm3099 = vweird.f32 %v2903
    %v3100 = vadd.s32 %v3096, 3
    %v3101 = vand.u32 %v3100, 3
    %vm3102 = vcmp.lt.s32.totalorder %v3101, 2
    %vm3103 = vcmp.eq.s32.totalorder %v3101, 0
    %v3104 = vxor.u32 %v3098, 2147483648
    %v3105 = vsel %vm3103, %v3097, %v3104
    %vm3106 = vcmp.eq.s32.totalorder %v3101, 2
    %v3107 = vxor.u32 %v3097, 2147483648
    %v3108 = vsel %vm3106, %v3107, %v3098
    %v3109 = vsel %vm3102, %v3105, %v3108
    %v3110 = vsel %vm3099, nan, %v3109
    %v3111 = vsub.f32 0.0, %v3110
    %v3112 = vadd.f32 %v3006, 0.0
    %v3113 = vmul.f32 %v3112, 0.70710677
    %v3114 = vadd.f32 %v3111, 0.0
    %v3115 = vmul.f32 %v3114, 0.70710677
    %v3116 = vmul.f32 %v3006, 0.70710677
    %v3117 = vsub.f32 0.0, %v3111
    %v3118 = vmul.f32 %v3117, 0.70710677
    %v3119 = vmul.f32 %v2900, %v2900
    %v3120 = vadd.f32 %v3119, 1.0
    %v3121 = vrsqrt.pop %v3120
    %v3122 = vadd.f32 %v3121, 1.0
    %v3123 = vmul.f32 %v3122, 0.5
    %v3124 = vrsqrt.pop %v3123
    %v3125 = vmul.f32 %v3123, %v3124
    %vm3126 = vcmp.eq.f32.partialorder %v3123, inf
    %v3127 = vsel %vm3126, %v3123, %v3125
    %vm3128 = vcmp.eq.f32.partialorder %v3123, 0.0
    %v3129 = vand.u32 %v3123, 2147483648
    %v3130 = vsel %vm3128, %v3129, %v3127
    %v3131 = vmul.f32 %v2903, %v3121
    %v3132 = vrcp.pop %v3130
    %v3133 = vmul.f32 %v3131, %v3132
    %v3134 = vlaneseq
    %v3135 = vshrl.u32 %v3134, 7
    %v3136 = vsub.s32 0, %v3135
    %v3137 = vrot.slane %v3130, %v3136
    %v3138 = vmul.f32 %v3137, %v3113
    %v3139 = vlaneseq
    %v3140 = vshrl.u32 %v3139, 7
    %v3141 = vsub.s32 0, %v3140
    %v3142 = vrot.slane %v3133, %v3141
    %v3143 = vmul.f32 %v3142, %v3116
    %v3144 = vsub.f32 %v3138, %v3143
    %v3145 = vmul.f32 %v3137, %v3115
    %v3146 = vmul.f32 %v3142, %v3118
    %v3147 = vsub.f32 %v3145, %v3146
    %v3148 = vmul.f32 %v3142, %v3113
    %v3149 = vmul.f32 %v3137, %v3116
    %v3150 = vadd.f32 %v3148, %v3149
    %v3151 = vmul.f32 %v3142, %v3115
    %v3152 = vmul.f32 %v3137, %v3118
    %v3153 = vadd.f32 %v3151, %v3152
    %v3154 = vmul.f32 %v3137, %v3144
    %v3155 = vmul.f32 %v3142, %v3147
    %v3156 = vadd.f32 %v3154, %v3155
    %v3157 = vmul.f32 %v3137, %v3147
    %v3158 = vmul.f32 %v3142, %v3144
    %v3159 = vsub.f32 %v3157, %v3158
    %v3160 = vmul.f32 %v3137, %v3150
    %v3161 = vmul.f32 %v3142, %v3153
    %v3162 = vsub.f32 %v3160, %v3161
    %v3163 = vmul.f32 %v3137, %v3153
    %v3164 = vmul.f32 %v3142, %v3150
    %v3165 = vadd.f32 %v3163, %v3164
    %v3166 = vmul.f32 %v3156, %v3156
    %v3167 = vmul.f32 %v3159, %v3159
    %v3168 = vadd.f32 %v3166, %v3167
    %v3169 = vmul.f32 %v3162, %v3162
    %v3170 = vsub.f32 %v3168, %v3169
    %v3171 = vmul.f32 %v3165, %v3165
    %v3172 = vsub.f32 %v3170, %v3171
    %v3173 = vmul.f32 %v3156, %v3162
    %v3174 = vmul.f32 %v3159, %v3165
    %v3175 = vadd.f32 %v3173, %v3174
    %v3176 = vmul.f32 %v3156, %v3165
    %v3177 = vmul.f32 %v3159, %v3162
    %v3178 = vsub.f32 %v3176, %v3177
    %3180 = vrot.lane.b32.xlu0 %v3175, 4
    %v3181 = vpop.permute.xlu0 %3180
    %3184 = vrot.lane.b32.xlu0 %v3178, 8
    %v3185 = vpop.permute.xlu0 %3184
    %v3187 = vsel %vm397, %v3172, %v3181
    %v3188 = vsel %vm399, %v3187, %v3185
    %v3190 = vsel %vm407, %v3188, 0
    %3192 = vmatprep.subr.mxu0 0.0
    %3193 = vmatpush1.msra.mxu0 %v35
    %3194 = vmatprep.subr.mxu0 0.0
    %3195 = vmatpush1.msra.mxu0 %v413
    %3196 = vmatprep.subr.mxu0 0.0
    %3197 = vmatpush1.msra.mxu0 0.0
    %3198 = vmatprep.subr.mxu0 0.0
    %3199 = vmatpush1.msra.mxu0 0.0
    %3200 = vmatprep.subr.mxu0 0.0
    %3201 = vmatpush1.msra.mxu0 0.0
    %3202 = vmatprep.subr.mxu0 0.0
    %3203 = vmatpush1.msra.mxu0 0.0
    %3204 = vmatprep.subr.mxu0 0.0
    %3205 = vmatpush1.msra.mxu0 0.0
    %3206 = vmatprep.subr.mxu0 0.0
    %3207 = vmatpush1.msra.mxu0 0.0
    %3208 = vmatprep.subr.mxu0 0.0
    %3209 = vmatpush1.msra.mxu0 0.0
    %3210 = vmatprep.subr.mxu0 0.0
    %3211 = vmatpush1.msra.mxu0 0.0
    %3212 = vmatprep.subr.mxu0 0.0
    %3213 = vmatpush1.msra.mxu0 0.0
    %3214 = vmatprep.subr.mxu0 0.0
    %3215 = vmatpush1.msra.mxu0 0.0
    %3216 = vmatprep.subr.mxu0 0.0
    %3217 = vmatpush1.msra.mxu0 0.0
    %3218 = vmatprep.subr.mxu0 0.0
    %3219 = vmatpush1.msra.mxu0 0.0
    %3220 = vmatprep.subr.mxu0 0.0
    %3221 = vmatpush1.msra.mxu0 0.0
    %3222 = vmatprep.subr.mxu0 0.0
    %3223 = vmatpush1.msra.mxu0 0.0
    %3224 = vmatprep.subr.mxu0 0.0
    %3225 = vmatpush1.msra.mxu0 0.0
    %3226 = vmatprep.subr.mxu0 0.0
    %3227 = vmatpush1.msra.mxu0 0.0
    %3228 = vmatprep.subr.mxu0 0.0
    %3229 = vmatpush1.msra.mxu0 0.0
    %3230 = vmatprep.subr.mxu0 0.0
    %3231 = vmatpush1.msra.mxu0 0.0
    %3232 = vmatprep.subr.mxu0 0.0
    %3233 = vmatpush1.msra.mxu0 0.0
    %3234 = vmatprep.subr.mxu0 0.0
    %3235 = vmatpush1.msra.mxu0 0.0
    %3236 = vmatprep.subr.mxu0 0.0
    %3237 = vmatpush1.msra.mxu0 0.0
    %3238 = vmatprep.subr.mxu0 0.0
    %3239 = vmatpush1.msra.mxu0 0.0
    %3240 = vmatprep.subr.mxu0 0.0
    %3241 = vmatpush1.msra.mxu0 0.0
    %3242 = vmatprep.subr.mxu0 0.0
    %3243 = vmatpush1.msra.mxu0 0.0
    %3244 = vmatprep.subr.mxu0 0.0
    %3245 = vmatpush1.msra.mxu0 0.0
    %3246 = vmatprep.subr.mxu0 0.0
    %3247 = vmatpush1.msra.mxu0 0.0
    %3248 = vmatprep.subr.mxu0 0.0
    %3249 = vmatpush1.msra.mxu0 0.0
    %3250 = vmatprep.subr.mxu0 0.0
    %3251 = vmatpush1.msra.mxu0 0.0
    %3252 = vmatprep.subr.mxu0 0.0
    %3253 = vmatpush1.msra.mxu0 0.0
    %3254 = vmatprep.subr.mxu0 0.0
    %3255 = vmatpush1.msra.mxu0 0.0
    %3256 = vmatprep.mubr.f32.mxu0 0.0
    %3257 = vmatmul.mubr.f32.gmra.mrb[0].mxu0 %v3190
    %v3258 = vpop.f32.mrb[0].mxu0
    %v3259 = vadd.f32 %v405, %v3258
    %v3260 = vpop.f32.mrb[0].mxu0
    %3261 = vdwg.mxu0
    %v3262 = vxor.u32 %v3259, 2147483648
    %v3263 = vmul.f32 %v3262, 1.442695
    %v3264 = vpow.pop %v3263
    %v3265 = vadd.f32 %v3264, 1.0
    %v3266 = vrcp.pop %v3265
    %v3267 = vmul.f32 1.0, %v3266
    %v3268 = vtanh.pop %v3259
    %v3269 = vmul.f32 %v3267, %v2816
    %3271 = vrot.lane.b32.xlu0 %v3268, 96
    %v3272 = vpop.permute.xlu0 %3271
    %v3274 = vmul.f32 %v3267, %v3272
    %3276 = vrot.lane.b32.xlu0 %v3274, 96
    %v3277 = vpop.permute.xlu0 %3276
    %v3279 = vadd.f32 %v3269, %v3277
    %v3280 = vtanh.pop %v3279
    %3282 = vrot.lane.b32.xlu0 %v3280, 96
    %v3283 = vpop.permute.xlu0 %3282
    %v3285 = vmul.f32 %v3267, %v3283
    %3287 = vrot.lane.b32.xlu0 %v3285, 32
    %v3288 = vpop.permute.xlu0 %3287
    %s3290 = scalar_lea.vmem [#allocation4], 48
    %3291 = vst.msk [vmem:[%s3290] sm:$0xff] %vm39, %v3288
    %s3292 = scalar_lea.vmem %s0, 56
    %v3293 = vld [vmem:[%s3292] sm:$0xff]
    %v3294 = vsel %vm39, %v3288, 0
    %3296 = vmatprep.subr.mxu0 0.0
    %3297 = vmatpush1.msra.mxu0 %v31
    %3298 = vmatprep.subr.mxu0 0.0
    %3299 = vmatpush1.msra.mxu0 %v32
    %3300 = vmatprep.subr.mxu0 0.0
    %3301 = vmatpush1.msra.mxu0 %v33
    %3302 = vmatprep.subr.mxu0 0.0
    %3303 = vmatpush1.msra.mxu0 %v34
    %3304 = vmatprep.subr.mxu0 0.0
    %3305 = vmatpush1.msra.mxu0 0.0
    %3306 = vmatprep.subr.mxu0 0.0
    %3307 = vmatpush1.msra.mxu0 0.0
    %3308 = vmatprep.subr.mxu0 0.0
    %3309 = vmatpush1.msra.mxu0 0.0
    %3310 = vmatprep.subr.mxu0 0.0
    %3311 = vmatpush1.msra.mxu0 0.0
    %3312 = vmatprep.subr.mxu0 0.0
    %3313 = vmatpush1.msra.mxu0 0.0
    %3314 = vmatprep.subr.mxu0 0.0
    %3315 = vmatpush1.msra.mxu0 0.0
    %3316 = vmatprep.subr.mxu0 0.0
    %3317 = vmatpush1.msra.mxu0 0.0
    %3318 = vmatprep.subr.mxu0 0.0
    %3319 = vmatpush1.msra.mxu0 0.0
    %3320 = vmatprep.subr.mxu0 0.0
    %3321 = vmatpush1.msra.mxu0 0.0
    %3322 = vmatprep.subr.mxu0 0.0
    %3323 = vmatpush1.msra.mxu0 0.0
    %3324 = vmatprep.subr.mxu0 0.0
    %3325 = vmatpush1.msra.mxu0 0.0
    %3326 = vmatprep.subr.mxu0 0.0
    %3327 = vmatpush1.msra.mxu0 0.0
    %3328 = vmatprep.subr.mxu0 0.0
    %3329 = vmatpush1.msra.mxu0 0.0
    %3330 = vmatprep.subr.mxu0 0.0
    %3331 = vmatpush1.msra.mxu0 0.0
    %3332 = vmatprep.subr.mxu0 0.0
    %3333 = vmatpush1.msra.mxu0 0.0
    %3334 = vmatprep.subr.mxu0 0.0
    %3335 = vmatpush1.msra.mxu0 0.0
    %3336 = vmatprep.subr.mxu0 0.0
    %3337 = vmatpush1.msra.mxu0 0.0
    %3338 = vmatprep.subr.mxu0 0.0
    %3339 = vmatpush1.msra.mxu0 0.0
    %3340 = vmatprep.subr.mxu0 0.0
    %3341 = vmatpush1.msra.mxu0 0.0
    %3342 = vmatprep.subr.mxu0 0.0
    %3343 = vmatpush1.msra.mxu0 0.0
    %3344 = vmatprep.subr.mxu0 0.0
    %3345 = vmatpush1.msra.mxu0 0.0
    %3346 = vmatprep.subr.mxu0 0.0
    %3347 = vmatpush1.msra.mxu0 0.0
    %3348 = vmatprep.subr.mxu0 0.0
    %3349 = vmatpush1.msra.mxu0 0.0
    %3350 = vmatprep.subr.mxu0 0.0
    %3351 = vmatpush1.msra.mxu0 0.0
    %3352 = vmatprep.subr.mxu0 0.0
    %3353 = vmatpush1.msra.mxu0 0.0
    %3354 = vmatprep.subr.mxu0 0.0
    %3355 = vmatpush1.msra.mxu0 0.0
    %3356 = vmatprep.subr.mxu0 0.0
    %3357 = vmatpush1.msra.mxu0 0.0
    %3358 = vmatprep.subr.mxu0 0.0
    %3359 = vmatpush1.msra.mxu0 0.0
    %3360 = vmatprep.mubr.f32.mxu0 0.0
    %3361 = vmatmul.mubr.f32.gmra.mrb[0].mxu0 %v3294
    %v3362 = vpop.f32.mrb[0].mxu0
    %v3363 = vadd.f32 %v3293, %v3362
    %v3364 = vpop.f32.mrb[0].mxu0
    %3365 = vdwg.mxu0
    %v3366 = vmul.f32 %v3363, 0.5
    %v3367 = vand.u32 2147483647, %v3366
    %vm3368 = vcmp.le.f32.partialorder %v3367, 0.7853982
    %vm3369 = vcmp.lt.s32.totalorder %v3366, 0
    %v3370 = vand.u32 %v3366, 2139095040
    %v3371 = vshrl.u32 %v3370, 23
    %v3372 = vsub.s32 %v3371, 127
    %v3373 = vand.u32 2147483647, %v3366
    %v3374 = vand.u32 %v3373, 8388607
    %v3375 = vor.u32 %v3374, 8388608
    %v3376 = vsub.s32 0, %v3375
    %v3377 = vadd.s32 %v3372, 1
    %vm3378 = vcmp.gt.s32.totalorder %v3377, 0
    %v3379 = vsel %vm3378, %v3377, 0
    %v3380 = vshrl.u32 %v3379, 5
    %v3381 = vand.u32 %v3379, 31
    %v3382 = vsub.s32 32, %v3381
    %v3383 = vshrl.u32 683565275, %v3382
    %v3384 = vshll.u32 683565275, %v3381
    %v3385 = vshrl.u32 2475754826, %v3382
    %v3386 = vor.u32 %v3384, %v3385
    %v3387 = vshll.u32 2475754826, %v3381
    %v3388 = vshrl.u32 2131351028, %v3382
    %v3389 = vor.u32 %v3387, %v3388
    %v3390 = vshll.u32 2131351028, %v3381
    %v3391 = vshrl.u32 2102212464, %v3382
    %v3392 = vor.u32 %v3390, %v3391
    %v3393 = vshll.u32 2102212464, %v3381
    %v3394 = vshrl.u32 920167782, %v3382
    %v3395 = vor.u32 %v3393, %v3394
    %v3396 = vshll.u32 920167782, %v3381
    %v3397 = vshrl.u32 1326507024, %v3382
    %v3398 = vor.u32 %v3396, %v3397
    %vm3399 = vcmp.lt.s32.totalorder %v3380, 1
    %vm3400 = vcmp.lt.s32.totalorder %v3380, 2
    %vm3401 = vcmp.lt.s32.totalorder %v3380, 3
    %vm3402 = vcmp.lt.s32.totalorder %v3380, 4
    %v3403 = vsel %vm3399, %v3383, %v3386
    %v3404 = vsel %vm3402, %v3392, 2102212464
    %v3405 = vsel %vm3401, %v3389, %v3404
    %v3406 = vsel %vm3400, %v3403, %v3405
    %v3407 = vsel %vm3399, %v3386, %v3389
    %v3408 = vsel %vm3402, %v3395, 920167782
    %v3409 = vsel %vm3401, %v3392, %v3408
    %v3410 = vsel %vm3400, %v3407, %v3409
    %v3411 = vsel %vm3399, %v3389, %v3392
    %v3412 = vsel %vm3402, %v3398, 1326507024
    %v3413 = vsel %vm3401, %v3395, %v3412
    %v3414 = vsel %vm3400, %v3411, %v3413
    %v3415 = vshll.u32 %v3375, 8
    %v3416 = vmul.u32.u64.compose %v3415, %v3414
    %v3417 = vextract.low.u32 %v3416
    %v3418 = vextract.high.u32 %v3416
    %v3419 = vmul.u32.u64.compose %v3415, %v3410
    %v3420 = vextract.low.u32 %v3419
    %v3421 = vextract.high.u32 %v3419
    %v3422 = vmul.u32 %v3415, %v3406
    %v3423 = vadd.s32 %v3418, %v3420
    %vm3424 = vc.u32 %v3418, %v3420
    %v3425 = vadd.s32 %v3421, 1
    %v3426 = vsel %vm3424, %v3425, %v3421
    %v3427 = vadd.s32 %v3422, %v3426
    %v3428 = vadd.s32 %v3427, 536870912
    %v3429 = vshrl.u32 %v3428, 30
    %v3430 = vshll.u32 %v3429, 30
    %v3431 = vsub.s32 %v3427, %v3430
    %vm3432 = vcmp.lt.s32.totalorder %v3431, 0
    %v3433 = vsub.s32 0, %v3431
    %v3434 = vsel %vm3432, %v3433, %v3431
    %v3435 = vclz %v3434
    %v3436 = vsub.s32 %v3435, 2
    %vm3437 = vcmp.gt.s32.totalorder 0, %v3436
    %v3438 = vsel %vm3437, 0, %v3436
    %v3439 = vsub.s32 32, %v3438
    %v3440 = vshll.u32 %v3431, %v3438
    %v3441 = vshrl.u32 %v3423, %v3439
    %v3442 = vor.u32 %v3440, %v3441
    %v3443 = vsub.s32 4294967266, %v3438
    %v3444 = vadd.s32 %v3443, 127
    %v3445 = vshll.u32 %v3444, 23
    %v3446 = vor.u32 4788187, %v3445
    %v3447 = vand.u32 2147483647, %v3446
    %v3449 = vcvt.s32.f32 %v3442
    %v3450 = vmul.f32 %v3449, %v3447
    %v3451 = vxor.u32 %v3450, 2147483648
    %v3452 = vsel %vm3369, %v3451, %v3450
    %v3453 = vsub.s32 4, %v3429
    %v3454 = vsel %vm3369, %v3453, %v3429
    %v3455 = vsel %vm3368, %v3366, %v3452
    %v3456 = vsel %vm3368, 0, %v3454
    %v3457 = vcosq.f32.pop %v3455
    %v3458 = vsinq.f32.pop %v3455
    %vm3459 = vweird.f32 %v3366
    %v3460 = vand.u32 %v3456, 3
    %vm3461 = vcmp.lt.s32.totalorder %v3460, 2
    %vm3462 = vcmp.eq.s32.totalorder %v3460, 0
    %v3463 = vxor.u32 %v3458, 2147483648
    %v3464 = vsel %vm3462, %v3457, %v3463
    %vm3465 = vcmp.eq.s32.totalorder %v3460, 2
    %v3466 = vxor.u32 %v3457, 2147483648
    %v3467 = vsel %vm3465, %v3466, %v3458
    %v3468 = vsel %vm3461, %v3464, %v3467
    %v3469 = vsel %vm3459, nan, %v3468
    %v3470 = vand.u32 2147483647, %v3366
    %vm3471 = vcmp.le.f32.partialorder %v3470, 0.7853982
    %vm3472 = vcmp.lt.s32.totalorder %v3366, 0
    %v3473 = vand.u32 %v3366, 2139095040
    %v3474 = vshrl.u32 %v3473, 23
    %v3475 = vsub.s32 %v3474, 127
    %v3476 = vand.u32 2147483647, %v3366
    %v3477 = vand.u32 %v3476, 8388607
    %v3478 = vor.u32 %v3477, 8388608
    %v3479 = vsub.s32 0, %v3478
    %v3480 = vadd.s32 %v3475, 1
    %vm3481 = vcmp.gt.s32.totalorder %v3480, 0
    %v3482 = vsel %vm3481, %v3480, 0
    %v3483 = vshrl.u32 %v3482, 5
    %v3484 = vand.u32 %v3482, 31
    %v3485 = vsub.s32 32, %v3484
    %v3486 = vshrl.u32 683565275, %v3485
    %v3487 = vshll.u32 683565275, %v3484
    %v3488 = vshrl.u32 2475754826, %v3485
    %v3489 = vor.u32 %v3487, %v3488
    %v3490 = vshll.u32 2475754826, %v3484
    %v3491 = vshrl.u32 2131351028, %v3485
    %v3492 = vor.u32 %v3490, %v3491
    %v3493 = vshll.u32 2131351028, %v3484
    %v3494 = vshrl.u32 2102212464, %v3485
    %v3495 = vor.u32 %v3493, %v3494
    %v3496 = vshll.u32 2102212464, %v3484
    %v3497 = vshrl.u32 920167782, %v3485
    %v3498 = vor.u32 %v3496, %v3497
    %v3499 = vshll.u32 920167782, %v3484
    %v3500 = vshrl.u32 1326507024, %v3485
    %v3501 = vor.u32 %v3499, %v3500
    %vm3502 = vcmp.lt.s32.totalorder %v3483, 1
    %vm3503 = vcmp.lt.s32.totalorder %v3483, 2
    %vm3504 = vcmp.lt.s32.totalorder %v3483, 3
    %vm3505 = vcmp.lt.s32.totalorder %v3483, 4
    %v3506 = vsel %vm3502, %v3486, %v3489
    %v3507 = vsel %vm3505, %v3495, 2102212464
    %v3508 = vsel %vm3504, %v3492, %v3507
    %v3509 = vsel %vm3503, %v3506, %v3508
    %v3510 = vsel %vm3502, %v3489, %v3492
    %v3511 = vsel %vm3505, %v3498, 920167782
    %v3512 = vsel %vm3504, %v3495, %v3511
    %v3513 = vsel %vm3503, %v3510, %v3512
    %v3514 = vsel %vm3502, %v3492, %v3495
    %v3515 = vsel %vm3505, %v3501, 1326507024
    %v3516 = vsel %vm3504, %v3498, %v3515
    %v3517 = vsel %vm3503, %v3514, %v3516
    %v3518 = vshll.u32 %v3478, 8
    %v3519 = vmul.u32.u64.compose %v3518, %v3517
    %v3520 = vextract.low.u32 %v3519
    %v3521 = vextract.high.u32 %v3519
    %v3522 = vmul.u32.u64.compose %v3518, %v3513
    %v3523 = vextract.low.u32 %v3522
    %v3524 = vextract.high.u32 %v3522
    %v3525 = vmul.u32 %v3518, %v3509
    %v3526 = vadd.s32 %v3521, %v3523
    %vm3527 = vc.u32 %v3521, %v3523
    %v3528 = vadd.s32 %v3524, 1
    %v3529 = vsel %vm3527, %v3528, %v3524
    %v3530 = vadd.s32 %v3525, %v3529
    %v3531 = vadd.s32 %v3530, 536870912
    %v3532 = vshrl.u32 %v3531, 30
    %v3533 = vshll.u32 %v3532, 30
    %v3534 = vsub.s32 %v3530, %v3533
    %vm3535 = vcmp.lt.s32.totalorder %v3534, 0
    %v3536 = vsub.s32 0, %v3534
    %v3537 = vsel %vm3535, %v3536, %v3534
    %v3538 = vclz %v3537
    %v3539 = vsub.s32 %v3538, 2
    %vm3540 = vcmp.gt.s32.totalorder 0, %v3539
    %v3541 = vsel %vm3540, 0, %v3539
    %v3542 = vsub.s32 32, %v3541
    %v3543 = vshll.u32 %v3534, %v3541
    %v3544 = vshrl.u32 %v3526, %v3542
    %v3545 = vor.u32 %v3543, %v3544
    %v3546 = vsub.s32 4294967266, %v3541
    %v3547 = vadd.s32 %v3546, 127
    %v3548 = vshll.u32 %v3547, 23
    %v3549 = vor.u32 4788187, %v3548
    %v3550 = vand.u32 2147483647, %v3549
    %v3552 = vcvt.s32.f32 %v3545
    %v3553 = vmul.f32 %v3552, %v3550
    %v3554 = vxor.u32 %v3553, 2147483648
    %v3555 = vsel %vm3472, %v3554, %v3553
    %v3556 = vsub.s32 4, %v3532
    %v3557 = vsel %vm3472, %v3556, %v3532
    %v3558 = vsel %vm3471, %v3366, %v3555
    %v3559 = vsel %vm3471, 0, %v3557
    %v3560 = vcosq.f32.pop %v3558
    %v3561 = vsinq.f32.pop %v3558
    %vm3562 = vweird.f32 %v3366
    %v3563 = vadd.s32 %v3559, 3
    %v3564 = vand.u32 %v3563, 3
    %vm3565 = vcmp.lt.s32.totalorder %v3564, 2
    %vm3566 = vcmp.eq.s32.totalorder %v3564, 0
    %v3567 = vxor.u32 %v3561, 2147483648
    %v3568 = vsel %vm3566, %v3560, %v3567
    %vm3569 = vcmp.eq.s32.totalorder %v3564, 2
    %v3570 = vxor.u32 %v3560, 2147483648
    %v3571 = vsel %vm3569, %v3570, %v3561
    %v3572 = vsel %vm3565, %v3568, %v3571
    %v3573 = vsel %vm3562, nan, %v3572
    %v3574 = vsub.f32 0.0, %v3573
    %v3575 = vadd.f32 %v3469, 0.0
    %v3576 = vmul.f32 %v3575, 0.70710677
    %v3577 = vadd.f32 %v3574, 0.0
    %v3578 = vmul.f32 %v3577, 0.70710677
    %v3579 = vmul.f32 %v3469, 0.70710677
    %v3580 = vsub.f32 0.0, %v3574
    %v3581 = vmul.f32 %v3580, 0.70710677
    %v3582 = vmul.f32 %v3363, %v3363
    %v3583 = vadd.f32 %v3582, 1.0
    %v3584 = vrsqrt.pop %v3583
    %v3585 = vadd.f32 %v3584, 1.0
    %v3586 = vmul.f32 %v3585, 0.5
    %v3587 = vrsqrt.pop %v3586
    %v3588 = vmul.f32 %v3586, %v3587
    %vm3589 = vcmp.eq.f32.partialorder %v3586, inf
    %v3590 = vsel %vm3589, %v3586, %v3588
    %vm3591 = vcmp.eq.f32.partialorder %v3586, 0.0
    %v3592 = vand.u32 %v3586, 2147483648
    %v3593 = vsel %vm3591, %v3592, %v3590
    %v3594 = vmul.f32 %v3366, %v3584
    %v3595 = vrcp.pop %v3593
    %v3596 = vmul.f32 %v3594, %v3595
    %v3597 = vlaneseq
    %v3598 = vshrl.u32 %v3597, 7
    %v3599 = vsub.s32 0, %v3598
    %v3600 = vrot.slane %v3593, %v3599
    %v3601 = vmul.f32 %v3600, %v3576
    %v3602 = vlaneseq
    %v3603 = vshrl.u32 %v3602, 7
    %v3604 = vsub.s32 0, %v3603
    %v3605 = vrot.slane %v3596, %v3604
    %v3606 = vmul.f32 %v3605, %v3579
    %v3607 = vsub.f32 %v3601, %v3606
    %v3608 = vmul.f32 %v3600, %v3578
    %v3609 = vmul.f32 %v3605, %v3581
    %v3610 = vsub.f32 %v3608, %v3609
    %v3611 = vmul.f32 %v3605, %v3576
    %v3612 = vmul.f32 %v3600, %v3579
    %v3613 = vadd.f32 %v3611, %v3612
    %v3614 = vmul.f32 %v3605, %v3578
    %v3615 = vmul.f32 %v3600, %v3581
    %v3616 = vadd.f32 %v3614, %v3615
    %v3617 = vmul.f32 %v3600, %v3607
    %v3618 = vmul.f32 %v3605, %v3610
    %v3619 = vadd.f32 %v3617, %v3618
    %v3620 = vmul.f32 %v3600, %v3610
    %v3621 = vmul.f32 %v3605, %v3607
    %v3622 = vsub.f32 %v3620, %v3621
    %v3623 = vmul.f32 %v3600, %v3613
    %v3624 = vmul.f32 %v3605, %v3616
    %v3625 = vsub.f32 %v3623, %v3624
    %v3626 = vmul.f32 %v3600, %v3616
    %v3627 = vmul.f32 %v3605, %v3613
    %v3628 = vadd.f32 %v3626, %v3627
    %v3629 = vmul.f32 %v3619, %v3619
    %v3630 = vmul.f32 %v3622, %v3622
    %v3631 = vadd.f32 %v3629, %v3630
    %v3632 = vmul.f32 %v3625, %v3625
    %v3633 = vsub.f32 %v3631, %v3632
    %v3634 = vmul.f32 %v3628, %v3628
    %v3635 = vsub.f32 %v3633, %v3634
    %v3636 = vmul.f32 %v3619, %v3625
    %v3637 = vmul.f32 %v3622, %v3628
    %v3638 = vadd.f32 %v3636, %v3637
    %v3639 = vmul.f32 %v3619, %v3628
    %v3640 = vmul.f32 %v3622, %v3625
    %v3641 = vsub.f32 %v3639, %v3640
    %3643 = vrot.lane.b32.xlu0 %v3638, 4
    %v3644 = vpop.permute.xlu0 %3643
    %3647 = vrot.lane.b32.xlu0 %v3641, 8
    %v3648 = vpop.permute.xlu0 %3647
    %v3650 = vsel %vm397, %v3635, %v3644
    %v3651 = vsel %vm399, %v3650, %v3648
    %v3653 = vsel %vm407, %v3651, 0
    %3655 = vmatprep.subr.mxu0 0.0
    %3656 = vmatpush1.msra.mxu0 %v35
    %3657 = vmatprep.subr.mxu0 0.0
    %3658 = vmatpush1.msra.mxu0 %v413
    %3659 = vmatprep.subr.mxu0 0.0
    %3660 = vmatpush1.msra.mxu0 0.0
    %3661 = vmatprep.subr.mxu0 0.0
    %3662 = vmatpush1.msra.mxu0 0.0
    %3663 = vmatprep.subr.mxu0 0.0
    %3664 = vmatpush1.msra.mxu0 0.0
    %3665 = vmatprep.subr.mxu0 0.0
    %3666 = vmatpush1.msra.mxu0 0.0
    %3667 = vmatprep.subr.mxu0 0.0
    %3668 = vmatpush1.msra.mxu0 0.0
    %3669 = vmatprep.subr.mxu0 0.0
    %3670 = vmatpush1.msra.mxu0 0.0
    %3671 = vmatprep.subr.mxu0 0.0
    %3672 = vmatpush1.msra.mxu0 0.0
    %3673 = vmatprep.subr.mxu0 0.0
    %3674 = vmatpush1.msra.mxu0 0.0
    %3675 = vmatprep.subr.mxu0 0.0
    %3676 = vmatpush1.msra.mxu0 0.0
    %3677 = vmatprep.subr.mxu0 0.0
    %3678 = vmatpush1.msra.mxu0 0.0
    %3679 = vmatprep.subr.mxu0 0.0
    %3680 = vmatpush1.msra.mxu0 0.0
    %3681 = vmatprep.subr.mxu0 0.0
    %3682 = vmatpush1.msra.mxu0 0.0
    %3683 = vmatprep.subr.mxu0 0.0
    %3684 = vmatpush1.msra.mxu0 0.0
    %3685 = vmatprep.subr.mxu0 0.0
    %3686 = vmatpush1.msra.mxu0 0.0
    %3687 = vmatprep.subr.mxu0 0.0
    %3688 = vmatpush1.msra.mxu0 0.0
    %3689 = vmatprep.subr.mxu0 0.0
    %3690 = vmatpush1.msra.mxu0 0.0
    %3691 = vmatprep.subr.mxu0 0.0
    %3692 = vmatpush1.msra.mxu0 0.0
    %3693 = vmatprep.subr.mxu0 0.0
    %3694 = vmatpush1.msra.mxu0 0.0
    %3695 = vmatprep.subr.mxu0 0.0
    %3696 = vmatpush1.msra.mxu0 0.0
    %3697 = vmatprep.subr.mxu0 0.0
    %3698 = vmatpush1.msra.mxu0 0.0
    %3699 = vmatprep.subr.mxu0 0.0
    %3700 = vmatpush1.msra.mxu0 0.0
    %3701 = vmatprep.subr.mxu0 0.0
    %3702 = vmatpush1.msra.mxu0 0.0
    %3703 = vmatprep.subr.mxu0 0.0
    %3704 = vmatpush1.msra.mxu0 0.0
    %3705 = vmatprep.subr.mxu0 0.0
    %3706 = vmatpush1.msra.mxu0 0.0
    %3707 = vmatprep.subr.mxu0 0.0
    %3708 = vmatpush1.msra.mxu0 0.0
    %3709 = vmatprep.subr.mxu0 0.0
    %3710 = vmatpush1.msra.mxu0 0.0
    %3711 = vmatprep.subr.mxu0 0.0
    %3712 = vmatpush1.msra.mxu0 0.0
    %3713 = vmatprep.subr.mxu0 0.0
    %3714 = vmatpush1.msra.mxu0 0.0
    %3715 = vmatprep.subr.mxu0 0.0
    %3716 = vmatpush1.msra.mxu0 0.0
    %3717 = vmatprep.subr.mxu0 0.0
    %3718 = vmatpush1.msra.mxu0 0.0
    %3719 = vmatprep.mubr.f32.mxu0 0.0
    %3720 = vmatmul.mubr.f32.gmra.mrb[0].mxu0 %v3653
    %v3721 = vpop.f32.mrb[0].mxu0
    %v3722 = vadd.f32 %v405, %v3721
    %v3723 = vpop.f32.mrb[0].mxu0
    %3724 = vdwg.mxu0
    %v3725 = vxor.u32 %v3722, 2147483648
    %v3726 = vmul.f32 %v3725, 1.442695
    %v3727 = vpow.pop %v3726
    %v3728 = vadd.f32 %v3727, 1.0
    %v3729 = vrcp.pop %v3728
    %v3730 = vmul.f32 1.0, %v3729
    %v3731 = vtanh.pop %v3722
    %v3732 = vmul.f32 %v3730, %v3279
    %3734 = vrot.lane.b32.xlu0 %v3731, 96
    %v3735 = vpop.permute.xlu0 %3734
    %v3737 = vmul.f32 %v3730, %v3735
    %3739 = vrot.lane.b32.xlu0 %v3737, 96
    %v3740 = vpop.permute.xlu0 %3739
    %v3742 = vadd.f32 %v3732, %v3740
    %v3743 = vtanh.pop %v3742
    %3745 = vrot.lane.b32.xlu0 %v3743, 96
    %v3746 = vpop.permute.xlu0 %3745
    %v3748 = vmul.f32 %v3730, %v3746
    %3750 = vrot.lane.b32.xlu0 %v3748, 32
    %v3751 = vpop.permute.xlu0 %3750
    %s3753 = scalar_lea.vmem [#allocation4], 56
    %3754 = vst.msk [vmem:[%s3753] sm:$0xff] %vm39, %v3751
    %3755 = vst.msk [vmem:[#allocation2] sm:$0xff] %vm39, %v3751
    %3756 = vst.msk [vmem:[#allocation3] sm:$0xff] %vm39, %v3742
    // Predicated region
    $region22: #{tpu_custom_call.1} parent=1 // pred_check
      %p3757 = pneg %p22
    $region23: #{tpu_custom_call.1} parent=1 // pred_check_branch
      %3759 = sbr.rel (%p3757) target = $region25
    $region24: #{tpu_custom_call.1} parent=1 // pred_region
      %3760 = vst.msk [vmem:[#allocation6] sm:$0xff] %vm39, %v3751
      %3761 = vst.msk [vmem:[#allocation8] sm:$0xff] %vm39, %v3742
    $region25: #{tpu_custom_call.1} parent=1 // pred_fallthru
      _
    // Predicated region
    $region26: #{tpu_custom_call.1} parent=1 // pred_check
      _
    $region27: #{tpu_custom_call.1} parent=1 // pred_check_branch
      %3763 = sbr.rel (0) target = $region29
    $region28: #{tpu_custom_call.1} parent=1 // pred_region
      %s3765 = ssub.s32 1024, 1024
      %3766 = vsyncadd [#allocation5], %s3765
      %s3767 = sshll.u32 [#allocation4], 4
      %s3768 = int_to_ptr.vmem [resolvable:$true] %s3767
      %3773 = dma.vmem_to_hbm [thread:$0]  %s3768, 1024, %s4, [#allocation5], 128, 128, 8
    $region29: #{tpu_custom_call.1} parent=1 // pred_fallthru
      _
    // Predicated region
    $region30: #{tpu_custom_call.1} parent=1 // pred_check
      _
    $region31: #{tpu_custom_call.1} parent=1 // pred_check_branch
      %3775 = sbr.rel (0) target = $region33
    $region32: #{tpu_custom_call.1} parent=1 // pred_region
      %s3777 = ssub.s32 128, 128
      %3778 = vsyncadd [#allocation7], %s3777
      %s3780 = sshll.u32 [#allocation6], 4
      %s3781 = int_to_ptr.vmem [resolvable:$true] %s3780
      %3783 = dma.vmem_to_hbm [thread:$0]  %s3781, 128, %s5, [#allocation7]
    $region33: #{tpu_custom_call.1} parent=1 // pred_fallthru
      _
    // Predicated region
    $region34: #{tpu_custom_call.1} parent=1 // pred_check
      _
    $region35: #{tpu_custom_call.1} parent=1 // pred_check_branch
      %3785 = sbr.rel (0) target = $region37
    $region36: #{tpu_custom_call.1} parent=1 // pred_region
      %s3787 = ssub.s32 128, 128
      %3788 = vsyncadd [#allocation7], %s3787
      %s3790 = sshll.u32 [#allocation8], 4
      %s3791 = int_to_ptr.vmem [resolvable:$true] %s3790
      %3793 = dma.vmem_to_hbm [thread:$0]  %s3791, 128, %s6, [#allocation7]
    $region37: #{tpu_custom_call.1} parent=1 // pred_fallthru
      _
    // Predicated region
    $region38: #{tpu_custom_call.1} parent=1 // pred_check
      _
    $region39: #{tpu_custom_call.1} parent=1 // pred_check_branch
      %3795 = sbr.rel (0) target = $region41
    $region40: #{tpu_custom_call.1} parent=1 // pred_region
      %3796 = dma.done [#allocation5], 1024
    $region41: #{tpu_custom_call.1} parent=1 // pred_fallthru
      _
    // Predicated region
    $region42: #{tpu_custom_call.1} parent=1 // pred_check
      _
    $region43: #{tpu_custom_call.1} parent=1 // pred_check_branch
      %3798 = sbr.rel (0) target = $region45
    $region44: #{tpu_custom_call.1} parent=1 // pred_region
      %3799 = dma.done [#allocation7], 128
    $region45: #{tpu_custom_call.1} parent=1 // pred_fallthru
      _
    // Predicated region
    $region46: #{tpu_custom_call.1} parent=1 // pred_check
      _
    $region47: #{tpu_custom_call.1} parent=1 // pred_check_branch
      %3801 = sbr.rel (0) target = $region49
    $region48: #{tpu_custom_call.1} parent=1 // pred_region
      %3802 = dma.done [#allocation7], 128
    $region49: #{tpu_custom_call.1} parent=1 // pred_fallthru
      _
    %3803 = vsyncpa [#allocation5], 1
    %3804 = vsyncpa [#allocation7], 1

</llo_original>
